<compile_context>
chip_gen: v7x
topology: tpu7x:2x2x1
jax: 0.10.0
libtpu: 0.0.40
codegen_flags: <defaults>
</compile_context>

<pallas_src>
import functools

import jax
import jax.numpy as jnp
from jax.experimental import pallas as pl
from jax.experimental.pallas import tpu as pltpu

EPS = 1e-5
LANES = 128  # lane width / channel padding target


def _resnet_c_block_kernel(x_ref,
                           w1_ref, g1_ref, b1_ref,
                           w2_ref, g2_ref, b2_ref,
                           w3_ref, g3_ref, b3_ref,
                           out_ref, p2_scr, p3_scr, *, c1, c2):
    N, Hp, W, C = x_ref.shape          # kw-packed LHS layout: (N, H+2, W, 128)
    H = Hp - 2
    M = N * H * W
    inv_m = 1.0 / M

    def conv_bn_relu(p, w_ref, g_ref, b_ref):
        """One 3x3 conv (single K=384 MXU matmul) + training-mode BN + ReLU."""
        # p: (N, Hp, W, 128) bf16 with lanes = [kw0 | kw1 | kw2 | zeros] * cin.
        # The 3 kh row-shifts are whole-128-lane groups -> lane concat is free.
        lhs = jnp.concatenate([p[:, kh:kh + H, :, :] for kh in range(3)],
                              axis=-1).reshape(M, 3 * C)              # bf16
        y = jnp.dot(lhs, w_ref[...], preferred_element_type=jnp.float32)
        # Fused single-pass BN stats; folded scale/shift; clamp var >= 0.
        mu = jnp.sum(y, axis=0, keepdims=True) * inv_m
        var = jnp.maximum(
            jnp.sum(y * y, axis=0, keepdims=True) * inv_m - mu * mu, 0.0)
        scale = g_ref[...] * jax.lax.rsqrt(var + EPS)   # gamma zero-padded =>
        shift = b_ref[...] - mu * scale                 # padded lanes stay 0
        return jnp.maximum(y * scale + shift, 0.0)      # (M, 128) f32

    def repack(a, cr, dst_ref):
        """Build the next layer's kw-packed LHS interior and store it once
        (lane-dense 128, sublane-aligned; W halo zeros supplied in-register)."""
        ab = a.astype(jnp.bfloat16).reshape(N, H, W, C)
        zcol = jnp.zeros((N, H, 1, C), jnp.bfloat16)
        left = jnp.concatenate([zcol, ab[:, :, :W - 1, :]], axis=2)   # x[w-1]
        right = jnp.concatenate([ab[:, :, 1:, :], zcol], axis=2)      # x[w+1]
        parts = [left[..., :cr], ab[..., :cr], right[..., :cr]]
        if 3 * cr < C:
            parts.append(jnp.zeros((N, H, W, C - 3 * cr), jnp.bfloat16))
        dst_ref[:, 1:H + 1, :, :] = jnp.concatenate(parts, axis=-1)

    # Zero ONLY the 1-row top/bottom H-halo slabs of the scratch LHS buffers;
    # the interiors are fully rewritten by repack() each layer.
    zrow = jnp.zeros((N, 1, W, C), jnp.bfloat16)
    p2_scr[:, 0:1, :, :] = zrow
    p2_scr[:, Hp - 1:Hp, :, :] = zrow
    p3_scr[:, 0:1, :, :] = zrow
    p3_scr[:, Hp - 1:Hp, :, :] = zrow

    # layer 1: conv1 -> bn1 -> relu   (conv bias dropped: exact for batch-stat BN)
    a1 = conv_bn_relu(x_ref[...], w1_ref, g1_ref, b1_ref)
    repack(a1, c1, p2_scr)

    # layer 2: conv2 -> bn2 -> relu
    a2 = conv_bn_relu(p2_scr[...], w2_ref, g2_ref, b2_ref)
    repack(a2, c2, p3_scr)

    # layer 3: conv3 -> bn3 -> relu   (lane-dense 128-wide bf16 store)
    a3 = conv_bn_relu(p3_scr[...], w3_ref, g3_ref, b3_ref)
    out_ref[...] = a3.reshape(N, H, W, C).astype(out_ref.dtype)


def resnet_c_block(x_nchw, p):
    """Wrapper: NCHW in, NCHW out (module semantics). Compute is in the kernel."""
    N, Cin, H, W = x_nchw.shape
    C1, C2, C3 = p['w1'].shape[0], p['w2'].shape[0], p['w3'].shape[0]
    Cp = LANES
    Hp = H + 2
    assert max(Cin, C1, C2, C3) <= Cp, "channel counts must fit one lane group"
    assert 3 * max(Cin, C1, C2) <= Cp, "kw-packed K must fit one 128-lane group"

    def pack_w(w):
        # torch (Cout, Cin, 3, 3) -> (3*128, Cp) bf16:
        # row index = kh*128 + kw*Cin + cin  (matches the kw-packed LHS lanes).
        cout, cin = w.shape[0], w.shape[1]
        wt = jnp.transpose(w, (2, 3, 1, 0)).reshape(3, 3 * cin, cout)
        wt = jnp.pad(wt, ((0, 0), (0, Cp - 3 * cin), (0, Cp - cout)))
        return wt.reshape(3 * Cp, Cp).astype(jnp.bfloat16)

    def pack_v(v):
        # (C,) -> (1, Cp) f32.  Zero-padding of gamma/beta is REQUIRED: it is
        # what keeps the padded lanes exactly zero through BN (scale = 0).
        return jnp.pad(v, (0, Cp - v.shape[0])).reshape(1, Cp).astype(jnp.float32)

    # One-time input prep (fused by XLA): NCHW -> NHWC and kw-pack the layer-1
    # LHS: lanes = [x[w-1] | x[w] | x[w+1] | zeros], rows 0 / Hp-1 = zero halo.
    a0 = jnp.transpose(x_nchw, (0, 2, 3, 1)).astype(jnp.float32)      # (N,H,W,Cin)
    zcol = jnp.zeros((N, H, 1, Cin), a0.dtype)
    left = jnp.concatenate([zcol, a0[:, :, :W - 1, :]], axis=2)
    right = jnp.concatenate([a0[:, :, 1:, :], zcol], axis=2)
    xpk = jnp.concatenate([left, a0, right], axis=-1)                 # (N,H,W,3Cin)
    xpk = jnp.pad(xpk, ((0, 0), (1, 1), (0, 0), (0, Cp - 3 * Cin))
                  ).astype(jnp.bfloat16)                              # (N,Hp,W,Cp)

    # Conv biases (p['b1'] etc.) intentionally NOT passed: no-op before
    # training-mode BatchNorm.
    ins = (xpk,
           pack_w(p['w1']), pack_v(p['g1']), pack_v(p['be1']),
           pack_w(p['w2']), pack_v(p['g2']), pack_v(p['be2']),
           pack_w(p['w3']), pack_v(p['g3']), pack_v(p['be3']))

    vmem = pl.BlockSpec(memory_space=pltpu.MemorySpace.VMEM)
    out = pl.pallas_call(
        functools.partial(_resnet_c_block_kernel, c1=C1, c2=C2),
        out_shape=jax.ShapeDtypeStruct((N, H, W, Cp), jnp.bfloat16),
        in_specs=[vmem] * len(ins),
        out_specs=vmem,
        scratch_shapes=[pltpu.VMEM((N, Hp, W, Cp), jnp.bfloat16),
                        pltpu.VMEM((N, Hp, W, Cp), jnp.bfloat16)],
    )(*ins)

    # Module semantics: NCHW f32.  A fused NHWC consumer could take `out`
    # (lane-dense bf16) directly and skip this slice/transpose.
    return jnp.transpose(out[:, :, :, :C3].astype(jnp.float32), (0, 3, 1, 2))


def _reference(x, p):
    """Pure-JAX (lax.conv, all f32, with biases) reference of the PyTorch forward."""
    def conv(x, w, b):
        y = jax.lax.conv_general_dilated(x, w, (1, 1), ((1, 1), (1, 1)),
                                         dimension_numbers=('NCHW', 'OIHW', 'NCHW'))
        return y + b.reshape(1, -1, 1, 1)

    def bn(x, g, be):
        mu = jnp.mean(x, axis=(0, 2, 3), keepdims=True)
        var = jnp.mean((x - mu) ** 2, axis=(0, 2, 3), keepdims=True)
        return (x - mu) / jnp.sqrt(var + EPS) * g.reshape(1, -1, 1, 1) + be.reshape(1, -1, 1, 1)

    relu = lambda v: jnp.maximum(v, 0.0)
    a1 = relu(bn(conv(x, p['w1'], p['b1']), p['g1'], p['be1']))
    a2 = relu(bn(conv(a1, p['w2'], p['b2']), p['g2'], p['be2']))
    return relu(bn(conv(a2, p['w3'], p['b3']), p['g3'], p['be3']))


if __name__ == "__main__":
    # ResNet_C_Block(in_channels=16, out_channels=64):
    #   conv1: 16 -> 16, conv2: 16 -> 32, conv3: 32 -> 64, all 3x3 pad=1.
    N, Cin, Cout, H, W = 2, 16, 64, 16, 16
    C1, C2 = Cout // 4, Cout // 2

    key = jax.random.PRNGKey(0)
    ks = jax.random.split(key, 16)

    x = jax.random.normal(ks[0], (N, Cin, H, W), jnp.float32)
    params = {
        'w1': 0.2 * jax.random.normal(ks[1], (C1, Cin, 3, 3), jnp.float32),
        'b1': 0.1 * jax.random.normal(ks[2], (C1,), jnp.float32),
        'g1': 1.0 + 0.1 * jax.random.normal(ks[3], (C1,), jnp.float32),
        'be1': 0.1 * jax.random.normal(ks[4], (C1,), jnp.float32),
        'w2': 0.2 * jax.random.normal(ks[5], (C2, C1, 3, 3), jnp.float32),
        'b2': 0.1 * jax.random.normal(ks[6], (C2,), jnp.float32),
        'g2': 1.0 + 0.1 * jax.random.normal(ks[7], (C2,), jnp.float32),
        'be2': 0.1 * jax.random.normal(ks[8], (C2,), jnp.float32),
        'w3': 0.2 * jax.random.normal(ks[9], (Cout, C2, 3, 3), jnp.float32),
        'b3': 0.1 * jax.random.normal(ks[10], (Cout,), jnp.float32),
        'g3': 1.0 + 0.1 * jax.random.normal(ks[11], (Cout,), jnp.float32),
        'be3': 0.1 * jax.random.normal(ks[12], (Cout,), jnp.float32),
    }

    out = jax.block_until_ready(resnet_c_block(x, params))
    ref = jax.block_until_ready(_reference(x, params))

    assert out.shape == (N, Cout, H, W), out.shape
    # Tolerance accounts for bf16 MXU operands / bf16 inter-layer activations /
    # bf16 output through 3 stacked conv+BN layers vs an all-f32 reference
    # (BN keeps activations ~unit scale).
    err = float(jnp.max(jnp.abs(out - ref)))
    assert err < 1e-1, err
    print("KERNEL_OK")
</pallas_src>

<mosaic_0001>
module attributes {stable_mosaic.version = 11 : i64} {
  func.func @_resnet_c_block_kernel(%arg0: memref<2x18x16x128xbf16, #tpu.memory_space<vmem>>, %arg1: memref<384x128xbf16, #tpu.memory_space<vmem>>, %arg2: memref<1x128xf32, #tpu.memory_space<vmem>>, %arg3: memref<1x128xf32, #tpu.memory_space<vmem>>, %arg4: memref<384x128xbf16, #tpu.memory_space<vmem>>, %arg5: memref<1x128xf32, #tpu.memory_space<vmem>>, %arg6: memref<1x128xf32, #tpu.memory_space<vmem>>, %arg7: memref<384x128xbf16, #tpu.memory_space<vmem>>, %arg8: memref<1x128xf32, #tpu.memory_space<vmem>>, %arg9: memref<1x128xf32, #tpu.memory_space<vmem>>, %arg10: memref<2x16x16x128xbf16, #tpu.memory_space<vmem>>, %arg11: memref<2x18x16x128xbf16, #tpu.memory_space<vmem>>, %arg12: memref<2x18x16x128xbf16, #tpu.memory_space<vmem>>) attributes {dimension_semantics = [], scalar_prefetch = 0 : i64, scratch_operands = 2 : i64, tpu.core_type = #tpu.core_type<tc>} {
    %cst = arith.constant 0.000000e+00 : bf16
    %0 = vector.broadcast %cst : bf16 to vector<2x1x16x128xbf16>
    %c0 = arith.constant 0 : index
    %c0_0 = arith.constant 0 : index
    %c0_1 = arith.constant 0 : index
    %c0_2 = arith.constant 0 : index
    %1 = vector.load %arg11[%c0, %c0_0, %c0_1, %c0_2] : memref<2x18x16x128xbf16, #tpu.memory_space<vmem>>, vector<2x1x16x128xbf16>
    tpu.vector_store %arg11[%c0, %c0_0, %c0_1, %c0_2], %0 {strides = array<i32>} : memref<2x18x16x128xbf16, #tpu.memory_space<vmem>>, vector<2x1x16x128xbf16>,
    %c0_3 = arith.constant 0 : index
    %c17 = arith.constant 17 : index
    %c0_4 = arith.constant 0 : index
    %c0_5 = arith.constant 0 : index
    %2 = vector.load %arg11[%c0_3, %c17, %c0_4, %c0_5] : memref<2x18x16x128xbf16, #tpu.memory_space<vmem>>, vector<2x1x16x128xbf16>
    tpu.vector_store %arg11[%c0_3, %c17, %c0_4, %c0_5], %0 {strides = array<i32>} : memref<2x18x16x128xbf16, #tpu.memory_space<vmem>>, vector<2x1x16x128xbf16>,
    %c0_6 = arith.constant 0 : index
    %c0_7 = arith.constant 0 : index
    %c0_8 = arith.constant 0 : index
    %c0_9 = arith.constant 0 : index
    %3 = vector.load %arg12[%c0_6, %c0_7, %c0_8, %c0_9] : memref<2x18x16x128xbf16, #tpu.memory_space<vmem>>, vector<2x1x16x128xbf16>
    tpu.vector_store %arg12[%c0_6, %c0_7, %c0_8, %c0_9], %0 {strides = array<i32>} : memref<2x18x16x128xbf16, #tpu.memory_space<vmem>>, vector<2x1x16x128xbf16>,
    %c0_10 = arith.constant 0 : index
    %c17_11 = arith.constant 17 : index
    %c0_12 = arith.constant 0 : index
    %c0_13 = arith.constant 0 : index
    %4 = vector.load %arg12[%c0_10, %c17_11, %c0_12, %c0_13] : memref<2x18x16x128xbf16, #tpu.memory_space<vmem>>, vector<2x1x16x128xbf16>
    tpu.vector_store %arg12[%c0_10, %c17_11, %c0_12, %c0_13], %0 {strides = array<i32>} : memref<2x18x16x128xbf16, #tpu.memory_space<vmem>>, vector<2x1x16x128xbf16>,
    %c0_14 = arith.constant 0 : index
    %c0_15 = arith.constant 0 : index
    %c0_16 = arith.constant 0 : index
    %c0_17 = arith.constant 0 : index
    %5 = vector.load %arg0[%c0_14, %c0_15, %c0_16, %c0_17] : memref<2x18x16x128xbf16, #tpu.memory_space<vmem>>, vector<2x18x16x128xbf16>
    %6 = vector.extract_strided_slice %5 {offsets = [0, 0, 0, 0], sizes = [2, 16, 16, 128], strides = [1, 1, 1, 1]} : vector<2x18x16x128xbf16> to vector<2x16x16x128xbf16>
    %7 = vector.extract_strided_slice %5 {offsets = [0, 1, 0, 0], sizes = [2, 16, 16, 128], strides = [1, 1, 1, 1]} : vector<2x18x16x128xbf16> to vector<2x16x16x128xbf16>
    %8 = vector.extract_strided_slice %5 {offsets = [0, 2, 0, 0], sizes = [2, 16, 16, 128], strides = [1, 1, 1, 1]} : vector<2x18x16x128xbf16> to vector<2x16x16x128xbf16>
    %9 = tpu.concatenate %6, %7, %8 in 3 : vector<2x16x16x128xbf16>, vector<2x16x16x128xbf16>, vector<2x16x16x128xbf16> -> vector<2x16x16x384xbf16>
    %10 = vector.shape_cast %9 : vector<2x16x16x384xbf16> to vector<512x384xbf16>
    %c0_18 = arith.constant 0 : index
    %c0_19 = arith.constant 0 : index
    %11 = vector.load %arg1[%c0_18, %c0_19] : memref<384x128xbf16, #tpu.memory_space<vmem>>, vector<384x128xbf16>
    %cst_20 = arith.constant dense<0.000000e+00> : vector<512x128xf32>
    %12 = tpu.matmul %10, %11, %cst_20 {dimension_numbers = #tpu.dot_dimension_numbers<[1], [0], [0], [1], [0, 0, 1, 1], [], []>} : vector<512x384xbf16>, vector<384x128xbf16>, vector<512x128xf32> -> vector<512x128xf32>
    %cst_21 = arith.constant dense<0.000000e+00> : vector<128xf32>
    %13 = vector.multi_reduction <add>, %12, %cst_21 [0] : vector<512x128xf32> to vector<128xf32>
    %14 = vector.shape_cast %13 : vector<128xf32> to vector<1x128xf32>
    %cst_22 = arith.constant 0.001953125 : f32
    %15 = vector.broadcast %cst_22 : f32 to vector<1x128xf32>
    %16 = arith.mulf %14, %15 : vector<1x128xf32>
    %17 = arith.mulf %12, %12 : vector<512x128xf32>
    %cst_23 = arith.constant dense<0.000000e+00> : vector<128xf32>
    %18 = vector.multi_reduction <add>, %17, %cst_23 [0] : vector<512x128xf32> to vector<128xf32>
    %19 = vector.shape_cast %18 : vector<128xf32> to vector<1x128xf32>
    %cst_24 = arith.constant 0.001953125 : f32
    %20 = vector.broadcast %cst_24 : f32 to vector<1x128xf32>
    %21 = arith.mulf %19, %20 : vector<1x128xf32>
    %22 = arith.mulf %16, %16 : vector<1x128xf32>
    %23 = arith.subf %21, %22 : vector<1x128xf32>
    %cst_25 = arith.constant 0.000000e+00 : f32
    %24 = vector.broadcast %cst_25 : f32 to vector<1x128xf32>
    %25 = arith.maximumf %23, %24 : vector<1x128xf32>
    %c0_26 = arith.constant 0 : index
    %c0_27 = arith.constant 0 : index
    %26 = vector.load %arg2[%c0_26, %c0_27] : memref<1x128xf32, #tpu.memory_space<vmem>>, vector<1x128xf32>
    %cst_28 = arith.constant 9.99999974E-6 : f32
    %27 = vector.broadcast %cst_28 : f32 to vector<1x128xf32>
    %28 = arith.addf %25, %27 : vector<1x128xf32>
    %29 = math.rsqrt %28 : vector<1x128xf32>
    %30 = arith.mulf %26, %29 : vector<1x128xf32>
    %c0_29 = arith.constant 0 : index
    %c0_30 = arith.constant 0 : index
    %31 = vector.load %arg3[%c0_29, %c0_30] : memref<1x128xf32, #tpu.memory_space<vmem>>, vector<1x128xf32>
    %32 = arith.mulf %16, %30 : vector<1x128xf32>
    %33 = arith.subf %31, %32 : vector<1x128xf32>
    %34 = vector.broadcast %30 : vector<1x128xf32> to vector<512x128xf32>
    %35 = arith.mulf %12, %34 : vector<512x128xf32>
    %36 = vector.broadcast %33 : vector<1x128xf32> to vector<512x128xf32>
    %37 = arith.addf %35, %36 : vector<512x128xf32>
    %cst_31 = arith.constant 0.000000e+00 : f32
    %38 = vector.broadcast %cst_31 : f32 to vector<512x128xf32>
    %39 = arith.maximumf %37, %38 : vector<512x128xf32>
    %40 = arith.truncf %39 : vector<512x128xf32> to vector<512x128xbf16>
    %41 = vector.shape_cast %40 : vector<512x128xbf16> to vector<2x16x16x128xbf16>
    %cst_32 = arith.constant 0.000000e+00 : bf16
    %42 = vector.broadcast %cst_32 : bf16 to vector<2x16x1x128xbf16>
    %43 = vector.extract_strided_slice %41 {offsets = [0, 0, 0, 0], sizes = [2, 16, 15, 128], strides = [1, 1, 1, 1]} : vector<2x16x16x128xbf16> to vector<2x16x15x128xbf16>
    %44 = tpu.concatenate %42, %43 in 2 : vector<2x16x1x128xbf16>, vector<2x16x15x128xbf16> -> vector<2x16x16x128xbf16>
    %45 = vector.extract_strided_slice %41 {offsets = [0, 0, 1, 0], sizes = [2, 16, 15, 128], strides = [1, 1, 1, 1]} : vector<2x16x16x128xbf16> to vector<2x16x15x128xbf16>
    %46 = tpu.concatenate %45, %42 in 2 : vector<2x16x15x128xbf16>, vector<2x16x1x128xbf16> -> vector<2x16x16x128xbf16>
    %47 = vector.extract_strided_slice %44 {offsets = [0, 0, 0, 0], sizes = [2, 16, 16, 16], strides = [1, 1, 1, 1]} : vector<2x16x16x128xbf16> to vector<2x16x16x16xbf16>
    %48 = vector.extract_strided_slice %41 {offsets = [0, 0, 0, 0], sizes = [2, 16, 16, 16], strides = [1, 1, 1, 1]} : vector<2x16x16x128xbf16> to vector<2x16x16x16xbf16>
    %49 = vector.extract_strided_slice %46 {offsets = [0, 0, 0, 0], sizes = [2, 16, 16, 16], strides = [1, 1, 1, 1]} : vector<2x16x16x128xbf16> to vector<2x16x16x16xbf16>
    %cst_33 = arith.constant 0.000000e+00 : bf16
    %50 = vector.broadcast %cst_33 : bf16 to vector<2x16x16x80xbf16>
    %51 = tpu.concatenate %47, %48, %49, %50 in 3 : vector<2x16x16x16xbf16>, vector<2x16x16x16xbf16>, vector<2x16x16x16xbf16>, vector<2x16x16x80xbf16> -> vector<2x16x16x128xbf16>
    %c0_34 = arith.constant 0 : index
    %c1 = arith.constant 1 : index
    %c0_35 = arith.constant 0 : index
    %c0_36 = arith.constant 0 : index
    %52 = vector.load %arg11[%c0_34, %c1, %c0_35, %c0_36] : memref<2x18x16x128xbf16, #tpu.memory_space<vmem>>, vector<2x16x16x128xbf16>
    tpu.vector_store %arg11[%c0_34, %c1, %c0_35, %c0_36], %51 {strides = array<i32>} : memref<2x18x16x128xbf16, #tpu.memory_space<vmem>>, vector<2x16x16x128xbf16>,
    %c0_37 = arith.constant 0 : index
    %c0_38 = arith.constant 0 : index
    %c0_39 = arith.constant 0 : index
    %c0_40 = arith.constant 0 : index
    %53 = vector.load %arg11[%c0_37, %c0_38, %c0_39, %c0_40] : memref<2x18x16x128xbf16, #tpu.memory_space<vmem>>, vector<2x18x16x128xbf16>
    %54 = vector.extract_strided_slice %53 {offsets = [0, 0, 0, 0], sizes = [2, 16, 16, 128], strides = [1, 1, 1, 1]} : vector<2x18x16x128xbf16> to vector<2x16x16x128xbf16>
    %55 = vector.extract_strided_slice %53 {offsets = [0, 1, 0, 0], sizes = [2, 16, 16, 128], strides = [1, 1, 1, 1]} : vector<2x18x16x128xbf16> to vector<2x16x16x128xbf16>
    %56 = vector.extract_strided_slice %53 {offsets = [0, 2, 0, 0], sizes = [2, 16, 16, 128], strides = [1, 1, 1, 1]} : vector<2x18x16x128xbf16> to vector<2x16x16x128xbf16>
    %57 = tpu.concatenate %54, %55, %56 in 3 : vector<2x16x16x128xbf16>, vector<2x16x16x128xbf16>, vector<2x16x16x128xbf16> -> vector<2x16x16x384xbf16>
    %58 = vector.shape_cast %57 : vector<2x16x16x384xbf16> to vector<512x384xbf16>
    %c0_41 = arith.constant 0 : index
    %c0_42 = arith.constant 0 : index
    %59 = vector.load %arg4[%c0_41, %c0_42] : memref<384x128xbf16, #tpu.memory_space<vmem>>, vector<384x128xbf16>
    %cst_43 = arith.constant dense<0.000000e+00> : vector<512x128xf32>
    %60 = tpu.matmul %58, %59, %cst_43 {dimension_numbers = #tpu.dot_dimension_numbers<[1], [0], [0], [1], [0, 0, 1, 1], [], []>} : vector<512x384xbf16>, vector<384x128xbf16>, vector<512x128xf32> -> vector<512x128xf32>
    %cst_44 = arith.constant dense<0.000000e+00> : vector<128xf32>
    %61 = vector.multi_reduction <add>, %60, %cst_44 [0] : vector<512x128xf32> to vector<128xf32>
    %62 = vector.shape_cast %61 : vector<128xf32> to vector<1x128xf32>
    %cst_45 = arith.constant 0.001953125 : f32
    %63 = vector.broadcast %cst_45 : f32 to vector<1x128xf32>
    %64 = arith.mulf %62, %63 : vector<1x128xf32>
    %65 = arith.mulf %60, %60 : vector<512x128xf32>
    %cst_46 = arith.constant dense<0.000000e+00> : vector<128xf32>
    %66 = vector.multi_reduction <add>, %65, %cst_46 [0] : vector<512x128xf32> to vector<128xf32>
    %67 = vector.shape_cast %66 : vector<128xf32> to vector<1x128xf32>
    %cst_47 = arith.constant 0.001953125 : f32
    %68 = vector.broadcast %cst_47 : f32 to vector<1x128xf32>
    %69 = arith.mulf %67, %68 : vector<1x128xf32>
    %70 = arith.mulf %64, %64 : vector<1x128xf32>
    %71 = arith.subf %69, %70 : vector<1x128xf32>
    %cst_48 = arith.constant 0.000000e+00 : f32
    %72 = vector.broadcast %cst_48 : f32 to vector<1x128xf32>
    %73 = arith.maximumf %71, %72 : vector<1x128xf32>
    %c0_49 = arith.constant 0 : index
    %c0_50 = arith.constant 0 : index
    %74 = vector.load %arg5[%c0_49, %c0_50] : memref<1x128xf32, #tpu.memory_space<vmem>>, vector<1x128xf32>
    %cst_51 = arith.constant 9.99999974E-6 : f32
    %75 = vector.broadcast %cst_51 : f32 to vector<1x128xf32>
    %76 = arith.addf %73, %75 : vector<1x128xf32>
    %77 = math.rsqrt %76 : vector<1x128xf32>
    %78 = arith.mulf %74, %77 : vector<1x128xf32>
    %c0_52 = arith.constant 0 : index
    %c0_53 = arith.constant 0 : index
    %79 = vector.load %arg6[%c0_52, %c0_53] : memref<1x128xf32, #tpu.memory_space<vmem>>, vector<1x128xf32>
    %80 = arith.mulf %64, %78 : vector<1x128xf32>
    %81 = arith.subf %79, %80 : vector<1x128xf32>
    %82 = vector.broadcast %78 : vector<1x128xf32> to vector<512x128xf32>
    %83 = arith.mulf %60, %82 : vector<512x128xf32>
    %84 = vector.broadcast %81 : vector<1x128xf32> to vector<512x128xf32>
    %85 = arith.addf %83, %84 : vector<512x128xf32>
    %cst_54 = arith.constant 0.000000e+00 : f32
    %86 = vector.broadcast %cst_54 : f32 to vector<512x128xf32>
    %87 = arith.maximumf %85, %86 : vector<512x128xf32>
    %88 = arith.truncf %87 : vector<512x128xf32> to vector<512x128xbf16>
    %89 = vector.shape_cast %88 : vector<512x128xbf16> to vector<2x16x16x128xbf16>
    %cst_55 = arith.constant 0.000000e+00 : bf16
    %90 = vector.broadcast %cst_55 : bf16 to vector<2x16x1x128xbf16>
    %91 = vector.extract_strided_slice %89 {offsets = [0, 0, 0, 0], sizes = [2, 16, 15, 128], strides = [1, 1, 1, 1]} : vector<2x16x16x128xbf16> to vector<2x16x15x128xbf16>
    %92 = tpu.concatenate %90, %91 in 2 : vector<2x16x1x128xbf16>, vector<2x16x15x128xbf16> -> vector<2x16x16x128xbf16>
    %93 = vector.extract_strided_slice %89 {offsets = [0, 0, 1, 0], sizes = [2, 16, 15, 128], strides = [1, 1, 1, 1]} : vector<2x16x16x128xbf16> to vector<2x16x15x128xbf16>
    %94 = tpu.concatenate %93, %90 in 2 : vector<2x16x15x128xbf16>, vector<2x16x1x128xbf16> -> vector<2x16x16x128xbf16>
    %95 = vector.extract_strided_slice %92 {offsets = [0, 0, 0, 0], sizes = [2, 16, 16, 32], strides = [1, 1, 1, 1]} : vector<2x16x16x128xbf16> to vector<2x16x16x32xbf16>
    %96 = vector.extract_strided_slice %89 {offsets = [0, 0, 0, 0], sizes = [2, 16, 16, 32], strides = [1, 1, 1, 1]} : vector<2x16x16x128xbf16> to vector<2x16x16x32xbf16>
    %97 = vector.extract_strided_slice %94 {offsets = [0, 0, 0, 0], sizes = [2, 16, 16, 32], strides = [1, 1, 1, 1]} : vector<2x16x16x128xbf16> to vector<2x16x16x32xbf16>
    %cst_56 = arith.constant 0.000000e+00 : bf16
    %98 = vector.broadcast %cst_56 : bf16 to vector<2x16x16x32xbf16>
    %99 = tpu.concatenate %95, %96, %97, %98 in 3 : vector<2x16x16x32xbf16>, vector<2x16x16x32xbf16>, vector<2x16x16x32xbf16>, vector<2x16x16x32xbf16> -> vector<2x16x16x128xbf16>
    %c0_57 = arith.constant 0 : index
    %c1_58 = arith.constant 1 : index
    %c0_59 = arith.constant 0 : index
    %c0_60 = arith.constant 0 : index
    %100 = vector.load %arg12[%c0_57, %c1_58, %c0_59, %c0_60] : memref<2x18x16x128xbf16, #tpu.memory_space<vmem>>, vector<2x16x16x128xbf16>
    tpu.vector_store %arg12[%c0_57, %c1_58, %c0_59, %c0_60], %99 {strides = array<i32>} : memref<2x18x16x128xbf16, #tpu.memory_space<vmem>>, vector<2x16x16x128xbf16>,
    %c0_61 = arith.constant 0 : index
    %c0_62 = arith.constant 0 : index
    %c0_63 = arith.constant 0 : index
    %c0_64 = arith.constant 0 : index
    %101 = vector.load %arg12[%c0_61, %c0_62, %c0_63, %c0_64] : memref<2x18x16x128xbf16, #tpu.memory_space<vmem>>, vector<2x18x16x128xbf16>
    %102 = vector.extract_strided_slice %101 {offsets = [0, 0, 0, 0], sizes = [2, 16, 16, 128], strides = [1, 1, 1, 1]} : vector<2x18x16x128xbf16> to vector<2x16x16x128xbf16>
    %103 = vector.extract_strided_slice %101 {offsets = [0, 1, 0, 0], sizes = [2, 16, 16, 128], strides = [1, 1, 1, 1]} : vector<2x18x16x128xbf16> to vector<2x16x16x128xbf16>
    %104 = vector.extract_strided_slice %101 {offsets = [0, 2, 0, 0], sizes = [2, 16, 16, 128], strides = [1, 1, 1, 1]} : vector<2x18x16x128xbf16> to vector<2x16x16x128xbf16>
    %105 = tpu.concatenate %102, %103, %104 in 3 : vector<2x16x16x128xbf16>, vector<2x16x16x128xbf16>, vector<2x16x16x128xbf16> -> vector<2x16x16x384xbf16>
    %106 = vector.shape_cast %105 : vector<2x16x16x384xbf16> to vector<512x384xbf16>
    %c0_65 = arith.constant 0 : index
    %c0_66 = arith.constant 0 : index
    %107 = vector.load %arg7[%c0_65, %c0_66] : memref<384x128xbf16, #tpu.memory_space<vmem>>, vector<384x128xbf16>
    %cst_67 = arith.constant dense<0.000000e+00> : vector<512x128xf32>
    %108 = tpu.matmul %106, %107, %cst_67 {dimension_numbers = #tpu.dot_dimension_numbers<[1], [0], [0], [1], [0, 0, 1, 1], [], []>} : vector<512x384xbf16>, vector<384x128xbf16>, vector<512x128xf32> -> vector<512x128xf32>
    %cst_68 = arith.constant dense<0.000000e+00> : vector<128xf32>
    %109 = vector.multi_reduction <add>, %108, %cst_68 [0] : vector<512x128xf32> to vector<128xf32>
    %110 = vector.shape_cast %109 : vector<128xf32> to vector<1x128xf32>
    %cst_69 = arith.constant 0.001953125 : f32
    %111 = vector.broadcast %cst_69 : f32 to vector<1x128xf32>
    %112 = arith.mulf %110, %111 : vector<1x128xf32>
    %113 = arith.mulf %108, %108 : vector<512x128xf32>
    %cst_70 = arith.constant dense<0.000000e+00> : vector<128xf32>
    %114 = vector.multi_reduction <add>, %113, %cst_70 [0] : vector<512x128xf32> to vector<128xf32>
    %115 = vector.shape_cast %114 : vector<128xf32> to vector<1x128xf32>
    %cst_71 = arith.constant 0.001953125 : f32
    %116 = vector.broadcast %cst_71 : f32 to vector<1x128xf32>
    %117 = arith.mulf %115, %116 : vector<1x128xf32>
    %118 = arith.mulf %112, %112 : vector<1x128xf32>
    %119 = arith.subf %117, %118 : vector<1x128xf32>
    %cst_72 = arith.constant 0.000000e+00 : f32
    %120 = vector.broadcast %cst_72 : f32 to vector<1x128xf32>
    %121 = arith.maximumf %119, %120 : vector<1x128xf32>
    %c0_73 = arith.constant 0 : index
    %c0_74 = arith.constant 0 : index
    %122 = vector.load %arg8[%c0_73, %c0_74] : memref<1x128xf32, #tpu.memory_space<vmem>>, vector<1x128xf32>
    %cst_75 = arith.constant 9.99999974E-6 : f32
    %123 = vector.broadcast %cst_75 : f32 to vector<1x128xf32>
    %124 = arith.addf %121, %123 : vector<1x128xf32>
    %125 = math.rsqrt %124 : vector<1x128xf32>
    %126 = arith.mulf %122, %125 : vector<1x128xf32>
    %c0_76 = arith.constant 0 : index
    %c0_77 = arith.constant 0 : index
    %127 = vector.load %arg9[%c0_76, %c0_77] : memref<1x128xf32, #tpu.memory_space<vmem>>, vector<1x128xf32>
    %128 = arith.mulf %112, %126 : vector<1x128xf32>
    %129 = arith.subf %127, %128 : vector<1x128xf32>
    %130 = vector.broadcast %126 : vector<1x128xf32> to vector<512x128xf32>
    %131 = arith.mulf %108, %130 : vector<512x128xf32>
    %132 = vector.broadcast %129 : vector<1x128xf32> to vector<512x128xf32>
    %133 = arith.addf %131, %132 : vector<512x128xf32>
    %cst_78 = arith.constant 0.000000e+00 : f32
    %134 = vector.broadcast %cst_78 : f32 to vector<512x128xf32>
    %135 = arith.maximumf %133, %134 : vector<512x128xf32>
    %136 = vector.shape_cast %135 : vector<512x128xf32> to vector<2x16x16x128xf32>
    %137 = arith.truncf %136 : vector<2x16x16x128xf32> to vector<2x16x16x128xbf16>
    %c0_79 = arith.constant 0 : index
    %c0_80 = arith.constant 0 : index
    %c0_81 = arith.constant 0 : index
    %c0_82 = arith.constant 0 : index
    %138 = vector.load %arg10[%c0_79, %c0_80, %c0_81, %c0_82] : memref<2x16x16x128xbf16, #tpu.memory_space<vmem>>, vector<2x16x16x128xbf16>
    tpu.vector_store %arg10[%c0_79, %c0_80, %c0_81, %c0_82], %137 {strides = array<i32>} : memref<2x16x16x128xbf16, #tpu.memory_space<vmem>>, vector<2x16x16x128xbf16>,
    return
  }
}

</mosaic_0001>

<llo_original>
// kernel: tpu_custom_call.1
$region0: #{tpu_custom_call.1}
  #allocation0 [shape = 'u32[]', space=smem, size = 0x4, offset = 0x4, fixed_abs, tag = 'smem constant byte address 0x4 - core index']
  #allocation1 [shape = 'u32[144,128]{1,0:T(1,128)}', space=vmem, size = 0x12000, scoped, tag = 'internal scratch']
  #allocation2 [shape = 'bf16[2,18,16,128]{3,2,1,0:T(16,128)(2,1)}', space=vmem, size = 0x24000, scoped, tag = 'scratch operand']
  #allocation3 [shape = 'bf16[2,18,16,128]{3,2,1,0:T(16,128)(2,1)}', space=vmem, size = 0x24000, scoped, tag = 'scratch operand']
  %s0 = inlined_call_operand.hbm [shape: bf16[2,18,16,128], index: 0, kind: input, shape index: {}]
  %s1 = inlined_call_operand.hbm [shape: bf16[384,128], index: 1, kind: input, shape index: {}]
  %s2 = inlined_call_operand.vmem [shape: f32[1,128], index: 2, kind: input, shape index: {}]
  %s3 = inlined_call_operand.vmem [shape: f32[1,128], index: 3, kind: input, shape index: {}]
  %s4 = inlined_call_operand.hbm [shape: bf16[384,128], index: 4, kind: input, shape index: {}]
  %s5 = inlined_call_operand.vmem [shape: f32[1,128], index: 5, kind: input, shape index: {}]
  %s6 = inlined_call_operand.vmem [shape: f32[1,128], index: 6, kind: input, shape index: {}]
  %s7 = inlined_call_operand.hbm [shape: bf16[384,128], index: 7, kind: input, shape index: {}]
  %s8 = inlined_call_operand.vmem [shape: f32[1,128], index: 8, kind: input, shape index: {}]
  %s9 = inlined_call_operand.vmem [shape: f32[1,128], index: 9, kind: input, shape index: {}]
  %s10 = inlined_call_operand.hbm [shape: bf16[2,16,16,128], index: 10, kind: output, shape index: {}]
  %s11 = sld [smem:[#allocation0]]
  $region66: #{tpu_custom_call.1} parent=0
    _
  %s13 = ssub.s32 1, %s11
  %s14 = scalar_select 0, %s13, %s11
  $region1: #{tpu_custom_call.1} parent=0
    #allocation4 [shape = 'u8[147456]{0}', space=vmem, size = 0x24000, scoped, tag = 'input window, operand 0, single buffered']
    #allocation5 [shape = 's32[1]{0}', space=sflag, size = 0x4, scoped, tag = 'scoped memory for tpu_custom_call.1']
    #allocation6 [shape = 's32[1]{0}', space=sflag, size = 0x4, scoped, tag = 'scoped memory for tpu_custom_call.1']
    #allocation7 [shape = 'u8[98304]{0}', space=vmem, size = 0x18000, scoped, tag = 'input window, operand 1, single buffered']
    #allocation8 [shape = 's32[1]{0}', space=sflag, size = 0x4, scoped, tag = 'scoped memory for tpu_custom_call.1']
    #allocation9 [shape = 'u8[98304]{0}', space=vmem, size = 0x18000, scoped, tag = 'input window, operand 4, single buffered']
    #allocation10 [shape = 'u8[98304]{0}', space=vmem, size = 0x18000, scoped, tag = 'input window, operand 7, single buffered']
    #allocation11 [shape = 's32[1]{0}', space=sflag, size = 0x4, scoped, tag = 'scoped memory for tpu_custom_call.1']
    #allocation12 [shape = 'u8[131072]{0}', space=vmem, size = 0x20000, scoped, tag = 'output window, operand 0, single buffered']
    %15 = vsyncpa [#allocation5], 0
    %16 = vsyncpa [#allocation8], 0
    %17 = vsyncpa [#allocation11], 0
    %18 = vsyncpa [#allocation6], 0
    // Predicated region
    $region2: #{tpu_custom_call.1} parent=1 // pred_check
      _
    $region3: #{tpu_custom_call.1} parent=1 // pred_check_branch
      %20 = sbr.rel (0) target = $region5
    $region4: #{tpu_custom_call.1} parent=1 // pred_region
      %s22 = ssub.s32 4608, 4608
      %23 = vsyncadd [#allocation5], %s22
      %s24 = sshll.u32 [#allocation4], 4
      %s25 = int_to_ptr.vmem [resolvable:$true] %s24
      %30 = dma.hbm_to_vmem [thread:$0]  %s0, 4608, %s25, [#allocation5], 64, 64, 4
    $region5: #{tpu_custom_call.1} parent=1 // pred_fallthru
      _
    // Predicated region
    $region6: #{tpu_custom_call.1} parent=1 // pred_check
      _
    $region7: #{tpu_custom_call.1} parent=1 // pred_check_branch
      %32 = sbr.rel (0) target = $region9
    $region8: #{tpu_custom_call.1} parent=1 // pred_region
      %s34 = ssub.s32 3072, 3072
      %35 = vsyncadd [#allocation8], %s34
      %s36 = sshll.u32 [#allocation7], 4
      %s37 = int_to_ptr.vmem [resolvable:$true] %s36
      %42 = dma.hbm_to_vmem [thread:$0]  %s1, 3072, %s37, [#allocation8], 64, 64, 4
    $region9: #{tpu_custom_call.1} parent=1 // pred_fallthru
      _
    // Predicated region
    $region10: #{tpu_custom_call.1} parent=1 // pred_check
      _
    $region11: #{tpu_custom_call.1} parent=1 // pred_check_branch
      %44 = sbr.rel (0) target = $region13
    $region12: #{tpu_custom_call.1} parent=1 // pred_region
      _
    $region13: #{tpu_custom_call.1} parent=1 // pred_fallthru
      _
    // Predicated region
    $region14: #{tpu_custom_call.1} parent=1 // pred_check
      _
    $region15: #{tpu_custom_call.1} parent=1 // pred_check_branch
      %46 = sbr.rel (0) target = $region17
    $region16: #{tpu_custom_call.1} parent=1 // pred_region
      _
    $region17: #{tpu_custom_call.1} parent=1 // pred_fallthru
      _
    // Predicated region
    $region18: #{tpu_custom_call.1} parent=1 // pred_check
      _
    $region19: #{tpu_custom_call.1} parent=1 // pred_check_branch
      %48 = sbr.rel (0) target = $region21
    $region20: #{tpu_custom_call.1} parent=1 // pred_region
      %s50 = ssub.s32 3072, 3072
      %51 = vsyncadd [#allocation8], %s50
      %s52 = sshll.u32 [#allocation9], 4
      %s53 = int_to_ptr.vmem [resolvable:$true] %s52
      %58 = dma.hbm_to_vmem [thread:$0]  %s4, 3072, %s53, [#allocation8], 64, 64, 4
    $region21: #{tpu_custom_call.1} parent=1 // pred_fallthru
      _
    // Predicated region
    $region22: #{tpu_custom_call.1} parent=1 // pred_check
      _
    $region23: #{tpu_custom_call.1} parent=1 // pred_check_branch
      %60 = sbr.rel (0) target = $region25
    $region24: #{tpu_custom_call.1} parent=1 // pred_region
      _
    $region25: #{tpu_custom_call.1} parent=1 // pred_fallthru
      _
    // Predicated region
    $region26: #{tpu_custom_call.1} parent=1 // pred_check
      _
    $region27: #{tpu_custom_call.1} parent=1 // pred_check_branch
      %62 = sbr.rel (0) target = $region29
    $region28: #{tpu_custom_call.1} parent=1 // pred_region
      _
    $region29: #{tpu_custom_call.1} parent=1 // pred_fallthru
      _
    // Predicated region
    $region30: #{tpu_custom_call.1} parent=1 // pred_check
      _
    $region31: #{tpu_custom_call.1} parent=1 // pred_check_branch
      %64 = sbr.rel (0) target = $region33
    $region32: #{tpu_custom_call.1} parent=1 // pred_region
      %s66 = ssub.s32 3072, 3072
      %67 = vsyncadd [#allocation11], %s66
      %s68 = sshll.u32 [#allocation10], 4
      %s69 = int_to_ptr.vmem [resolvable:$true] %s68
      %74 = dma.hbm_to_vmem [thread:$0]  %s7, 3072, %s69, [#allocation11], 64, 64, 4
    $region33: #{tpu_custom_call.1} parent=1 // pred_fallthru
      _
    // Predicated region
    $region34: #{tpu_custom_call.1} parent=1 // pred_check
      _
    $region35: #{tpu_custom_call.1} parent=1 // pred_check_branch
      %76 = sbr.rel (0) target = $region37
    $region36: #{tpu_custom_call.1} parent=1 // pred_region
      _
    $region37: #{tpu_custom_call.1} parent=1 // pred_fallthru
      _
    // Predicated region
    $region38: #{tpu_custom_call.1} parent=1 // pred_check
      _
    $region39: #{tpu_custom_call.1} parent=1 // pred_check_branch
      %78 = sbr.rel (0) target = $region41
    $region40: #{tpu_custom_call.1} parent=1 // pred_region
      _
    $region41: #{tpu_custom_call.1} parent=1 // pred_fallthru
      _
    // Predicated region
    $region42: #{tpu_custom_call.1} parent=1 // pred_check
      _
    $region43: #{tpu_custom_call.1} parent=1 // pred_check_branch
      %80 = sbr.rel (0) target = $region45
    $region44: #{tpu_custom_call.1} parent=1 // pred_region
      %81 = dma.done [#allocation5], 4608
    $region45: #{tpu_custom_call.1} parent=1 // pred_fallthru
      _
    // Predicated region
    $region46: #{tpu_custom_call.1} parent=1 // pred_check
      _
    $region47: #{tpu_custom_call.1} parent=1 // pred_check_branch
      %83 = sbr.rel (0) target = $region49
    $region48: #{tpu_custom_call.1} parent=1 // pred_region
      %84 = dma.done [#allocation8], 3072
    $region49: #{tpu_custom_call.1} parent=1 // pred_fallthru
      _
    // Predicated region
    $region50: #{tpu_custom_call.1} parent=1 // pred_check
      _
    $region51: #{tpu_custom_call.1} parent=1 // pred_check_branch
      %86 = sbr.rel (0) target = $region53
    $region52: #{tpu_custom_call.1} parent=1 // pred_region
      %87 = dma.done [#allocation8], 3072
    $region53: #{tpu_custom_call.1} parent=1 // pred_fallthru
      _
    // Predicated region
    $region54: #{tpu_custom_call.1} parent=1 // pred_check
      _
    $region55: #{tpu_custom_call.1} parent=1 // pred_check_branch
      %89 = sbr.rel (0) target = $region57
    $region56: #{tpu_custom_call.1} parent=1 // pred_region
      %90 = dma.done [#allocation11], 3072
    $region57: #{tpu_custom_call.1} parent=1 // pred_fallthru
      _
    %92 = vst [vmem:[#allocation2] sm:$0xff] 0
    %93 = vst [vmem:[#allocation2 + $0x90] sm:$0xff] 0
    %s94 = scalar_lea.vmem [#allocation2], 136
    %95 = vst [vmem:[%s94] sm:$0xff] 0
    %96 = vst [vmem:[%s94 + $0x90] sm:$0xff] 0
    %97 = vst [vmem:[#allocation3] sm:$0xff] 0
    %98 = vst [vmem:[#allocation3 + $0x90] sm:$0xff] 0
    %s99 = scalar_lea.vmem [#allocation3], 136
    %100 = vst [vmem:[%s99] sm:$0xff] 0
    %101 = vst [vmem:[%s99 + $0x90] sm:$0xff] 0
    %v102 = vld [vmem:[#allocation4] sm:$0xf]
    %v103 = vld [vmem:[#allocation4 + $0x4] sm:$0xf]
    %v104 = vld [vmem:[#allocation4 + $0x8] sm:$0xf]
    %v105 = vld [vmem:[#allocation4 + $0xc] sm:$0xf]
    %v106 = vld [vmem:[#allocation4 + $0x10] sm:$0xf]
    %v107 = vld [vmem:[#allocation4 + $0x14] sm:$0xf]
    %v108 = vld [vmem:[#allocation4 + $0x18] sm:$0xf]
    %v109 = vld [vmem:[#allocation4 + $0x1c] sm:$0xf]
    %v110 = vld [vmem:[#allocation4 + $0x20] sm:$0xf]
    %v111 = vld [vmem:[#allocation4 + $0x24] sm:$0xf]
    %v112 = vld [vmem:[#allocation4 + $0x28] sm:$0xf]
    %v113 = vld [vmem:[#allocation4 + $0x2c] sm:$0xf]
    %v114 = vld [vmem:[#allocation4 + $0x30] sm:$0xf]
    %v115 = vld [vmem:[#allocation4 + $0x34] sm:$0xf]
    %v116 = vld [vmem:[#allocation4 + $0x38] sm:$0xf]
    %v117 = vld [vmem:[#allocation4 + $0x3c] sm:$0xf]
    %v118 = vld [vmem:[#allocation4 + $0x40] sm:$0xf]
    %v119 = vld [vmem:[#allocation4 + $0x44] sm:$0xf]
    %v120 = vld [vmem:[#allocation4 + $0x48] sm:$0xf]
    %v121 = vld [vmem:[#allocation4 + $0x4c] sm:$0xf]
    %v122 = vld [vmem:[#allocation4 + $0x50] sm:$0xf]
    %v123 = vld [vmem:[#allocation4 + $0x54] sm:$0xf]
    %v124 = vld [vmem:[#allocation4 + $0x58] sm:$0xf]
    %v125 = vld [vmem:[#allocation4 + $0x5c] sm:$0xf]
    %v126 = vld [vmem:[#allocation4 + $0x60] sm:$0xf]
    %v127 = vld [vmem:[#allocation4 + $0x64] sm:$0xf]
    %v128 = vld [vmem:[#allocation4 + $0x68] sm:$0xf]
    %v129 = vld [vmem:[#allocation4 + $0x6c] sm:$0xf]
    %v130 = vld [vmem:[#allocation4 + $0x70] sm:$0xf]
    %v131 = vld [vmem:[#allocation4 + $0x74] sm:$0xf]
    %v132 = vld [vmem:[#allocation4 + $0x78] sm:$0xf]
    %v133 = vld [vmem:[#allocation4 + $0x7c] sm:$0xf]
    %v134 = vld [vmem:[#allocation4 + $0x80] sm:$0xf]
    %v135 = vld [vmem:[#allocation4 + $0x84] sm:$0xf]
    %v136 = vld [vmem:[#allocation4 + $0x88] sm:$0xf]
    %v137 = vld [vmem:[#allocation4 + $0x8c] sm:$0xf]
    %v138 = vld [vmem:[#allocation4 + $0x90] sm:$0xf]
    %v139 = vld [vmem:[#allocation4 + $0x94] sm:$0xf]
    %v140 = vld [vmem:[#allocation4 + $0x98] sm:$0xf]
    %v141 = vld [vmem:[#allocation4 + $0x9c] sm:$0xf]
    %v142 = vld [vmem:[#allocation4 + $0xa0] sm:$0xf]
    %v143 = vld [vmem:[#allocation4 + $0xa4] sm:$0xf]
    %v144 = vld [vmem:[#allocation4 + $0xa8] sm:$0xf]
    %v145 = vld [vmem:[#allocation4 + $0xac] sm:$0xf]
    %v146 = vld [vmem:[#allocation4 + $0xb0] sm:$0xf]
    %v147 = vld [vmem:[#allocation4 + $0xb4] sm:$0xf]
    %v148 = vld [vmem:[#allocation4 + $0xb8] sm:$0xf]
    %v149 = vld [vmem:[#allocation4 + $0xbc] sm:$0xf]
    %v150 = vld [vmem:[#allocation4 + $0xc0] sm:$0xf]
    %v151 = vld [vmem:[#allocation4 + $0xc4] sm:$0xf]
    %v152 = vld [vmem:[#allocation4 + $0xc8] sm:$0xf]
    %v153 = vld [vmem:[#allocation4 + $0xcc] sm:$0xf]
    %v154 = vld [vmem:[#allocation4 + $0xd0] sm:$0xf]
    %v155 = vld [vmem:[#allocation4 + $0xd4] sm:$0xf]
    %v156 = vld [vmem:[#allocation4 + $0xd8] sm:$0xf]
    %v157 = vld [vmem:[#allocation4 + $0xdc] sm:$0xf]
    %v158 = vld [vmem:[#allocation4 + $0xe0] sm:$0xf]
    %v159 = vld [vmem:[#allocation4 + $0xe4] sm:$0xf]
    %v160 = vld [vmem:[#allocation4 + $0xe8] sm:$0xf]
    %v161 = vld [vmem:[#allocation4 + $0xec] sm:$0xf]
    %v162 = vld [vmem:[#allocation4 + $0xf0] sm:$0xf]
    %v163 = vld [vmem:[#allocation4 + $0xf4] sm:$0xf]
    %v164 = vld [vmem:[#allocation4 + $0xf8] sm:$0xf]
    %v165 = vld [vmem:[#allocation4 + $0xfc] sm:$0xf]
    %v166 = vld [vmem:[#allocation4 + $0x100] sm:$0xf]
    %v167 = vld [vmem:[#allocation4 + $0x104] sm:$0xf]
    %v168 = vld [vmem:[#allocation4 + $0x108] sm:$0xf]
    %v169 = vld [vmem:[#allocation4 + $0x10c] sm:$0xf]
    %v170 = vld [vmem:[#allocation4 + $0x110] sm:$0xf]
    %v171 = vld [vmem:[#allocation4 + $0x114] sm:$0xf]
    %v172 = vld [vmem:[#allocation4 + $0x118] sm:$0xf]
    %v173 = vld [vmem:[#allocation4 + $0x11c] sm:$0xf]
    %v238 = vunpack.c.l.b16 %v102
    %v239 = vunpack.c.l.b16 %v103
    %v240 = vunpack.c.l.b16 %v104
    %v241 = vunpack.c.l.b16 %v105
    %v242 = vunpack.c.l.b16 %v106
    %v243 = vunpack.c.l.b16 %v107
    %v244 = vunpack.c.l.b16 %v108
    %v245 = vunpack.c.l.b16 %v109
    %v246 = vunpack.c.l.b16 %v110
    %v247 = vunpack.c.l.b16 %v111
    %v248 = vunpack.c.l.b16 %v112
    %v249 = vunpack.c.l.b16 %v113
    %v250 = vunpack.c.l.b16 %v114
    %v251 = vunpack.c.l.b16 %v115
    %v252 = vunpack.c.l.b16 %v116
    %v253 = vunpack.c.l.b16 %v117
    %v254 = vunpack.c.l.b16 %v118
    %v255 = vunpack.c.l.b16 %v119
    %v256 = vunpack.c.l.b16 %v120
    %v257 = vunpack.c.l.b16 %v121
    %v258 = vunpack.c.l.b16 %v122
    %v259 = vunpack.c.l.b16 %v123
    %v260 = vunpack.c.l.b16 %v124
    %v261 = vunpack.c.l.b16 %v125
    %v262 = vunpack.c.l.b16 %v126
    %v263 = vunpack.c.l.b16 %v127
    %v264 = vunpack.c.l.b16 %v128
    %v265 = vunpack.c.l.b16 %v129
    %v266 = vunpack.c.l.b16 %v130
    %v267 = vunpack.c.l.b16 %v131
    %v268 = vunpack.c.l.b16 %v132
    %v269 = vunpack.c.l.b16 %v133
    %v270 = vunpack.c.l.b16 %v138
    %v271 = vunpack.c.l.b16 %v139
    %v272 = vunpack.c.l.b16 %v140
    %v273 = vunpack.c.l.b16 %v141
    %v274 = vunpack.c.l.b16 %v142
    %v275 = vunpack.c.l.b16 %v143
    %v276 = vunpack.c.l.b16 %v144
    %v277 = vunpack.c.l.b16 %v145
    %v278 = vunpack.c.l.b16 %v146
    %v279 = vunpack.c.l.b16 %v147
    %v280 = vunpack.c.l.b16 %v148
    %v281 = vunpack.c.l.b16 %v149
    %v282 = vunpack.c.l.b16 %v150
    %v283 = vunpack.c.l.b16 %v151
    %v284 = vunpack.c.l.b16 %v152
    %v285 = vunpack.c.l.b16 %v153
    %v286 = vunpack.c.l.b16 %v154
    %v287 = vunpack.c.l.b16 %v155
    %v288 = vunpack.c.l.b16 %v156
    %v289 = vunpack.c.l.b16 %v157
    %v290 = vunpack.c.l.b16 %v158
    %v291 = vunpack.c.l.b16 %v159
    %v292 = vunpack.c.l.b16 %v160
    %v293 = vunpack.c.l.b16 %v161
    %v294 = vunpack.c.l.b16 %v162
    %v295 = vunpack.c.l.b16 %v163
    %v296 = vunpack.c.l.b16 %v164
    %v297 = vunpack.c.l.b16 %v165
    %v298 = vunpack.c.l.b16 %v166
    %v299 = vunpack.c.l.b16 %v167
    %v300 = vunpack.c.l.b16 %v168
    %v301 = vunpack.c.l.b16 %v169
    %v302 = vpack.c.b16 %v239, %v238
    %v303 = vpack.c.b16 %v241, %v240
    %v304 = vpack.c.b16 %v243, %v242
    %v305 = vpack.c.b16 %v245, %v244
    %v306 = vpack.c.b16 %v247, %v246
    %v307 = vpack.c.b16 %v249, %v248
    %v308 = vpack.c.b16 %v251, %v250
    %v309 = vpack.c.b16 %v253, %v252
    %v310 = vpack.c.b16 %v255, %v254
    %v311 = vpack.c.b16 %v257, %v256
    %v312 = vpack.c.b16 %v259, %v258
    %v313 = vpack.c.b16 %v261, %v260
    %v314 = vpack.c.b16 %v263, %v262
    %v315 = vpack.c.b16 %v265, %v264
    %v316 = vpack.c.b16 %v267, %v266
    %v317 = vpack.c.b16 %v269, %v268
    %v318 = vpack.c.b16 %v271, %v270
    %v319 = vpack.c.b16 %v273, %v272
    %v320 = vpack.c.b16 %v275, %v274
    %v321 = vpack.c.b16 %v277, %v276
    %v322 = vpack.c.b16 %v279, %v278
    %v323 = vpack.c.b16 %v281, %v280
    %v324 = vpack.c.b16 %v283, %v282
    %v325 = vpack.c.b16 %v285, %v284
    %v326 = vpack.c.b16 %v287, %v286
    %v327 = vpack.c.b16 %v289, %v288
    %v328 = vpack.c.b16 %v291, %v290
    %v329 = vpack.c.b16 %v293, %v292
    %v330 = vpack.c.b16 %v295, %v294
    %v331 = vpack.c.b16 %v297, %v296
    %v332 = vpack.c.b16 %v299, %v298
    %v333 = vpack.c.b16 %v301, %v300
    %v370 = vunpack.c.l.b16 %v134
    %v371 = vunpack.c.l.b16 %v135
    %v372 = vunpack.c.l.b16 %v170
    %v373 = vunpack.c.l.b16 %v171
    %v374 = vpack.c.b16 %v371, %v370
    %v375 = vpack.c.b16 %v373, %v372
    %v382 = vunpack.c.l.b16 %v136
    %v383 = vunpack.c.l.b16 %v137
    %v384 = vunpack.c.l.b16 %v172
    %v385 = vunpack.c.l.b16 %v173
    %v386 = vpack.c.b16 %v383, %v382
    %v387 = vpack.c.b16 %v385, %v384
    %v390 = vld [vmem:[#allocation7] sm:$0xf]
    %v391 = vld [vmem:[#allocation7 + $0x4] sm:$0xf]
    %v392 = vld [vmem:[#allocation7 + $0x8] sm:$0xf]
    %v393 = vld [vmem:[#allocation7 + $0xc] sm:$0xf]
    %v394 = vld [vmem:[#allocation7 + $0x10] sm:$0xf]
    %v395 = vld [vmem:[#allocation7 + $0x14] sm:$0xf]
    %v396 = vld [vmem:[#allocation7 + $0x18] sm:$0xf]
    %v397 = vld [vmem:[#allocation7 + $0x1c] sm:$0xf]
    %v398 = vld [vmem:[#allocation7 + $0x20] sm:$0xf]
    %v399 = vld [vmem:[#allocation7 + $0x24] sm:$0xf]
    %v400 = vld [vmem:[#allocation7 + $0x28] sm:$0xf]
    %v401 = vld [vmem:[#allocation7 + $0x2c] sm:$0xf]
    %v402 = vld [vmem:[#allocation7 + $0x30] sm:$0xf]
    %v403 = vld [vmem:[#allocation7 + $0x34] sm:$0xf]
    %v404 = vld [vmem:[#allocation7 + $0x38] sm:$0xf]
    %v405 = vld [vmem:[#allocation7 + $0x3c] sm:$0xf]
    %v406 = vld [vmem:[#allocation7 + $0x40] sm:$0xf]
    %v407 = vld [vmem:[#allocation7 + $0x44] sm:$0xf]
    %v408 = vld [vmem:[#allocation7 + $0x48] sm:$0xf]
    %v409 = vld [vmem:[#allocation7 + $0x4c] sm:$0xf]
    %v410 = vld [vmem:[#allocation7 + $0x50] sm:$0xf]
    %v411 = vld [vmem:[#allocation7 + $0x54] sm:$0xf]
    %v412 = vld [vmem:[#allocation7 + $0x58] sm:$0xf]
    %v413 = vld [vmem:[#allocation7 + $0x5c] sm:$0xf]
    %v414 = vld [vmem:[#allocation7 + $0x60] sm:$0xf]
    %v415 = vld [vmem:[#allocation7 + $0x64] sm:$0xf]
    %v416 = vld [vmem:[#allocation7 + $0x68] sm:$0xf]
    %v417 = vld [vmem:[#allocation7 + $0x6c] sm:$0xf]
    %v418 = vld [vmem:[#allocation7 + $0x70] sm:$0xf]
    %v419 = vld [vmem:[#allocation7 + $0x74] sm:$0xf]
    %v420 = vld [vmem:[#allocation7 + $0x78] sm:$0xf]
    %v421 = vld [vmem:[#allocation7 + $0x7c] sm:$0xf]
    %v422 = vld [vmem:[#allocation7 + $0x80] sm:$0xf]
    %v423 = vld [vmem:[#allocation7 + $0x84] sm:$0xf]
    %v424 = vld [vmem:[#allocation7 + $0x88] sm:$0xf]
    %v425 = vld [vmem:[#allocation7 + $0x8c] sm:$0xf]
    %v426 = vld [vmem:[#allocation7 + $0x90] sm:$0xf]
    %v427 = vld [vmem:[#allocation7 + $0x94] sm:$0xf]
    %v428 = vld [vmem:[#allocation7 + $0x98] sm:$0xf]
    %v429 = vld [vmem:[#allocation7 + $0x9c] sm:$0xf]
    %v430 = vld [vmem:[#allocation7 + $0xa0] sm:$0xf]
    %v431 = vld [vmem:[#allocation7 + $0xa4] sm:$0xf]
    %v432 = vld [vmem:[#allocation7 + $0xa8] sm:$0xf]
    %v433 = vld [vmem:[#allocation7 + $0xac] sm:$0xf]
    %v434 = vld [vmem:[#allocation7 + $0xb0] sm:$0xf]
    %v435 = vld [vmem:[#allocation7 + $0xb4] sm:$0xf]
    %v436 = vld [vmem:[#allocation7 + $0xb8] sm:$0xf]
    %v437 = vld [vmem:[#allocation7 + $0xbc] sm:$0xf]
    %v486 = vunpack.c.l.b16 %v390
    %v487 = vunpack.c.l.b16 %v391
    %v488 = vunpack.c.l.b16 %v392
    %v489 = vunpack.c.l.b16 %v393
    %v490 = vunpack.c.l.b16 %v394
    %v491 = vunpack.c.l.b16 %v395
    %v492 = vunpack.c.l.b16 %v396
    %v493 = vunpack.c.l.b16 %v397
    %v494 = vunpack.c.l.b16 %v398
    %v495 = vunpack.c.l.b16 %v399
    %v496 = vunpack.c.l.b16 %v400
    %v497 = vunpack.c.l.b16 %v401
    %v498 = vunpack.c.l.b16 %v402
    %v499 = vunpack.c.l.b16 %v403
    %v500 = vunpack.c.l.b16 %v404
    %v501 = vunpack.c.l.b16 %v405
    %v502 = vunpack.c.l.b16 %v406
    %v503 = vunpack.c.l.b16 %v407
    %v504 = vunpack.c.l.b16 %v408
    %v505 = vunpack.c.l.b16 %v409
    %v506 = vunpack.c.l.b16 %v410
    %v507 = vunpack.c.l.b16 %v411
    %v508 = vunpack.c.l.b16 %v412
    %v509 = vunpack.c.l.b16 %v413
    %v510 = vunpack.c.l.b16 %v414
    %v511 = vunpack.c.l.b16 %v415
    %v512 = vunpack.c.l.b16 %v416
    %v513 = vunpack.c.l.b16 %v417
    %v514 = vunpack.c.l.b16 %v418
    %v515 = vunpack.c.l.b16 %v419
    %v516 = vunpack.c.l.b16 %v420
    %v517 = vunpack.c.l.b16 %v421
    %v518 = vunpack.c.l.b16 %v422
    %v519 = vunpack.c.l.b16 %v423
    %v520 = vunpack.c.l.b16 %v424
    %v521 = vunpack.c.l.b16 %v425
    %v522 = vunpack.c.l.b16 %v426
    %v523 = vunpack.c.l.b16 %v427
    %v524 = vunpack.c.l.b16 %v428
    %v525 = vunpack.c.l.b16 %v429
    %v526 = vunpack.c.l.b16 %v430
    %v527 = vunpack.c.l.b16 %v431
    %v528 = vunpack.c.l.b16 %v432
    %v529 = vunpack.c.l.b16 %v433
    %v530 = vunpack.c.l.b16 %v434
    %v531 = vunpack.c.l.b16 %v435
    %v532 = vunpack.c.l.b16 %v436
    %v533 = vunpack.c.l.b16 %v437
    %v534 = vpack.c.b16 %v487, %v486
    %v535 = vpack.c.b16 %v489, %v488
    %v536 = vpack.c.b16 %v491, %v490
    %v537 = vpack.c.b16 %v493, %v492
    %v538 = vpack.c.b16 %v495, %v494
    %v539 = vpack.c.b16 %v497, %v496
    %v540 = vpack.c.b16 %v499, %v498
    %v541 = vpack.c.b16 %v501, %v500
    %v542 = vpack.c.b16 %v503, %v502
    %v543 = vpack.c.b16 %v505, %v504
    %v544 = vpack.c.b16 %v507, %v506
    %v545 = vpack.c.b16 %v509, %v508
    %v546 = vpack.c.b16 %v511, %v510
    %v547 = vpack.c.b16 %v513, %v512
    %v548 = vpack.c.b16 %v515, %v514
    %v549 = vpack.c.b16 %v517, %v516
    %v550 = vpack.c.b16 %v519, %v518
    %v551 = vpack.c.b16 %v521, %v520
    %v552 = vpack.c.b16 %v523, %v522
    %v553 = vpack.c.b16 %v525, %v524
    %v554 = vpack.c.b16 %v527, %v526
    %v555 = vpack.c.b16 %v529, %v528
    %v556 = vpack.c.b16 %v531, %v530
    %v557 = vpack.c.b16 %v533, %v532
    %582 = vmatprep.subr.bf16.mxu0 0
    %583 = vmatpush1.bf16.msra.mxu0 %v534
    %584 = vmatprep.subr.bf16.mxu0 0
    %585 = vmatpush1.bf16.msra.mxu0 %v535
    %586 = vmatprep.subr.bf16.mxu0 0
    %587 = vmatpush1.bf16.msra.mxu0 %v536
    %588 = vmatprep.subr.bf16.mxu0 0
    %589 = vmatpush1.bf16.msra.mxu0 %v537
    %590 = vmatprep.subr.bf16.mxu0 0
    %591 = vmatpush1.bf16.msra.mxu0 %v538
    %592 = vmatprep.subr.bf16.mxu0 0
    %593 = vmatpush1.bf16.msra.mxu0 %v539
    %594 = vmatprep.subr.bf16.mxu0 0
    %595 = vmatpush1.bf16.msra.mxu0 %v540
    %596 = vmatprep.subr.bf16.mxu0 0
    %597 = vmatpush1.bf16.msra.mxu0 %v541
    %598 = vmatprep.subr.bf16.mxu0 0
    %599 = vmatpush1.bf16.msra.mxu0 %v542
    %600 = vmatprep.subr.bf16.mxu0 0
    %601 = vmatpush1.bf16.msra.mxu0 %v543
    %602 = vmatprep.subr.bf16.mxu0 0
    %603 = vmatpush1.bf16.msra.mxu0 %v544
    %604 = vmatprep.subr.bf16.mxu0 0
    %605 = vmatpush1.bf16.msra.mxu0 %v545
    %606 = vmatprep.subr.bf16.mxu0 0
    %607 = vmatpush1.bf16.msra.mxu0 %v546
    %608 = vmatprep.subr.bf16.mxu0 0
    %609 = vmatpush1.bf16.msra.mxu0 %v547
    %610 = vmatprep.subr.bf16.mxu0 0
    %611 = vmatpush1.bf16.msra.mxu0 %v548
    %612 = vmatprep.subr.bf16.mxu0 0
    %613 = vmatpush1.bf16.msra.mxu0 %v549
    %614 = vmatprep.mubr.bf16.mxu0 %v303
    %615 = vmatmul.mubr.bf16.gmra.mrb[0].mxu0 %v302
    %v616 = vpop.f32.mrb[0].mxu0
    %v617 = vadd.f32 0.0, %v616
    %v618 = vpop.f32.mrb[0].mxu0
    %v619 = vpop.f32.mrb[0].mxu0
    %v620 = vadd.f32 0.0, %v619
    %v621 = vpop.f32.mrb[0].mxu0
    %622 = vmatprep.mubr.bf16.mxu0 %v304
    %623 = vmatmul.mubr.bf16.gmra.mrb[0].mxu0 %v303
    %v624 = vpop.f32.mrb[0].mxu0
    %v625 = vadd.f32 0.0, %v624
    %v626 = vpop.f32.mrb[0].mxu0
    %v627 = vpop.f32.mrb[0].mxu0
    %v628 = vadd.f32 0.0, %v627
    %v629 = vpop.f32.mrb[0].mxu0
    %630 = vmatprep.mubr.bf16.mxu0 %v305
    %631 = vmatmul.mubr.bf16.gmra.mrb[0].mxu0 %v304
    %v632 = vpop.f32.mrb[0].mxu0
    %v633 = vadd.f32 0.0, %v632
    %v634 = vpop.f32.mrb[0].mxu0
    %v635 = vpop.f32.mrb[0].mxu0
    %v636 = vadd.f32 0.0, %v635
    %v637 = vpop.f32.mrb[0].mxu0
    %638 = vmatprep.mubr.bf16.mxu0 %v306
    %639 = vmatmul.mubr.bf16.gmra.mrb[0].mxu0 %v305
    %v640 = vpop.f32.mrb[0].mxu0
    %v641 = vadd.f32 0.0, %v640
    %v642 = vpop.f32.mrb[0].mxu0
    %v643 = vpop.f32.mrb[0].mxu0
    %v644 = vadd.f32 0.0, %v643
    %v645 = vpop.f32.mrb[0].mxu0
    %646 = vmatprep.mubr.bf16.mxu0 %v307
    %647 = vmatmul.mubr.bf16.gmra.mrb[0].mxu0 %v306
    %v648 = vpop.f32.mrb[0].mxu0
    %v649 = vadd.f32 0.0, %v648
    %v650 = vpop.f32.mrb[0].mxu0
    %v651 = vpop.f32.mrb[0].mxu0
    %v652 = vadd.f32 0.0, %v651
    %v653 = vpop.f32.mrb[0].mxu0
    %654 = vmatprep.mubr.bf16.mxu0 %v308
    %655 = vmatmul.mubr.bf16.gmra.mrb[0].mxu0 %v307
    %v656 = vpop.f32.mrb[0].mxu0
    %v657 = vadd.f32 0.0, %v656
    %v658 = vpop.f32.mrb[0].mxu0
    %v659 = vpop.f32.mrb[0].mxu0
    %v660 = vadd.f32 0.0, %v659
    %v661 = vpop.f32.mrb[0].mxu0
    %662 = vmatprep.mubr.bf16.mxu0 %v309
    %663 = vmatmul.mubr.bf16.gmra.mrb[0].mxu0 %v308
    %v664 = vpop.f32.mrb[0].mxu0
    %v665 = vadd.f32 0.0, %v664
    %v666 = vpop.f32.mrb[0].mxu0
    %v667 = vpop.f32.mrb[0].mxu0
    %v668 = vadd.f32 0.0, %v667
    %v669 = vpop.f32.mrb[0].mxu0
    %670 = vmatprep.mubr.bf16.mxu0 %v310
    %671 = vmatmul.mubr.bf16.gmra.mrb[0].mxu0 %v309
    %v672 = vpop.f32.mrb[0].mxu0
    %v673 = vadd.f32 0.0, %v672
    %v674 = vpop.f32.mrb[0].mxu0
    %v675 = vpop.f32.mrb[0].mxu0
    %v676 = vadd.f32 0.0, %v675
    %v677 = vpop.f32.mrb[0].mxu0
    %678 = vmatprep.mubr.bf16.mxu0 %v311
    %679 = vmatmul.mubr.bf16.gmra.mrb[0].mxu0 %v310
    %v680 = vpop.f32.mrb[0].mxu0
    %v681 = vadd.f32 0.0, %v680
    %v682 = vpop.f32.mrb[0].mxu0
    %v683 = vpop.f32.mrb[0].mxu0
    %v684 = vadd.f32 0.0, %v683
    %v685 = vpop.f32.mrb[0].mxu0
    %686 = vmatprep.mubr.bf16.mxu0 %v312
    %687 = vmatmul.mubr.bf16.gmra.mrb[0].mxu0 %v311
    %v688 = vpop.f32.mrb[0].mxu0
    %v689 = vadd.f32 0.0, %v688
    %v690 = vpop.f32.mrb[0].mxu0
    %v691 = vpop.f32.mrb[0].mxu0
    %v692 = vadd.f32 0.0, %v691
    %v693 = vpop.f32.mrb[0].mxu0
    %694 = vmatprep.mubr.bf16.mxu0 %v313
    %695 = vmatmul.mubr.bf16.gmra.mrb[0].mxu0 %v312
    %v696 = vpop.f32.mrb[0].mxu0
    %v697 = vadd.f32 0.0, %v696
    %v698 = vpop.f32.mrb[0].mxu0
    %v699 = vpop.f32.mrb[0].mxu0
    %v700 = vadd.f32 0.0, %v699
    %v701 = vpop.f32.mrb[0].mxu0
    %702 = vmatprep.mubr.bf16.mxu0 %v314
    %703 = vmatmul.mubr.bf16.gmra.mrb[0].mxu0 %v313
    %v704 = vpop.f32.mrb[0].mxu0
    %v705 = vadd.f32 0.0, %v704
    %v706 = vpop.f32.mrb[0].mxu0
    %v707 = vpop.f32.mrb[0].mxu0
    %v708 = vadd.f32 0.0, %v707
    %v709 = vpop.f32.mrb[0].mxu0
    %710 = vmatprep.mubr.bf16.mxu0 %v315
    %711 = vmatmul.mubr.bf16.gmra.mrb[0].mxu0 %v314
    %v712 = vpop.f32.mrb[0].mxu0
    %v713 = vadd.f32 0.0, %v712
    %v714 = vpop.f32.mrb[0].mxu0
    %v715 = vpop.f32.mrb[0].mxu0
    %v716 = vadd.f32 0.0, %v715
    %v717 = vpop.f32.mrb[0].mxu0
    %718 = vmatprep.mubr.bf16.mxu0 %v316
    %719 = vmatmul.mubr.bf16.gmra.mrb[0].mxu0 %v315
    %v720 = vpop.f32.mrb[0].mxu0
    %v721 = vadd.f32 0.0, %v720
    %v722 = vpop.f32.mrb[0].mxu0
    %v723 = vpop.f32.mrb[0].mxu0
    %v724 = vadd.f32 0.0, %v723
    %v725 = vpop.f32.mrb[0].mxu0
    %726 = vmatprep.mubr.bf16.mxu0 %v317
    %727 = vmatmul.mubr.bf16.gmra.mrb[0].mxu0 %v316
    %v728 = vpop.f32.mrb[0].mxu0
    %v729 = vadd.f32 0.0, %v728
    %v730 = vpop.f32.mrb[0].mxu0
    %v731 = vpop.f32.mrb[0].mxu0
    %v732 = vadd.f32 0.0, %v731
    %v733 = vpop.f32.mrb[0].mxu0
    %734 = vmatprep.mubr.bf16.mxu0 %v374
    %735 = vmatmul.mubr.bf16.gmra.mrb[0].mxu0 %v317
    %v736 = vpop.f32.mrb[0].mxu0
    %v737 = vadd.f32 0.0, %v736
    %v738 = vpop.f32.mrb[0].mxu0
    %v739 = vpop.f32.mrb[0].mxu0
    %v740 = vadd.f32 0.0, %v739
    %v741 = vpop.f32.mrb[0].mxu0
    %742 = vmatprep.mubr.bf16.mxu0 %v319
    %743 = vmatmul.mubr.bf16.gmra.mrb[0].mxu0 %v318
    %v744 = vpop.f32.mrb[0].mxu0
    %v745 = vadd.f32 0.0, %v744
    %v746 = vpop.f32.mrb[0].mxu0
    %v747 = vpop.f32.mrb[0].mxu0
    %v748 = vadd.f32 0.0, %v747
    %v749 = vpop.f32.mrb[0].mxu0
    %750 = vmatprep.mubr.bf16.mxu0 %v320
    %751 = vmatmul.mubr.bf16.gmra.mrb[0].mxu0 %v319
    %v752 = vpop.f32.mrb[0].mxu0
    %v753 = vadd.f32 0.0, %v752
    %v754 = vpop.f32.mrb[0].mxu0
    %v755 = vpop.f32.mrb[0].mxu0
    %v756 = vadd.f32 0.0, %v755
    %v757 = vpop.f32.mrb[0].mxu0
    %758 = vmatprep.mubr.bf16.mxu0 %v321
    %759 = vmatmul.mubr.bf16.gmra.mrb[0].mxu0 %v320
    %v760 = vpop.f32.mrb[0].mxu0
    %v761 = vadd.f32 0.0, %v760
    %v762 = vpop.f32.mrb[0].mxu0
    %v763 = vpop.f32.mrb[0].mxu0
    %v764 = vadd.f32 0.0, %v763
    %v765 = vpop.f32.mrb[0].mxu0
    %766 = vmatprep.mubr.bf16.mxu0 %v322
    %767 = vmatmul.mubr.bf16.gmra.mrb[0].mxu0 %v321
    %v768 = vpop.f32.mrb[0].mxu0
    %v769 = vadd.f32 0.0, %v768
    %v770 = vpop.f32.mrb[0].mxu0
    %v771 = vpop.f32.mrb[0].mxu0
    %v772 = vadd.f32 0.0, %v771
    %v773 = vpop.f32.mrb[0].mxu0
    %774 = vmatprep.mubr.bf16.mxu0 %v323
    %775 = vmatmul.mubr.bf16.gmra.mrb[0].mxu0 %v322
    %v776 = vpop.f32.mrb[0].mxu0
    %v777 = vadd.f32 0.0, %v776
    %v778 = vpop.f32.mrb[0].mxu0
    %v779 = vpop.f32.mrb[0].mxu0
    %v780 = vadd.f32 0.0, %v779
    %v781 = vpop.f32.mrb[0].mxu0
    %782 = vmatprep.mubr.bf16.mxu0 %v324
    %783 = vmatmul.mubr.bf16.gmra.mrb[0].mxu0 %v323
    %v784 = vpop.f32.mrb[0].mxu0
    %v785 = vadd.f32 0.0, %v784
    %v786 = vpop.f32.mrb[0].mxu0
    %v787 = vpop.f32.mrb[0].mxu0
    %v788 = vadd.f32 0.0, %v787
    %v789 = vpop.f32.mrb[0].mxu0
    %790 = vmatprep.mubr.bf16.mxu0 %v325
    %791 = vmatmul.mubr.bf16.gmra.mrb[0].mxu0 %v324
    %v792 = vpop.f32.mrb[0].mxu0
    %v793 = vadd.f32 0.0, %v792
    %v794 = vpop.f32.mrb[0].mxu0
    %v795 = vpop.f32.mrb[0].mxu0
    %v796 = vadd.f32 0.0, %v795
    %v797 = vpop.f32.mrb[0].mxu0
    %798 = vmatprep.mubr.bf16.mxu0 %v326
    %799 = vmatmul.mubr.bf16.gmra.mrb[0].mxu0 %v325
    %v800 = vpop.f32.mrb[0].mxu0
    %v801 = vadd.f32 0.0, %v800
    %v802 = vpop.f32.mrb[0].mxu0
    %v803 = vpop.f32.mrb[0].mxu0
    %v804 = vadd.f32 0.0, %v803
    %v805 = vpop.f32.mrb[0].mxu0
    %806 = vmatprep.mubr.bf16.mxu0 %v327
    %807 = vmatmul.mubr.bf16.gmra.mrb[0].mxu0 %v326
    %v808 = vpop.f32.mrb[0].mxu0
    %v809 = vadd.f32 0.0, %v808
    %v810 = vpop.f32.mrb[0].mxu0
    %v811 = vpop.f32.mrb[0].mxu0
    %v812 = vadd.f32 0.0, %v811
    %v813 = vpop.f32.mrb[0].mxu0
    %814 = vmatprep.mubr.bf16.mxu0 %v328
    %815 = vmatmul.mubr.bf16.gmra.mrb[0].mxu0 %v327
    %v816 = vpop.f32.mrb[0].mxu0
    %v817 = vadd.f32 0.0, %v816
    %v818 = vpop.f32.mrb[0].mxu0
    %v819 = vpop.f32.mrb[0].mxu0
    %v820 = vadd.f32 0.0, %v819
    %v821 = vpop.f32.mrb[0].mxu0
    %822 = vmatprep.mubr.bf16.mxu0 %v329
    %823 = vmatmul.mubr.bf16.gmra.mrb[0].mxu0 %v328
    %v824 = vpop.f32.mrb[0].mxu0
    %v825 = vadd.f32 0.0, %v824
    %v826 = vpop.f32.mrb[0].mxu0
    %v827 = vpop.f32.mrb[0].mxu0
    %v828 = vadd.f32 0.0, %v827
    %v829 = vpop.f32.mrb[0].mxu0
    %830 = vmatprep.mubr.bf16.mxu0 %v330
    %831 = vmatmul.mubr.bf16.gmra.mrb[0].mxu0 %v329
    %v832 = vpop.f32.mrb[0].mxu0
    %v833 = vadd.f32 0.0, %v832
    %v834 = vpop.f32.mrb[0].mxu0
    %v835 = vpop.f32.mrb[0].mxu0
    %v836 = vadd.f32 0.0, %v835
    %v837 = vpop.f32.mrb[0].mxu0
    %838 = vmatprep.mubr.bf16.mxu0 %v331
    %839 = vmatmul.mubr.bf16.gmra.mrb[0].mxu0 %v330
    %v840 = vpop.f32.mrb[0].mxu0
    %v841 = vadd.f32 0.0, %v840
    %v842 = vpop.f32.mrb[0].mxu0
    %v843 = vpop.f32.mrb[0].mxu0
    %v844 = vadd.f32 0.0, %v843
    %v845 = vpop.f32.mrb[0].mxu0
    %846 = vmatprep.mubr.bf16.mxu0 %v332
    %847 = vmatmul.mubr.bf16.gmra.mrb[0].mxu0 %v331
    %v848 = vpop.f32.mrb[0].mxu0
    %v849 = vadd.f32 0.0, %v848
    %v850 = vpop.f32.mrb[0].mxu0
    %v851 = vpop.f32.mrb[0].mxu0
    %v852 = vadd.f32 0.0, %v851
    %v853 = vpop.f32.mrb[0].mxu0
    %854 = vmatprep.mubr.bf16.mxu0 %v333
    %855 = vmatmul.mubr.bf16.gmra.mrb[0].mxu0 %v332
    %v856 = vpop.f32.mrb[0].mxu0
    %v857 = vadd.f32 0.0, %v856
    %v858 = vpop.f32.mrb[0].mxu0
    %v859 = vpop.f32.mrb[0].mxu0
    %v860 = vadd.f32 0.0, %v859
    %v861 = vpop.f32.mrb[0].mxu0
    %862 = vmatprep.mubr.bf16.mxu0 %v375
    %863 = vmatmul.mubr.bf16.gmra.mrb[0].mxu0 %v333
    %v864 = vpop.f32.mrb[0].mxu0
    %v865 = vadd.f32 0.0, %v864
    %v866 = vpop.f32.mrb[0].mxu0
    %v867 = vpop.f32.mrb[0].mxu0
    %v868 = vadd.f32 0.0, %v867
    %v869 = vpop.f32.mrb[0].mxu0
    %870 = vdwg.mxu0
    %871 = vmatprep.subr.bf16.mxu0 0
    %872 = vmatpush1.bf16.msra.mxu0 %v550
    %873 = vmatprep.subr.bf16.mxu0 0
    %874 = vmatpush1.bf16.msra.mxu0 %v551
    %875 = vmatprep.subr.bf16.mxu0 0
    %876 = vmatpush1.bf16.msra.mxu0 %v552
    %877 = vmatprep.subr.bf16.mxu0 0
    %878 = vmatpush1.bf16.msra.mxu0 %v553
    %879 = vmatprep.subr.bf16.mxu0 0
    %880 = vmatpush1.bf16.msra.mxu0 %v554
    %881 = vmatprep.subr.bf16.mxu0 0
    %882 = vmatpush1.bf16.msra.mxu0 %v555
    %883 = vmatprep.subr.bf16.mxu0 0
    %884 = vmatpush1.bf16.msra.mxu0 %v556
    %885 = vmatprep.subr.bf16.mxu0 0
    %886 = vmatpush1.bf16.msra.mxu0 %v557
    %887 = vmatprep.subr.bf16.mxu0 0
    %888 = vmatpush1.bf16.msra.mxu0 0
    %889 = vmatprep.subr.bf16.mxu0 0
    %890 = vmatpush1.bf16.msra.mxu0 0
    %891 = vmatprep.subr.bf16.mxu0 0
    %892 = vmatpush1.bf16.msra.mxu0 0
    %893 = vmatprep.subr.bf16.mxu0 0
    %894 = vmatpush1.bf16.msra.mxu0 0
    %895 = vmatprep.subr.bf16.mxu0 0
    %896 = vmatpush1.bf16.msra.mxu0 0
    %897 = vmatprep.subr.bf16.mxu0 0
    %898 = vmatpush1.bf16.msra.mxu0 0
    %899 = vmatprep.subr.bf16.mxu0 0
    %900 = vmatpush1.bf16.msra.mxu0 0
    %901 = vmatprep.subr.bf16.mxu0 0
    %902 = vmatpush1.bf16.msra.mxu0 0
    %903 = vmatprep.mubr.bf16.mxu0 0
    %904 = vmatmul.mubr.bf16.gmra.mrb[0].mxu0 %v304
    %v905 = vpop.f32.mrb[0].mxu0
    %v906 = vadd.f32 %v617, %v905
    %v907 = vpop.f32.mrb[0].mxu0
    %v908 = vpop.f32.mrb[0].mxu0
    %v909 = vadd.f32 %v620, %v908
    %v910 = vpop.f32.mrb[0].mxu0
    %911 = vmatprep.mubr.bf16.mxu0 0
    %912 = vmatmul.mubr.bf16.gmra.mrb[0].mxu0 %v305
    %v913 = vpop.f32.mrb[0].mxu0
    %v914 = vadd.f32 %v625, %v913
    %v915 = vpop.f32.mrb[0].mxu0
    %v916 = vpop.f32.mrb[0].mxu0
    %v917 = vadd.f32 %v628, %v916
    %v918 = vpop.f32.mrb[0].mxu0
    %919 = vmatprep.mubr.bf16.mxu0 0
    %920 = vmatmul.mubr.bf16.gmra.mrb[0].mxu0 %v306
    %v921 = vpop.f32.mrb[0].mxu0
    %v922 = vadd.f32 %v633, %v921
    %v923 = vpop.f32.mrb[0].mxu0
    %v924 = vpop.f32.mrb[0].mxu0
    %v925 = vadd.f32 %v636, %v924
    %v926 = vpop.f32.mrb[0].mxu0
    %927 = vmatprep.mubr.bf16.mxu0 0
    %928 = vmatmul.mubr.bf16.gmra.mrb[0].mxu0 %v307
    %v929 = vpop.f32.mrb[0].mxu0
    %v930 = vadd.f32 %v641, %v929
    %v931 = vpop.f32.mrb[0].mxu0
    %v932 = vpop.f32.mrb[0].mxu0
    %v933 = vadd.f32 %v644, %v932
    %v934 = vpop.f32.mrb[0].mxu0
    %935 = vmatprep.mubr.bf16.mxu0 0
    %936 = vmatmul.mubr.bf16.gmra.mrb[0].mxu0 %v308
    %v937 = vpop.f32.mrb[0].mxu0
    %v938 = vadd.f32 %v649, %v937
    %v939 = vpop.f32.mrb[0].mxu0
    %v940 = vpop.f32.mrb[0].mxu0
    %v941 = vadd.f32 %v652, %v940
    %v942 = vpop.f32.mrb[0].mxu0
    %943 = vmatprep.mubr.bf16.mxu0 0
    %944 = vmatmul.mubr.bf16.gmra.mrb[0].mxu0 %v309
    %v945 = vpop.f32.mrb[0].mxu0
    %v946 = vadd.f32 %v657, %v945
    %v947 = vpop.f32.mrb[0].mxu0
    %v948 = vpop.f32.mrb[0].mxu0
    %v949 = vadd.f32 %v660, %v948
    %v950 = vpop.f32.mrb[0].mxu0
    %951 = vmatprep.mubr.bf16.mxu0 0
    %952 = vmatmul.mubr.bf16.gmra.mrb[0].mxu0 %v310
    %v953 = vpop.f32.mrb[0].mxu0
    %v954 = vadd.f32 %v665, %v953
    %v955 = vpop.f32.mrb[0].mxu0
    %v956 = vpop.f32.mrb[0].mxu0
    %v957 = vadd.f32 %v668, %v956
    %v958 = vpop.f32.mrb[0].mxu0
    %959 = vmatprep.mubr.bf16.mxu0 0
    %960 = vmatmul.mubr.bf16.gmra.mrb[0].mxu0 %v311
    %v961 = vpop.f32.mrb[0].mxu0
    %v962 = vadd.f32 %v673, %v961
    %v963 = vpop.f32.mrb[0].mxu0
    %v964 = vpop.f32.mrb[0].mxu0
    %v965 = vadd.f32 %v676, %v964
    %v966 = vpop.f32.mrb[0].mxu0
    %967 = vmatprep.mubr.bf16.mxu0 0
    %968 = vmatmul.mubr.bf16.gmra.mrb[0].mxu0 %v312
    %v969 = vpop.f32.mrb[0].mxu0
    %v970 = vadd.f32 %v681, %v969
    %v971 = vpop.f32.mrb[0].mxu0
    %v972 = vpop.f32.mrb[0].mxu0
    %v973 = vadd.f32 %v684, %v972
    %v974 = vpop.f32.mrb[0].mxu0
    %975 = vmatprep.mubr.bf16.mxu0 0
    %976 = vmatmul.mubr.bf16.gmra.mrb[0].mxu0 %v313
    %v977 = vpop.f32.mrb[0].mxu0
    %v978 = vadd.f32 %v689, %v977
    %v979 = vpop.f32.mrb[0].mxu0
    %v980 = vpop.f32.mrb[0].mxu0
    %v981 = vadd.f32 %v692, %v980
    %v982 = vpop.f32.mrb[0].mxu0
    %983 = vmatprep.mubr.bf16.mxu0 0
    %984 = vmatmul.mubr.bf16.gmra.mrb[0].mxu0 %v314
    %v985 = vpop.f32.mrb[0].mxu0
    %v986 = vadd.f32 %v697, %v985
    %v987 = vpop.f32.mrb[0].mxu0
    %v988 = vpop.f32.mrb[0].mxu0
    %v989 = vadd.f32 %v700, %v988
    %v990 = vpop.f32.mrb[0].mxu0
    %991 = vmatprep.mubr.bf16.mxu0 0
    %992 = vmatmul.mubr.bf16.gmra.mrb[0].mxu0 %v315
    %v993 = vpop.f32.mrb[0].mxu0
    %v994 = vadd.f32 %v705, %v993
    %v995 = vpop.f32.mrb[0].mxu0
    %v996 = vpop.f32.mrb[0].mxu0
    %v997 = vadd.f32 %v708, %v996
    %v998 = vpop.f32.mrb[0].mxu0
    %999 = vmatprep.mubr.bf16.mxu0 0
    %1000 = vmatmul.mubr.bf16.gmra.mrb[0].mxu0 %v316
    %v1001 = vpop.f32.mrb[0].mxu0
    %v1002 = vadd.f32 %v713, %v1001
    %v1003 = vpop.f32.mrb[0].mxu0
    %v1004 = vpop.f32.mrb[0].mxu0
    %v1005 = vadd.f32 %v716, %v1004
    %v1006 = vpop.f32.mrb[0].mxu0
    %1007 = vmatprep.mubr.bf16.mxu0 0
    %1008 = vmatmul.mubr.bf16.gmra.mrb[0].mxu0 %v317
    %v1009 = vpop.f32.mrb[0].mxu0
    %v1010 = vadd.f32 %v721, %v1009
    %v1011 = vpop.f32.mrb[0].mxu0
    %v1012 = vpop.f32.mrb[0].mxu0
    %v1013 = vadd.f32 %v724, %v1012
    %v1014 = vpop.f32.mrb[0].mxu0
    %1015 = vmatprep.mubr.bf16.mxu0 0
    %1016 = vmatmul.mubr.bf16.gmra.mrb[0].mxu0 %v374
    %v1017 = vpop.f32.mrb[0].mxu0
    %v1018 = vadd.f32 %v729, %v1017
    %v1019 = vpop.f32.mrb[0].mxu0
    %v1020 = vpop.f32.mrb[0].mxu0
    %v1021 = vadd.f32 %v732, %v1020
    %v1022 = vpop.f32.mrb[0].mxu0
    %1023 = vmatprep.mubr.bf16.mxu0 0
    %1024 = vmatmul.mubr.bf16.gmra.mrb[0].mxu0 %v386
    %v1025 = vpop.f32.mrb[0].mxu0
    %v1026 = vadd.f32 %v737, %v1025
    %v1027 = vpop.f32.mrb[0].mxu0
    %v1028 = vpop.f32.mrb[0].mxu0
    %v1029 = vadd.f32 %v740, %v1028
    %v1030 = vpop.f32.mrb[0].mxu0
    %1031 = vmatprep.mubr.bf16.mxu0 0
    %1032 = vmatmul.mubr.bf16.gmra.mrb[0].mxu0 %v320
    %v1033 = vpop.f32.mrb[0].mxu0
    %v1034 = vadd.f32 %v745, %v1033
    %v1035 = vpop.f32.mrb[0].mxu0
    %v1036 = vpop.f32.mrb[0].mxu0
    %v1037 = vadd.f32 %v748, %v1036
    %v1038 = vpop.f32.mrb[0].mxu0
    %1039 = vmatprep.mubr.bf16.mxu0 0
    %1040 = vmatmul.mubr.bf16.gmra.mrb[0].mxu0 %v321
    %v1041 = vpop.f32.mrb[0].mxu0
    %v1042 = vadd.f32 %v753, %v1041
    %v1043 = vpop.f32.mrb[0].mxu0
    %v1044 = vpop.f32.mrb[0].mxu0
    %v1045 = vadd.f32 %v756, %v1044
    %v1046 = vpop.f32.mrb[0].mxu0
    %1047 = vmatprep.mubr.bf16.mxu0 0
    %1048 = vmatmul.mubr.bf16.gmra.mrb[0].mxu0 %v322
    %v1049 = vpop.f32.mrb[0].mxu0
    %v1050 = vadd.f32 %v761, %v1049
    %v1051 = vpop.f32.mrb[0].mxu0
    %v1052 = vpop.f32.mrb[0].mxu0
    %v1053 = vadd.f32 %v764, %v1052
    %v1054 = vpop.f32.mrb[0].mxu0
    %1055 = vmatprep.mubr.bf16.mxu0 0
    %1056 = vmatmul.mubr.bf16.gmra.mrb[0].mxu0 %v323
    %v1057 = vpop.f32.mrb[0].mxu0
    %v1058 = vadd.f32 %v769, %v1057
    %v1059 = vpop.f32.mrb[0].mxu0
    %v1060 = vpop.f32.mrb[0].mxu0
    %v1061 = vadd.f32 %v772, %v1060
    %v1062 = vpop.f32.mrb[0].mxu0
    %1063 = vmatprep.mubr.bf16.mxu0 0
    %1064 = vmatmul.mubr.bf16.gmra.mrb[0].mxu0 %v324
    %v1065 = vpop.f32.mrb[0].mxu0
    %v1066 = vadd.f32 %v777, %v1065
    %v1067 = vpop.f32.mrb[0].mxu0
    %v1068 = vpop.f32.mrb[0].mxu0
    %v1069 = vadd.f32 %v780, %v1068
    %v1070 = vpop.f32.mrb[0].mxu0
    %1071 = vmatprep.mubr.bf16.mxu0 0
    %1072 = vmatmul.mubr.bf16.gmra.mrb[0].mxu0 %v325
    %v1073 = vpop.f32.mrb[0].mxu0
    %v1074 = vadd.f32 %v785, %v1073
    %v1075 = vpop.f32.mrb[0].mxu0
    %v1076 = vpop.f32.mrb[0].mxu0
    %v1077 = vadd.f32 %v788, %v1076
    %v1078 = vpop.f32.mrb[0].mxu0
    %1079 = vmatprep.mubr.bf16.mxu0 0
    %1080 = vmatmul.mubr.bf16.gmra.mrb[0].mxu0 %v326
    %v1081 = vpop.f32.mrb[0].mxu0
    %v1082 = vadd.f32 %v793, %v1081
    %v1083 = vpop.f32.mrb[0].mxu0
    %v1084 = vpop.f32.mrb[0].mxu0
    %v1085 = vadd.f32 %v796, %v1084
    %v1086 = vpop.f32.mrb[0].mxu0
    %1087 = vmatprep.mubr.bf16.mxu0 0
    %1088 = vmatmul.mubr.bf16.gmra.mrb[0].mxu0 %v327
    %v1089 = vpop.f32.mrb[0].mxu0
    %v1090 = vadd.f32 %v801, %v1089
    %v1091 = vpop.f32.mrb[0].mxu0
    %v1092 = vpop.f32.mrb[0].mxu0
    %v1093 = vadd.f32 %v804, %v1092
    %v1094 = vpop.f32.mrb[0].mxu0
    %1095 = vmatprep.mubr.bf16.mxu0 0
    %1096 = vmatmul.mubr.bf16.gmra.mrb[0].mxu0 %v328
    %v1097 = vpop.f32.mrb[0].mxu0
    %v1098 = vadd.f32 %v809, %v1097
    %v1099 = vpop.f32.mrb[0].mxu0
    %v1100 = vpop.f32.mrb[0].mxu0
    %v1101 = vadd.f32 %v812, %v1100
    %v1102 = vpop.f32.mrb[0].mxu0
    %1103 = vmatprep.mubr.bf16.mxu0 0
    %1104 = vmatmul.mubr.bf16.gmra.mrb[0].mxu0 %v329
    %v1105 = vpop.f32.mrb[0].mxu0
    %v1106 = vadd.f32 %v817, %v1105
    %v1107 = vpop.f32.mrb[0].mxu0
    %v1108 = vpop.f32.mrb[0].mxu0
    %v1109 = vadd.f32 %v820, %v1108
    %v1110 = vpop.f32.mrb[0].mxu0
    %1111 = vmatprep.mubr.bf16.mxu0 0
    %1112 = vmatmul.mubr.bf16.gmra.mrb[0].mxu0 %v330
    %v1113 = vpop.f32.mrb[0].mxu0
    %v1114 = vadd.f32 %v825, %v1113
    %v1115 = vpop.f32.mrb[0].mxu0
    %v1116 = vpop.f32.mrb[0].mxu0
    %v1117 = vadd.f32 %v828, %v1116
    %v1118 = vpop.f32.mrb[0].mxu0
    %1119 = vmatprep.mubr.bf16.mxu0 0
    %1120 = vmatmul.mubr.bf16.gmra.mrb[0].mxu0 %v331
    %v1121 = vpop.f32.mrb[0].mxu0
    %v1122 = vadd.f32 %v833, %v1121
    %v1123 = vpop.f32.mrb[0].mxu0
    %v1124 = vpop.f32.mrb[0].mxu0
    %v1125 = vadd.f32 %v836, %v1124
    %v1126 = vpop.f32.mrb[0].mxu0
    %1127 = vmatprep.mubr.bf16.mxu0 0
    %1128 = vmatmul.mubr.bf16.gmra.mrb[0].mxu0 %v332
    %v1129 = vpop.f32.mrb[0].mxu0
    %v1130 = vadd.f32 %v841, %v1129
    %v1131 = vpop.f32.mrb[0].mxu0
    %v1132 = vpop.f32.mrb[0].mxu0
    %v1133 = vadd.f32 %v844, %v1132
    %v1134 = vpop.f32.mrb[0].mxu0
    %1135 = vmatprep.mubr.bf16.mxu0 0
    %1136 = vmatmul.mubr.bf16.gmra.mrb[0].mxu0 %v333
    %v1137 = vpop.f32.mrb[0].mxu0
    %v1138 = vadd.f32 %v849, %v1137
    %v1139 = vpop.f32.mrb[0].mxu0
    %v1140 = vpop.f32.mrb[0].mxu0
    %v1141 = vadd.f32 %v852, %v1140
    %v1142 = vpop.f32.mrb[0].mxu0
    %1143 = vmatprep.mubr.bf16.mxu0 0
    %1144 = vmatmul.mubr.bf16.gmra.mrb[0].mxu0 %v375
    %v1145 = vpop.f32.mrb[0].mxu0
    %v1146 = vadd.f32 %v857, %v1145
    %v1147 = vpop.f32.mrb[0].mxu0
    %v1148 = vpop.f32.mrb[0].mxu0
    %v1149 = vadd.f32 %v860, %v1148
    %v1150 = vpop.f32.mrb[0].mxu0
    %1151 = vmatprep.mubr.bf16.mxu0 0
    %1152 = vmatmul.mubr.bf16.gmra.mrb[0].mxu0 %v387
    %v1153 = vpop.f32.mrb[0].mxu0
    %v1154 = vadd.f32 %v865, %v1153
    %v1155 = vpop.f32.mrb[0].mxu0
    %v1156 = vpop.f32.mrb[0].mxu0
    %v1157 = vadd.f32 %v868, %v1156
    %v1158 = vpop.f32.mrb[0].mxu0
    %1159 = vdwg.mxu0
    %v1160 = vadd.f32 %v906, %v909
    %v1161 = vadd.f32 %v1160, %v914
    %v1162 = vadd.f32 %v1161, %v917
    %v1163 = vadd.f32 %v1162, %v922
    %v1164 = vadd.f32 %v1163, %v925
    %v1165 = vadd.f32 %v1164, %v930
    %v1166 = vadd.f32 %v1165, %v933
    %v1167 = vadd.f32 %v1166, %v938
    %v1168 = vadd.f32 %v1167, %v941
    %v1169 = vadd.f32 %v1168, %v946
    %v1170 = vadd.f32 %v1169, %v949
    %v1171 = vadd.f32 %v1170, %v954
    %v1172 = vadd.f32 %v1171, %v957
    %v1173 = vadd.f32 %v1172, %v962
    %v1174 = vadd.f32 %v1173, %v965
    %v1175 = vadd.f32 %v1174, %v970
    %v1176 = vadd.f32 %v1175, %v973
    %v1177 = vadd.f32 %v1176, %v978
    %v1178 = vadd.f32 %v1177, %v981
    %v1179 = vadd.f32 %v1178, %v986
    %v1180 = vadd.f32 %v1179, %v989
    %v1181 = vadd.f32 %v1180, %v994
    %v1182 = vadd.f32 %v1181, %v997
    %v1183 = vadd.f32 %v1182, %v1002
    %v1184 = vadd.f32 %v1183, %v1005
    %v1185 = vadd.f32 %v1184, %v1010
    %v1186 = vadd.f32 %v1185, %v1013
    %v1187 = vadd.f32 %v1186, %v1018
    %v1188 = vadd.f32 %v1187, %v1021
    %v1189 = vadd.f32 %v1188, %v1026
    %v1190 = vadd.f32 %v1189, %v1029
    %v1191 = vadd.f32 %v1190, %v1034
    %v1192 = vadd.f32 %v1191, %v1037
    %v1193 = vadd.f32 %v1192, %v1042
    %v1194 = vadd.f32 %v1193, %v1045
    %v1195 = vadd.f32 %v1194, %v1050
    %v1196 = vadd.f32 %v1195, %v1053
    %v1197 = vadd.f32 %v1196, %v1058
    %v1198 = vadd.f32 %v1197, %v1061
    %v1199 = vadd.f32 %v1198, %v1066
    %v1200 = vadd.f32 %v1199, %v1069
    %v1201 = vadd.f32 %v1200, %v1074
    %v1202 = vadd.f32 %v1201, %v1077
    %v1203 = vadd.f32 %v1202, %v1082
    %v1204 = vadd.f32 %v1203, %v1085
    %v1205 = vadd.f32 %v1204, %v1090
    %v1206 = vadd.f32 %v1205, %v1093
    %v1207 = vadd.f32 %v1206, %v1098
    %v1208 = vadd.f32 %v1207, %v1101
    %v1209 = vadd.f32 %v1208, %v1106
    %v1210 = vadd.f32 %v1209, %v1109
    %v1211 = vadd.f32 %v1210, %v1114
    %v1212 = vadd.f32 %v1211, %v1117
    %v1213 = vadd.f32 %v1212, %v1122
    %v1214 = vadd.f32 %v1213, %v1125
    %v1215 = vadd.f32 %v1214, %v1130
    %v1216 = vadd.f32 %v1215, %v1133
    %v1217 = vadd.f32 %v1216, %v1138
    %v1218 = vadd.f32 %v1217, %v1141
    %v1219 = vadd.f32 %v1218, %v1146
    %v1220 = vadd.f32 %v1219, %v1149
    %v1221 = vadd.f32 %v1220, %v1154
    %v1222 = vadd.f32 %v1221, %v1157
    %v1223 = vrot.slane %v1222, 4
    %v1224 = vadd.f32 %v1222, %v1223
    %v1225 = vrot.slane %v1224, 2
    %v1226 = vadd.f32 %v1224, %v1225
    %v1227 = vrot.slane %v1226, 1
    %v1228 = vadd.f32 %v1226, %v1227
    %v1229 = vmul.f32 %v1228, 0.001953125
    %v1230 = vmul.f32 %v906, %v906
    %v1231 = vmul.f32 %v909, %v909
    %v1232 = vmul.f32 %v914, %v914
    %v1233 = vmul.f32 %v917, %v917
    %v1234 = vmul.f32 %v922, %v922
    %v1235 = vmul.f32 %v925, %v925
    %v1236 = vmul.f32 %v930, %v930
    %v1237 = vmul.f32 %v933, %v933
    %v1238 = vmul.f32 %v938, %v938
    %v1239 = vmul.f32 %v941, %v941
    %v1240 = vmul.f32 %v946, %v946
    %v1241 = vmul.f32 %v949, %v949
    %v1242 = vmul.f32 %v954, %v954
    %v1243 = vmul.f32 %v957, %v957
    %v1244 = vmul.f32 %v962, %v962
    %v1245 = vmul.f32 %v965, %v965
    %v1246 = vmul.f32 %v970, %v970
    %v1247 = vmul.f32 %v973, %v973
    %v1248 = vmul.f32 %v978, %v978
    %v1249 = vmul.f32 %v981, %v981
    %v1250 = vmul.f32 %v986, %v986
    %v1251 = vmul.f32 %v989, %v989
    %v1252 = vmul.f32 %v994, %v994
    %v1253 = vmul.f32 %v997, %v997
    %v1254 = vmul.f32 %v1002, %v1002
    %v1255 = vmul.f32 %v1005, %v1005
    %v1256 = vmul.f32 %v1010, %v1010
    %v1257 = vmul.f32 %v1013, %v1013
    %v1258 = vmul.f32 %v1018, %v1018
    %v1259 = vmul.f32 %v1021, %v1021
    %v1260 = vmul.f32 %v1026, %v1026
    %v1261 = vmul.f32 %v1029, %v1029
    %v1262 = vmul.f32 %v1034, %v1034
    %v1263 = vmul.f32 %v1037, %v1037
    %v1264 = vmul.f32 %v1042, %v1042
    %v1265 = vmul.f32 %v1045, %v1045
    %v1266 = vmul.f32 %v1050, %v1050
    %v1267 = vmul.f32 %v1053, %v1053
    %v1268 = vmul.f32 %v1058, %v1058
    %v1269 = vmul.f32 %v1061, %v1061
    %v1270 = vmul.f32 %v1066, %v1066
    %v1271 = vmul.f32 %v1069, %v1069
    %v1272 = vmul.f32 %v1074, %v1074
    %v1273 = vmul.f32 %v1077, %v1077
    %v1274 = vmul.f32 %v1082, %v1082
    %v1275 = vmul.f32 %v1085, %v1085
    %v1276 = vmul.f32 %v1090, %v1090
    %v1277 = vmul.f32 %v1093, %v1093
    %v1278 = vmul.f32 %v1098, %v1098
    %v1279 = vmul.f32 %v1101, %v1101
    %v1280 = vmul.f32 %v1106, %v1106
    %v1281 = vmul.f32 %v1109, %v1109
    %v1282 = vmul.f32 %v1114, %v1114
    %v1283 = vmul.f32 %v1117, %v1117
    %v1284 = vmul.f32 %v1122, %v1122
    %v1285 = vmul.f32 %v1125, %v1125
    %v1286 = vmul.f32 %v1130, %v1130
    %v1287 = vmul.f32 %v1133, %v1133
    %v1288 = vmul.f32 %v1138, %v1138
    %v1289 = vmul.f32 %v1141, %v1141
    %v1290 = vmul.f32 %v1146, %v1146
    %v1291 = vmul.f32 %v1149, %v1149
    %v1292 = vmul.f32 %v1154, %v1154
    %v1293 = vmul.f32 %v1157, %v1157
    %v1294 = vadd.f32 %v1230, %v1231
    %v1295 = vadd.f32 %v1294, %v1232
    %v1296 = vadd.f32 %v1295, %v1233
    %v1297 = vadd.f32 %v1296, %v1234
    %v1298 = vadd.f32 %v1297, %v1235
    %v1299 = vadd.f32 %v1298, %v1236
    %v1300 = vadd.f32 %v1299, %v1237
    %v1301 = vadd.f32 %v1300, %v1238
    %v1302 = vadd.f32 %v1301, %v1239
    %v1303 = vadd.f32 %v1302, %v1240
    %v1304 = vadd.f32 %v1303, %v1241
    %v1305 = vadd.f32 %v1304, %v1242
    %v1306 = vadd.f32 %v1305, %v1243
    %v1307 = vadd.f32 %v1306, %v1244
    %v1308 = vadd.f32 %v1307, %v1245
    %v1309 = vadd.f32 %v1308, %v1246
    %v1310 = vadd.f32 %v1309, %v1247
    %v1311 = vadd.f32 %v1310, %v1248
    %v1312 = vadd.f32 %v1311, %v1249
    %v1313 = vadd.f32 %v1312, %v1250
    %v1314 = vadd.f32 %v1313, %v1251
    %v1315 = vadd.f32 %v1314, %v1252
    %v1316 = vadd.f32 %v1315, %v1253
    %v1317 = vadd.f32 %v1316, %v1254
    %v1318 = vadd.f32 %v1317, %v1255
    %v1319 = vadd.f32 %v1318, %v1256
    %v1320 = vadd.f32 %v1319, %v1257
    %v1321 = vadd.f32 %v1320, %v1258
    %v1322 = vadd.f32 %v1321, %v1259
    %v1323 = vadd.f32 %v1322, %v1260
    %v1324 = vadd.f32 %v1323, %v1261
    %v1325 = vadd.f32 %v1324, %v1262
    %v1326 = vadd.f32 %v1325, %v1263
    %v1327 = vadd.f32 %v1326, %v1264
    %v1328 = vadd.f32 %v1327, %v1265
    %v1329 = vadd.f32 %v1328, %v1266
    %v1330 = vadd.f32 %v1329, %v1267
    %v1331 = vadd.f32 %v1330, %v1268
    %v1332 = vadd.f32 %v1331, %v1269
    %v1333 = vadd.f32 %v1332, %v1270
    %v1334 = vadd.f32 %v1333, %v1271
    %v1335 = vadd.f32 %v1334, %v1272
    %v1336 = vadd.f32 %v1335, %v1273
    %v1337 = vadd.f32 %v1336, %v1274
    %v1338 = vadd.f32 %v1337, %v1275
    %v1339 = vadd.f32 %v1338, %v1276
    %v1340 = vadd.f32 %v1339, %v1277
    %v1341 = vadd.f32 %v1340, %v1278
    %v1342 = vadd.f32 %v1341, %v1279
    %v1343 = vadd.f32 %v1342, %v1280
    %v1344 = vadd.f32 %v1343, %v1281
    %v1345 = vadd.f32 %v1344, %v1282
    %v1346 = vadd.f32 %v1345, %v1283
    %v1347 = vadd.f32 %v1346, %v1284
    %v1348 = vadd.f32 %v1347, %v1285
    %v1349 = vadd.f32 %v1348, %v1286
    %v1350 = vadd.f32 %v1349, %v1287
    %v1351 = vadd.f32 %v1350, %v1288
    %v1352 = vadd.f32 %v1351, %v1289
    %v1353 = vadd.f32 %v1352, %v1290
    %v1354 = vadd.f32 %v1353, %v1291
    %v1355 = vadd.f32 %v1354, %v1292
    %v1356 = vadd.f32 %v1355, %v1293
    %v1357 = vrot.slane %v1356, 4
    %v1358 = vadd.f32 %v1356, %v1357
    %v1359 = vrot.slane %v1358, 2
    %v1360 = vadd.f32 %v1358, %v1359
    %v1361 = vrot.slane %v1360, 1
    %v1362 = vadd.f32 %v1360, %v1361
    %v1363 = vmul.f32 %v1362, 0.001953125
    %v1364 = vmul.f32 %v1229, %v1229
    %v1365 = vsub.f32 %v1363, %v1364
    %v1366 = vmax.f32 %v1365, 0.0
    %v1367 = vld [vmem:[%s2] sm:$0x1]
    %v1368 = vadd.f32 %v1366, 1e-05
    %v1369 = vrsqrt.pop %v1368
    %v1370 = vmul.f32 %v1367, %v1369
    %v1371 = vld [vmem:[%s3] sm:$0x1]
    %v1372 = vmul.f32 %v1229, %v1370
    %v1373 = vsub.f32 %v1371, %v1372
    %v1375 = vlaneseq
    %v1376 = vshrl.u32 %v1375, 7
    %v1377 = vsub.s32 0, %v1376
    %v1378 = vrot.slane %v1370, %v1377
    %v1380 = vmul.f32 %v906, %v1378
    %v1381 = vmul.f32 %v909, %v1378
    %v1382 = vmul.f32 %v914, %v1378
    %v1383 = vmul.f32 %v917, %v1378
    %v1384 = vmul.f32 %v922, %v1378
    %v1385 = vmul.f32 %v925, %v1378
    %v1386 = vmul.f32 %v930, %v1378
    %v1387 = vmul.f32 %v933, %v1378
    %v1388 = vmul.f32 %v938, %v1378
    %v1389 = vmul.f32 %v941, %v1378
    %v1390 = vmul.f32 %v946, %v1378
    %v1391 = vmul.f32 %v949, %v1378
    %v1392 = vmul.f32 %v954, %v1378
    %v1393 = vmul.f32 %v957, %v1378
    %v1394 = vmul.f32 %v962, %v1378
    %v1395 = vmul.f32 %v965, %v1378
    %v1396 = vmul.f32 %v970, %v1378
    %v1397 = vmul.f32 %v973, %v1378
    %v1398 = vmul.f32 %v978, %v1378
    %v1399 = vmul.f32 %v981, %v1378
    %v1400 = vmul.f32 %v986, %v1378
    %v1401 = vmul.f32 %v989, %v1378
    %v1402 = vmul.f32 %v994, %v1378
    %v1403 = vmul.f32 %v997, %v1378
    %v1404 = vmul.f32 %v1002, %v1378
    %v1405 = vmul.f32 %v1005, %v1378
    %v1406 = vmul.f32 %v1010, %v1378
    %v1407 = vmul.f32 %v1013, %v1378
    %v1408 = vmul.f32 %v1018, %v1378
    %v1409 = vmul.f32 %v1021, %v1378
    %v1410 = vmul.f32 %v1026, %v1378
    %v1411 = vmul.f32 %v1029, %v1378
    %v1412 = vmul.f32 %v1034, %v1378
    %v1413 = vmul.f32 %v1037, %v1378
    %v1414 = vmul.f32 %v1042, %v1378
    %v1415 = vmul.f32 %v1045, %v1378
    %v1416 = vmul.f32 %v1050, %v1378
    %v1417 = vmul.f32 %v1053, %v1378
    %v1418 = vmul.f32 %v1058, %v1378
    %v1419 = vmul.f32 %v1061, %v1378
    %v1420 = vmul.f32 %v1066, %v1378
    %v1421 = vmul.f32 %v1069, %v1378
    %v1422 = vmul.f32 %v1074, %v1378
    %v1423 = vmul.f32 %v1077, %v1378
    %v1424 = vmul.f32 %v1082, %v1378
    %v1425 = vmul.f32 %v1085, %v1378
    %v1426 = vmul.f32 %v1090, %v1378
    %v1427 = vmul.f32 %v1093, %v1378
    %v1428 = vmul.f32 %v1098, %v1378
    %v1429 = vmul.f32 %v1101, %v1378
    %v1430 = vmul.f32 %v1106, %v1378
    %v1431 = vmul.f32 %v1109, %v1378
    %v1432 = vmul.f32 %v1114, %v1378
    %v1433 = vmul.f32 %v1117, %v1378
    %v1434 = vmul.f32 %v1122, %v1378
    %v1435 = vmul.f32 %v1125, %v1378
    %v1436 = vmul.f32 %v1130, %v1378
    %v1437 = vmul.f32 %v1133, %v1378
    %v1438 = vmul.f32 %v1138, %v1378
    %v1439 = vmul.f32 %v1141, %v1378
    %v1440 = vmul.f32 %v1146, %v1378
    %v1441 = vmul.f32 %v1149, %v1378
    %v1442 = vmul.f32 %v1154, %v1378
    %v1443 = vmul.f32 %v1157, %v1378
    %v1445 = vlaneseq
    %v1446 = vshrl.u32 %v1445, 7
    %v1447 = vsub.s32 0, %v1446
    %v1448 = vrot.slane %v1373, %v1447
    %v1450 = vadd.f32 %v1380, %v1448
    %v1451 = vadd.f32 %v1381, %v1448
    %v1452 = vadd.f32 %v1382, %v1448
    %v1453 = vadd.f32 %v1383, %v1448
    %v1454 = vadd.f32 %v1384, %v1448
    %v1455 = vadd.f32 %v1385, %v1448
    %v1456 = vadd.f32 %v1386, %v1448
    %v1457 = vadd.f32 %v1387, %v1448
    %v1458 = vadd.f32 %v1388, %v1448
    %v1459 = vadd.f32 %v1389, %v1448
    %v1460 = vadd.f32 %v1390, %v1448
    %v1461 = vadd.f32 %v1391, %v1448
    %v1462 = vadd.f32 %v1392, %v1448
    %v1463 = vadd.f32 %v1393, %v1448
    %v1464 = vadd.f32 %v1394, %v1448
    %v1465 = vadd.f32 %v1395, %v1448
    %v1466 = vadd.f32 %v1396, %v1448
    %v1467 = vadd.f32 %v1397, %v1448
    %v1468 = vadd.f32 %v1398, %v1448
    %v1469 = vadd.f32 %v1399, %v1448
    %v1470 = vadd.f32 %v1400, %v1448
    %v1471 = vadd.f32 %v1401, %v1448
    %v1472 = vadd.f32 %v1402, %v1448
    %v1473 = vadd.f32 %v1403, %v1448
    %v1474 = vadd.f32 %v1404, %v1448
    %v1475 = vadd.f32 %v1405, %v1448
    %v1476 = vadd.f32 %v1406, %v1448
    %v1477 = vadd.f32 %v1407, %v1448
    %v1478 = vadd.f32 %v1408, %v1448
    %v1479 = vadd.f32 %v1409, %v1448
    %v1480 = vadd.f32 %v1410, %v1448
    %v1481 = vadd.f32 %v1411, %v1448
    %v1482 = vadd.f32 %v1412, %v1448
    %v1483 = vadd.f32 %v1413, %v1448
    %v1484 = vadd.f32 %v1414, %v1448
    %v1485 = vadd.f32 %v1415, %v1448
    %v1486 = vadd.f32 %v1416, %v1448
    %v1487 = vadd.f32 %v1417, %v1448
    %v1488 = vadd.f32 %v1418, %v1448
    %v1489 = vadd.f32 %v1419, %v1448
    %v1490 = vadd.f32 %v1420, %v1448
    %v1491 = vadd.f32 %v1421, %v1448
    %v1492 = vadd.f32 %v1422, %v1448
    %v1493 = vadd.f32 %v1423, %v1448
    %v1494 = vadd.f32 %v1424, %v1448
    %v1495 = vadd.f32 %v1425, %v1448
    %v1496 = vadd.f32 %v1426, %v1448
    %v1497 = vadd.f32 %v1427, %v1448
    %v1498 = vadd.f32 %v1428, %v1448
    %v1499 = vadd.f32 %v1429, %v1448
    %v1500 = vadd.f32 %v1430, %v1448
    %v1501 = vadd.f32 %v1431, %v1448
    %v1502 = vadd.f32 %v1432, %v1448
    %v1503 = vadd.f32 %v1433, %v1448
    %v1504 = vadd.f32 %v1434, %v1448
    %v1505 = vadd.f32 %v1435, %v1448
    %v1506 = vadd.f32 %v1436, %v1448
    %v1507 = vadd.f32 %v1437, %v1448
    %v1508 = vadd.f32 %v1438, %v1448
    %v1509 = vadd.f32 %v1439, %v1448
    %v1510 = vadd.f32 %v1440, %v1448
    %v1511 = vadd.f32 %v1441, %v1448
    %v1512 = vadd.f32 %v1442, %v1448
    %v1513 = vadd.f32 %v1443, %v1448
    %v1514 = vmax.f32 %v1450, 0.0
    %v1515 = vmax.f32 %v1451, 0.0
    %v1516 = vmax.f32 %v1452, 0.0
    %v1517 = vmax.f32 %v1453, 0.0
    %v1518 = vmax.f32 %v1454, 0.0
    %v1519 = vmax.f32 %v1455, 0.0
    %v1520 = vmax.f32 %v1456, 0.0
    %v1521 = vmax.f32 %v1457, 0.0
    %v1522 = vmax.f32 %v1458, 0.0
    %v1523 = vmax.f32 %v1459, 0.0
    %v1524 = vmax.f32 %v1460, 0.0
    %v1525 = vmax.f32 %v1461, 0.0
    %v1526 = vmax.f32 %v1462, 0.0
    %v1527 = vmax.f32 %v1463, 0.0
    %v1528 = vmax.f32 %v1464, 0.0
    %v1529 = vmax.f32 %v1465, 0.0
    %v1530 = vmax.f32 %v1466, 0.0
    %v1531 = vmax.f32 %v1467, 0.0
    %v1532 = vmax.f32 %v1468, 0.0
    %v1533 = vmax.f32 %v1469, 0.0
    %v1534 = vmax.f32 %v1470, 0.0
    %v1535 = vmax.f32 %v1471, 0.0
    %v1536 = vmax.f32 %v1472, 0.0
    %v1537 = vmax.f32 %v1473, 0.0
    %v1538 = vmax.f32 %v1474, 0.0
    %v1539 = vmax.f32 %v1475, 0.0
    %v1540 = vmax.f32 %v1476, 0.0
    %v1541 = vmax.f32 %v1477, 0.0
    %v1542 = vmax.f32 %v1478, 0.0
    %v1543 = vmax.f32 %v1479, 0.0
    %v1544 = vmax.f32 %v1480, 0.0
    %v1545 = vmax.f32 %v1481, 0.0
    %v1546 = vmax.f32 %v1482, 0.0
    %v1547 = vmax.f32 %v1483, 0.0
    %v1548 = vmax.f32 %v1484, 0.0
    %v1549 = vmax.f32 %v1485, 0.0
    %v1550 = vmax.f32 %v1486, 0.0
    %v1551 = vmax.f32 %v1487, 0.0
    %v1552 = vmax.f32 %v1488, 0.0
    %v1553 = vmax.f32 %v1489, 0.0
    %v1554 = vmax.f32 %v1490, 0.0
    %v1555 = vmax.f32 %v1491, 0.0
    %v1556 = vmax.f32 %v1492, 0.0
    %v1557 = vmax.f32 %v1493, 0.0
    %v1558 = vmax.f32 %v1494, 0.0
    %v1559 = vmax.f32 %v1495, 0.0
    %v1560 = vmax.f32 %v1496, 0.0
    %v1561 = vmax.f32 %v1497, 0.0
    %v1562 = vmax.f32 %v1498, 0.0
    %v1563 = vmax.f32 %v1499, 0.0
    %v1564 = vmax.f32 %v1500, 0.0
    %v1565 = vmax.f32 %v1501, 0.0
    %v1566 = vmax.f32 %v1502, 0.0
    %v1567 = vmax.f32 %v1503, 0.0
    %v1568 = vmax.f32 %v1504, 0.0
    %v1569 = vmax.f32 %v1505, 0.0
    %v1570 = vmax.f32 %v1506, 0.0
    %v1571 = vmax.f32 %v1507, 0.0
    %v1572 = vmax.f32 %v1508, 0.0
    %v1573 = vmax.f32 %v1509, 0.0
    %v1574 = vmax.f32 %v1510, 0.0
    %v1575 = vmax.f32 %v1511, 0.0
    %v1576 = vmax.f32 %v1512, 0.0
    %v1577 = vmax.f32 %v1513, 0.0
    %v1578 = vpack.c.bf16 %v1515, %v1514
    %v1579 = vpack.c.bf16 %v1517, %v1516
    %v1580 = vpack.c.bf16 %v1519, %v1518
    %v1581 = vpack.c.bf16 %v1521, %v1520
    %v1582 = vpack.c.bf16 %v1523, %v1522
    %v1583 = vpack.c.bf16 %v1525, %v1524
    %v1584 = vpack.c.bf16 %v1527, %v1526
    %v1585 = vpack.c.bf16 %v1529, %v1528
    %v1586 = vpack.c.bf16 %v1531, %v1530
    %v1587 = vpack.c.bf16 %v1533, %v1532
    %v1588 = vpack.c.bf16 %v1535, %v1534
    %v1589 = vpack.c.bf16 %v1537, %v1536
    %v1590 = vpack.c.bf16 %v1539, %v1538
    %v1591 = vpack.c.bf16 %v1541, %v1540
    %v1592 = vpack.c.bf16 %v1543, %v1542
    %v1593 = vpack.c.bf16 %v1545, %v1544
    %v1594 = vpack.c.bf16 %v1547, %v1546
    %v1595 = vpack.c.bf16 %v1549, %v1548
    %v1596 = vpack.c.bf16 %v1551, %v1550
    %v1597 = vpack.c.bf16 %v1553, %v1552
    %v1598 = vpack.c.bf16 %v1555, %v1554
    %v1599 = vpack.c.bf16 %v1557, %v1556
    %v1600 = vpack.c.bf16 %v1559, %v1558
    %v1601 = vpack.c.bf16 %v1561, %v1560
    %v1602 = vpack.c.bf16 %v1563, %v1562
    %v1603 = vpack.c.bf16 %v1565, %v1564
    %v1604 = vpack.c.bf16 %v1567, %v1566
    %v1605 = vpack.c.bf16 %v1569, %v1568
    %v1606 = vpack.c.bf16 %v1571, %v1570
    %v1607 = vpack.c.bf16 %v1573, %v1572
    %v1608 = vpack.c.bf16 %v1575, %v1574
    %v1609 = vpack.c.bf16 %v1577, %v1576
    %v1611 = vshrl.u32 %v1578, 16
    %v1613 = vrot.slane %v1611, 7
    %v1614 = vshll.u32 %v1578, 16
    %v1616 = vor.u32 %v1613, %v1614
    %v1618 = vshrl.u32 %v1579, 16
    %v1620 = vrot.slane %v1618, 7
    %v1621 = vshll.u32 %v1579, 16
    %v1623 = vor.u32 %v1620, %v1621
    %v1625 = vshrl.u32 %v1580, 16
    %v1627 = vrot.slane %v1625, 7
    %v1628 = vshll.u32 %v1580, 16
    %v1630 = vor.u32 %v1627, %v1628
    %v1632 = vshrl.u32 %v1581, 16
    %v1634 = vrot.slane %v1632, 7
    %v1635 = vshll.u32 %v1581, 16
    %v1637 = vor.u32 %v1634, %v1635
    %v1639 = vshrl.u32 %v1582, 16
    %v1641 = vrot.slane %v1639, 7
    %v1642 = vshll.u32 %v1582, 16
    %v1644 = vor.u32 %v1641, %v1642
    %v1646 = vshrl.u32 %v1583, 16
    %v1648 = vrot.slane %v1646, 7
    %v1649 = vshll.u32 %v1583, 16
    %v1651 = vor.u32 %v1648, %v1649
    %v1653 = vshrl.u32 %v1584, 16
    %v1655 = vrot.slane %v1653, 7
    %v1656 = vshll.u32 %v1584, 16
    %v1658 = vor.u32 %v1655, %v1656
    %v1660 = vshrl.u32 %v1585, 16
    %v1662 = vrot.slane %v1660, 7
    %v1663 = vshll.u32 %v1585, 16
    %v1665 = vor.u32 %v1662, %v1663
    %v1667 = vshrl.u32 %v1586, 16
    %v1669 = vrot.slane %v1667, 7
    %v1670 = vshll.u32 %v1586, 16
    %v1672 = vor.u32 %v1669, %v1670
    %v1674 = vshrl.u32 %v1587, 16
    %v1676 = vrot.slane %v1674, 7
    %v1677 = vshll.u32 %v1587, 16
    %v1679 = vor.u32 %v1676, %v1677
    %v1681 = vshrl.u32 %v1588, 16
    %v1683 = vrot.slane %v1681, 7
    %v1684 = vshll.u32 %v1588, 16
    %v1686 = vor.u32 %v1683, %v1684
    %v1688 = vshrl.u32 %v1589, 16
    %v1690 = vrot.slane %v1688, 7
    %v1691 = vshll.u32 %v1589, 16
    %v1693 = vor.u32 %v1690, %v1691
    %v1695 = vshrl.u32 %v1590, 16
    %v1697 = vrot.slane %v1695, 7
    %v1698 = vshll.u32 %v1590, 16
    %v1700 = vor.u32 %v1697, %v1698
    %v1702 = vshrl.u32 %v1591, 16
    %v1704 = vrot.slane %v1702, 7
    %v1705 = vshll.u32 %v1591, 16
    %v1707 = vor.u32 %v1704, %v1705
    %v1709 = vshrl.u32 %v1592, 16
    %v1711 = vrot.slane %v1709, 7
    %v1712 = vshll.u32 %v1592, 16
    %v1714 = vor.u32 %v1711, %v1712
    %v1716 = vshrl.u32 %v1593, 16
    %v1718 = vrot.slane %v1716, 7
    %v1719 = vshll.u32 %v1593, 16
    %v1721 = vor.u32 %v1718, %v1719
    %v1723 = vshrl.u32 %v1594, 16
    %v1725 = vrot.slane %v1723, 7
    %v1726 = vshll.u32 %v1594, 16
    %v1728 = vor.u32 %v1725, %v1726
    %v1730 = vshrl.u32 %v1595, 16
    %v1732 = vrot.slane %v1730, 7
    %v1733 = vshll.u32 %v1595, 16
    %v1735 = vor.u32 %v1732, %v1733
    %v1737 = vshrl.u32 %v1596, 16
    %v1739 = vrot.slane %v1737, 7
    %v1740 = vshll.u32 %v1596, 16
    %v1742 = vor.u32 %v1739, %v1740
    %v1744 = vshrl.u32 %v1597, 16
    %v1746 = vrot.slane %v1744, 7
    %v1747 = vshll.u32 %v1597, 16
    %v1749 = vor.u32 %v1746, %v1747
    %v1751 = vshrl.u32 %v1598, 16
    %v1753 = vrot.slane %v1751, 7
    %v1754 = vshll.u32 %v1598, 16
    %v1756 = vor.u32 %v1753, %v1754
    %v1758 = vshrl.u32 %v1599, 16
    %v1760 = vrot.slane %v1758, 7
    %v1761 = vshll.u32 %v1599, 16
    %v1763 = vor.u32 %v1760, %v1761
    %v1765 = vshrl.u32 %v1600, 16
    %v1767 = vrot.slane %v1765, 7
    %v1768 = vshll.u32 %v1600, 16
    %v1770 = vor.u32 %v1767, %v1768
    %v1772 = vshrl.u32 %v1601, 16
    %v1774 = vrot.slane %v1772, 7
    %v1775 = vshll.u32 %v1601, 16
    %v1777 = vor.u32 %v1774, %v1775
    %v1779 = vshrl.u32 %v1602, 16
    %v1781 = vrot.slane %v1779, 7
    %v1782 = vshll.u32 %v1602, 16
    %v1784 = vor.u32 %v1781, %v1782
    %v1786 = vshrl.u32 %v1603, 16
    %v1788 = vrot.slane %v1786, 7
    %v1789 = vshll.u32 %v1603, 16
    %v1791 = vor.u32 %v1788, %v1789
    %v1793 = vshrl.u32 %v1604, 16
    %v1795 = vrot.slane %v1793, 7
    %v1796 = vshll.u32 %v1604, 16
    %v1798 = vor.u32 %v1795, %v1796
    %v1800 = vshrl.u32 %v1605, 16
    %v1802 = vrot.slane %v1800, 7
    %v1803 = vshll.u32 %v1605, 16
    %v1805 = vor.u32 %v1802, %v1803
    %v1807 = vshrl.u32 %v1606, 16
    %v1809 = vrot.slane %v1807, 7
    %v1810 = vshll.u32 %v1606, 16
    %v1812 = vor.u32 %v1809, %v1810
    %v1814 = vshrl.u32 %v1607, 16
    %v1816 = vrot.slane %v1814, 7
    %v1817 = vshll.u32 %v1607, 16
    %v1819 = vor.u32 %v1816, %v1817
    %v1821 = vshrl.u32 %v1608, 16
    %v1823 = vrot.slane %v1821, 7
    %v1824 = vshll.u32 %v1608, 16
    %v1826 = vor.u32 %v1823, %v1824
    %v1828 = vshrl.u32 %v1609, 16
    %v1830 = vrot.slane %v1828, 7
    %v1831 = vshll.u32 %v1609, 16
    %v1833 = vor.u32 %v1830, %v1831
    %vm1866 = vcmask 1040384
    %vm1867 = vsmask.f32 256
    %vm1868 = vmand %vm1866, %vm1867
    %v1869 = vsel %vm1868, 0, %v1616
    %v1870 = vsel %vm1868, 0, %v1623
    %v1871 = vsel %vm1868, 0, %v1630
    %v1872 = vsel %vm1868, 0, %v1637
    %v1873 = vsel %vm1868, 0, %v1644
    %v1874 = vsel %vm1868, 0, %v1651
    %v1875 = vsel %vm1868, 0, %v1658
    %v1876 = vsel %vm1868, 0, %v1665
    %v1877 = vsel %vm1868, 0, %v1672
    %v1878 = vsel %vm1868, 0, %v1679
    %v1879 = vsel %vm1868, 0, %v1686
    %v1880 = vsel %vm1868, 0, %v1693
    %v1881 = vsel %vm1868, 0, %v1700
    %v1882 = vsel %vm1868, 0, %v1707
    %v1883 = vsel %vm1868, 0, %v1714
    %v1884 = vsel %vm1868, 0, %v1721
    %v1885 = vsel %vm1868, 0, %v1728
    %v1886 = vsel %vm1868, 0, %v1735
    %v1887 = vsel %vm1868, 0, %v1742
    %v1888 = vsel %vm1868, 0, %v1749
    %v1889 = vsel %vm1868, 0, %v1756
    %v1890 = vsel %vm1868, 0, %v1763
    %v1891 = vsel %vm1868, 0, %v1770
    %v1892 = vsel %vm1868, 0, %v1777
    %v1893 = vsel %vm1868, 0, %v1784
    %v1894 = vsel %vm1868, 0, %v1791
    %v1895 = vsel %vm1868, 0, %v1798
    %v1896 = vsel %vm1868, 0, %v1805
    %v1897 = vsel %vm1868, 0, %v1812
    %v1898 = vsel %vm1868, 0, %v1819
    %v1899 = vsel %vm1868, 0, %v1826
    %v1900 = vsel %vm1868, 0, %v1833
    %v1901 = vrot.slane %v1614, 1
    %v1902 = vor.u32 %v1611, %v1901
    %v1903 = vrot.slane %v1621, 1
    %v1904 = vor.u32 %v1618, %v1903
    %v1905 = vrot.slane %v1628, 1
    %v1906 = vor.u32 %v1625, %v1905
    %v1907 = vrot.slane %v1635, 1
    %v1908 = vor.u32 %v1632, %v1907
    %v1909 = vrot.slane %v1642, 1
    %v1910 = vor.u32 %v1639, %v1909
    %v1911 = vrot.slane %v1649, 1
    %v1912 = vor.u32 %v1646, %v1911
    %v1913 = vrot.slane %v1656, 1
    %v1914 = vor.u32 %v1653, %v1913
    %v1915 = vrot.slane %v1663, 1
    %v1916 = vor.u32 %v1660, %v1915
    %v1917 = vrot.slane %v1670, 1
    %v1918 = vor.u32 %v1667, %v1917
    %v1919 = vrot.slane %v1677, 1
    %v1920 = vor.u32 %v1674, %v1919
    %v1921 = vrot.slane %v1684, 1
    %v1922 = vor.u32 %v1681, %v1921
    %v1923 = vrot.slane %v1691, 1
    %v1924 = vor.u32 %v1688, %v1923
    %v1925 = vrot.slane %v1698, 1
    %v1926 = vor.u32 %v1695, %v1925
    %v1927 = vrot.slane %v1705, 1
    %v1928 = vor.u32 %v1702, %v1927
    %v1929 = vrot.slane %v1712, 1
    %v1930 = vor.u32 %v1709, %v1929
    %v1931 = vrot.slane %v1719, 1
    %v1932 = vor.u32 %v1716, %v1931
    %v1933 = vrot.slane %v1726, 1
    %v1934 = vor.u32 %v1723, %v1933
    %v1935 = vrot.slane %v1733, 1
    %v1936 = vor.u32 %v1730, %v1935
    %v1937 = vrot.slane %v1740, 1
    %v1938 = vor.u32 %v1737, %v1937
    %v1939 = vrot.slane %v1747, 1
    %v1940 = vor.u32 %v1744, %v1939
    %v1941 = vrot.slane %v1754, 1
    %v1942 = vor.u32 %v1751, %v1941
    %v1943 = vrot.slane %v1761, 1
    %v1944 = vor.u32 %v1758, %v1943
    %v1945 = vrot.slane %v1768, 1
    %v1946 = vor.u32 %v1765, %v1945
    %v1947 = vrot.slane %v1775, 1
    %v1948 = vor.u32 %v1772, %v1947
    %v1949 = vrot.slane %v1782, 1
    %v1950 = vor.u32 %v1779, %v1949
    %v1951 = vrot.slane %v1789, 1
    %v1952 = vor.u32 %v1786, %v1951
    %v1953 = vrot.slane %v1796, 1
    %v1954 = vor.u32 %v1793, %v1953
    %v1955 = vrot.slane %v1803, 1
    %v1956 = vor.u32 %v1800, %v1955
    %v1957 = vrot.slane %v1810, 1
    %v1958 = vor.u32 %v1807, %v1957
    %v1959 = vrot.slane %v1817, 1
    %v1960 = vor.u32 %v1814, %v1959
    %v1961 = vrot.slane %v1824, 1
    %v1962 = vor.u32 %v1821, %v1961
    %v1963 = vrot.slane %v1831, 1
    %v1964 = vor.u32 %v1828, %v1963
    %vm1997 = vcmask 1047552
    %vm1998 = vsmask.f32 7424
    %vm1999 = vmand %vm1997, %vm1998
    %v2000 = vsel %vm1999, %v1902, 0
    %v2001 = vsel %vm1999, %v1904, 0
    %v2002 = vsel %vm1999, %v1906, 0
    %v2003 = vsel %vm1999, %v1908, 0
    %v2004 = vsel %vm1999, %v1910, 0
    %v2005 = vsel %vm1999, %v1912, 0
    %v2006 = vsel %vm1999, %v1914, 0
    %v2007 = vsel %vm1999, %v1916, 0
    %v2008 = vsel %vm1999, %v1918, 0
    %v2009 = vsel %vm1999, %v1920, 0
    %v2010 = vsel %vm1999, %v1922, 0
    %v2011 = vsel %vm1999, %v1924, 0
    %v2012 = vsel %vm1999, %v1926, 0
    %v2013 = vsel %vm1999, %v1928, 0
    %v2014 = vsel %vm1999, %v1930, 0
    %v2015 = vsel %vm1999, %v1932, 0
    %v2016 = vsel %vm1999, %v1934, 0
    %v2017 = vsel %vm1999, %v1936, 0
    %v2018 = vsel %vm1999, %v1938, 0
    %v2019 = vsel %vm1999, %v1940, 0
    %v2020 = vsel %vm1999, %v1942, 0
    %v2021 = vsel %vm1999, %v1944, 0
    %v2022 = vsel %vm1999, %v1946, 0
    %v2023 = vsel %vm1999, %v1948, 0
    %v2024 = vsel %vm1999, %v1950, 0
    %v2025 = vsel %vm1999, %v1952, 0
    %v2026 = vsel %vm1999, %v1954, 0
    %v2027 = vsel %vm1999, %v1956, 0
    %v2028 = vsel %vm1999, %v1958, 0
    %v2029 = vsel %vm1999, %v1960, 0
    %v2030 = vsel %vm1999, %v1962, 0
    %v2031 = vsel %vm1999, %v1964, 0
    %2064 = vrot.lane.b32.xlu0 %v1578, 16
    %v2065 = vpop.permute.xlu0 %2064
    %2066 = vrot.lane.b32.xlu0 %v1579, 16
    %v2067 = vpop.permute.xlu0 %2066
    %2068 = vrot.lane.b32.xlu0 %v1580, 16
    %v2069 = vpop.permute.xlu0 %2068
    %2070 = vrot.lane.b32.xlu0 %v1581, 16
    %v2071 = vpop.permute.xlu0 %2070
    %2072 = vrot.lane.b32.xlu0 %v1582, 16
    %v2073 = vpop.permute.xlu0 %2072
    %2074 = vrot.lane.b32.xlu0 %v1583, 16
    %v2075 = vpop.permute.xlu0 %2074
    %2076 = vrot.lane.b32.xlu0 %v1584, 16
    %v2077 = vpop.permute.xlu0 %2076
    %2078 = vrot.lane.b32.xlu0 %v1585, 16
    %v2079 = vpop.permute.xlu0 %2078
    %2080 = vrot.lane.b32.xlu0 %v1586, 16
    %v2081 = vpop.permute.xlu0 %2080
    %2082 = vrot.lane.b32.xlu0 %v1587, 16
    %v2083 = vpop.permute.xlu0 %2082
    %2084 = vrot.lane.b32.xlu0 %v1588, 16
    %v2085 = vpop.permute.xlu0 %2084
    %2086 = vrot.lane.b32.xlu0 %v1589, 16
    %v2087 = vpop.permute.xlu0 %2086
    %2088 = vrot.lane.b32.xlu0 %v1590, 16
    %v2089 = vpop.permute.xlu0 %2088
    %2090 = vrot.lane.b32.xlu0 %v1591, 16
    %v2091 = vpop.permute.xlu0 %2090
    %2092 = vrot.lane.b32.xlu0 %v1592, 16
    %v2093 = vpop.permute.xlu0 %2092
    %2094 = vrot.lane.b32.xlu0 %v1593, 16
    %v2095 = vpop.permute.xlu0 %2094
    %2096 = vrot.lane.b32.xlu0 %v1594, 16
    %v2097 = vpop.permute.xlu0 %2096
    %2098 = vrot.lane.b32.xlu0 %v1595, 16
    %v2099 = vpop.permute.xlu0 %2098
    %2100 = vrot.lane.b32.xlu0 %v1596, 16
    %v2101 = vpop.permute.xlu0 %2100
    %2102 = vrot.lane.b32.xlu0 %v1597, 16
    %v2103 = vpop.permute.xlu0 %2102
    %2104 = vrot.lane.b32.xlu0 %v1598, 16
    %v2105 = vpop.permute.xlu0 %2104
    %2106 = vrot.lane.b32.xlu0 %v1599, 16
    %v2107 = vpop.permute.xlu0 %2106
    %2108 = vrot.lane.b32.xlu0 %v1600, 16
    %v2109 = vpop.permute.xlu0 %2108
    %2110 = vrot.lane.b32.xlu0 %v1601, 16
    %v2111 = vpop.permute.xlu0 %2110
    %2112 = vrot.lane.b32.xlu0 %v1602, 16
    %v2113 = vpop.permute.xlu0 %2112
    %2114 = vrot.lane.b32.xlu0 %v1603, 16
    %v2115 = vpop.permute.xlu0 %2114
    %2116 = vrot.lane.b32.xlu0 %v1604, 16
    %v2117 = vpop.permute.xlu0 %2116
    %2118 = vrot.lane.b32.xlu0 %v1605, 16
    %v2119 = vpop.permute.xlu0 %2118
    %2120 = vrot.lane.b32.xlu0 %v1606, 16
    %v2121 = vpop.permute.xlu0 %2120
    %2122 = vrot.lane.b32.xlu0 %v1607, 16
    %v2123 = vpop.permute.xlu0 %2122
    %2124 = vrot.lane.b32.xlu0 %v1608, 16
    %v2125 = vpop.permute.xlu0 %2124
    %2126 = vrot.lane.b32.xlu0 %v1609, 16
    %v2127 = vpop.permute.xlu0 %2126
    %2160 = vrot.lane.b32.xlu0 %v2000, 32
    %v2161 = vpop.permute.xlu0 %2160
    %2162 = vrot.lane.b32.xlu0 %v2001, 32
    %v2163 = vpop.permute.xlu0 %2162
    %2164 = vrot.lane.b32.xlu0 %v2002, 32
    %v2165 = vpop.permute.xlu0 %2164
    %2166 = vrot.lane.b32.xlu0 %v2003, 32
    %v2167 = vpop.permute.xlu0 %2166
    %2168 = vrot.lane.b32.xlu0 %v2004, 32
    %v2169 = vpop.permute.xlu0 %2168
    %2170 = vrot.lane.b32.xlu0 %v2005, 32
    %v2171 = vpop.permute.xlu0 %2170
    %2172 = vrot.lane.b32.xlu0 %v2006, 32
    %v2173 = vpop.permute.xlu0 %2172
    %2174 = vrot.lane.b32.xlu0 %v2007, 32
    %v2175 = vpop.permute.xlu0 %2174
    %2176 = vrot.lane.b32.xlu0 %v2008, 32
    %v2177 = vpop.permute.xlu0 %2176
    %2178 = vrot.lane.b32.xlu0 %v2009, 32
    %v2179 = vpop.permute.xlu0 %2178
    %2180 = vrot.lane.b32.xlu0 %v2010, 32
    %v2181 = vpop.permute.xlu0 %2180
    %2182 = vrot.lane.b32.xlu0 %v2011, 32
    %v2183 = vpop.permute.xlu0 %2182
    %2184 = vrot.lane.b32.xlu0 %v2012, 32
    %v2185 = vpop.permute.xlu0 %2184
    %2186 = vrot.lane.b32.xlu0 %v2013, 32
    %v2187 = vpop.permute.xlu0 %2186
    %2188 = vrot.lane.b32.xlu0 %v2014, 32
    %v2189 = vpop.permute.xlu0 %2188
    %2190 = vrot.lane.b32.xlu0 %v2015, 32
    %v2191 = vpop.permute.xlu0 %2190
    %2192 = vrot.lane.b32.xlu0 %v2016, 32
    %v2193 = vpop.permute.xlu0 %2192
    %2194 = vrot.lane.b32.xlu0 %v2017, 32
    %v2195 = vpop.permute.xlu0 %2194
    %2196 = vrot.lane.b32.xlu0 %v2018, 32
    %v2197 = vpop.permute.xlu0 %2196
    %2198 = vrot.lane.b32.xlu0 %v2019, 32
    %v2199 = vpop.permute.xlu0 %2198
    %2200 = vrot.lane.b32.xlu0 %v2020, 32
    %v2201 = vpop.permute.xlu0 %2200
    %2202 = vrot.lane.b32.xlu0 %v2021, 32
    %v2203 = vpop.permute.xlu0 %2202
    %2204 = vrot.lane.b32.xlu0 %v2022, 32
    %v2205 = vpop.permute.xlu0 %2204
    %2206 = vrot.lane.b32.xlu0 %v2023, 32
    %v2207 = vpop.permute.xlu0 %2206
    %2208 = vrot.lane.b32.xlu0 %v2024, 32
    %v2209 = vpop.permute.xlu0 %2208
    %2210 = vrot.lane.b32.xlu0 %v2025, 32
    %v2211 = vpop.permute.xlu0 %2210
    %2212 = vrot.lane.b32.xlu0 %v2026, 32
    %v2213 = vpop.permute.xlu0 %2212
    %2214 = vrot.lane.b32.xlu0 %v2027, 32
    %v2215 = vpop.permute.xlu0 %2214
    %2216 = vrot.lane.b32.xlu0 %v2028, 32
    %v2217 = vpop.permute.xlu0 %2216
    %2218 = vrot.lane.b32.xlu0 %v2029, 32
    %v2219 = vpop.permute.xlu0 %2218
    %2220 = vrot.lane.b32.xlu0 %v2030, 32
    %v2221 = vpop.permute.xlu0 %2220
    %2222 = vrot.lane.b32.xlu0 %v2031, 32
    %v2223 = vpop.permute.xlu0 %2222
    %vm2224 = vcmask 130048
    %v2227 = vsel %vm2224, %v1869, %v2065
    %v2230 = vsel %vm2224, %v1870, %v2067
    %v2233 = vsel %vm2224, %v1871, %v2069
    %v2236 = vsel %vm2224, %v1872, %v2071
    %v2239 = vsel %vm2224, %v1873, %v2073
    %v2242 = vsel %vm2224, %v1874, %v2075
    %v2245 = vsel %vm2224, %v1875, %v2077
    %v2248 = vsel %vm2224, %v1876, %v2079
    %v2251 = vsel %vm2224, %v1877, %v2081
    %v2254 = vsel %vm2224, %v1878, %v2083
    %v2257 = vsel %vm2224, %v1879, %v2085
    %v2260 = vsel %vm2224, %v1880, %v2087
    %v2263 = vsel %vm2224, %v1881, %v2089
    %v2266 = vsel %vm2224, %v1882, %v2091
    %v2269 = vsel %vm2224, %v1883, %v2093
    %v2272 = vsel %vm2224, %v1884, %v2095
    %v2275 = vsel %vm2224, %v1885, %v2097
    %v2278 = vsel %vm2224, %v1886, %v2099
    %v2281 = vsel %vm2224, %v1887, %v2101
    %v2284 = vsel %vm2224, %v1888, %v2103
    %v2287 = vsel %vm2224, %v1889, %v2105
    %v2290 = vsel %vm2224, %v1890, %v2107
    %v2293 = vsel %vm2224, %v1891, %v2109
    %v2296 = vsel %vm2224, %v1892, %v2111
    %v2299 = vsel %vm2224, %v1893, %v2113
    %v2302 = vsel %vm2224, %v1894, %v2115
    %v2305 = vsel %vm2224, %v1895, %v2117
    %v2308 = vsel %vm2224, %v1896, %v2119
    %v2311 = vsel %vm2224, %v1897, %v2121
    %v2314 = vsel %vm2224, %v1898, %v2123
    %v2317 = vsel %vm2224, %v1899, %v2125
    %v2320 = vsel %vm2224, %v1900, %v2127
    %vm2321 = vcmask 261120
    %v2323 = vsel %vm2321, %v2227, %v2161
    %v2325 = vsel %vm2321, %v2230, %v2163
    %v2327 = vsel %vm2321, %v2233, %v2165
    %v2329 = vsel %vm2321, %v2236, %v2167
    %v2331 = vsel %vm2321, %v2239, %v2169
    %v2333 = vsel %vm2321, %v2242, %v2171
    %v2335 = vsel %vm2321, %v2245, %v2173
    %v2337 = vsel %vm2321, %v2248, %v2175
    %v2339 = vsel %vm2321, %v2251, %v2177
    %v2341 = vsel %vm2321, %v2254, %v2179
    %v2343 = vsel %vm2321, %v2257, %v2181
    %v2345 = vsel %vm2321, %v2260, %v2183
    %v2347 = vsel %vm2321, %v2263, %v2185
    %v2349 = vsel %vm2321, %v2266, %v2187
    %v2351 = vsel %vm2321, %v2269, %v2189
    %v2353 = vsel %vm2321, %v2272, %v2191
    %v2355 = vsel %vm2321, %v2275, %v2193
    %v2357 = vsel %vm2321, %v2278, %v2195
    %v2359 = vsel %vm2321, %v2281, %v2197
    %v2361 = vsel %vm2321, %v2284, %v2199
    %v2363 = vsel %vm2321, %v2287, %v2201
    %v2365 = vsel %vm2321, %v2290, %v2203
    %v2367 = vsel %vm2321, %v2293, %v2205
    %v2369 = vsel %vm2321, %v2296, %v2207
    %v2371 = vsel %vm2321, %v2299, %v2209
    %v2373 = vsel %vm2321, %v2302, %v2211
    %v2375 = vsel %vm2321, %v2305, %v2213
    %v2377 = vsel %vm2321, %v2308, %v2215
    %v2379 = vsel %vm2321, %v2311, %v2217
    %v2381 = vsel %vm2321, %v2314, %v2219
    %v2383 = vsel %vm2321, %v2317, %v2221
    %v2385 = vsel %vm2321, %v2320, %v2223
    %vm2386 = vcmask 392192
    %v2388 = vsel %vm2386, %v2323, 0
    %v2390 = vsel %vm2386, %v2325, 0
    %v2392 = vsel %vm2386, %v2327, 0
    %v2394 = vsel %vm2386, %v2329, 0
    %v2396 = vsel %vm2386, %v2331, 0
    %v2398 = vsel %vm2386, %v2333, 0
    %v2400 = vsel %vm2386, %v2335, 0
    %v2402 = vsel %vm2386, %v2337, 0
    %v2404 = vsel %vm2386, %v2339, 0
    %v2406 = vsel %vm2386, %v2341, 0
    %v2408 = vsel %vm2386, %v2343, 0
    %v2410 = vsel %vm2386, %v2345, 0
    %v2412 = vsel %vm2386, %v2347, 0
    %v2414 = vsel %vm2386, %v2349, 0
    %v2416 = vsel %vm2386, %v2351, 0
    %v2418 = vsel %vm2386, %v2353, 0
    %v2420 = vsel %vm2386, %v2355, 0
    %v2422 = vsel %vm2386, %v2357, 0
    %v2424 = vsel %vm2386, %v2359, 0
    %v2426 = vsel %vm2386, %v2361, 0
    %v2428 = vsel %vm2386, %v2363, 0
    %v2430 = vsel %vm2386, %v2365, 0
    %v2432 = vsel %vm2386, %v2367, 0
    %v2434 = vsel %vm2386, %v2369, 0
    %v2436 = vsel %vm2386, %v2371, 0
    %v2438 = vsel %vm2386, %v2373, 0
    %v2440 = vsel %vm2386, %v2375, 0
    %v2442 = vsel %vm2386, %v2377, 0
    %v2444 = vsel %vm2386, %v2379, 0
    %v2446 = vsel %vm2386, %v2381, 0
    %v2448 = vsel %vm2386, %v2383, 0
    %v2450 = vsel %vm2386, %v2385, 0
    %s2452 = scalar_lea.vmem [#allocation2], 8
    %2453 = vst [vmem:[%s2452] sm:$0xff] %v2388
    %2454 = vst [vmem:[%s2452 + $0x8] sm:$0xff] %v2390
    %2455 = vst [vmem:[%s2452 + $0x10] sm:$0xff] %v2392
    %2456 = vst [vmem:[%s2452 + $0x18] sm:$0xff] %v2394
    %2457 = vst [vmem:[%s2452 + $0x20] sm:$0xff] %v2396
    %2458 = vst [vmem:[%s2452 + $0x28] sm:$0xff] %v2398
    %2459 = vst [vmem:[%s2452 + $0x30] sm:$0xff] %v2400
    %2460 = vst [vmem:[%s2452 + $0x38] sm:$0xff] %v2402
    %2461 = vst [vmem:[%s2452 + $0x40] sm:$0xff] %v2404
    %2462 = vst [vmem:[%s2452 + $0x48] sm:$0xff] %v2406
    %2463 = vst [vmem:[%s2452 + $0x50] sm:$0xff] %v2408
    %2464 = vst [vmem:[%s2452 + $0x58] sm:$0xff] %v2410
    %2465 = vst [vmem:[%s2452 + $0x60] sm:$0xff] %v2412
    %2466 = vst [vmem:[%s2452 + $0x68] sm:$0xff] %v2414
    %2467 = vst [vmem:[%s2452 + $0x70] sm:$0xff] %v2416
    %2468 = vst [vmem:[%s2452 + $0x78] sm:$0xff] %v2418
    %2469 = vst [vmem:[%s2452 + $0x90] sm:$0xff] %v2420
    %2470 = vst [vmem:[%s2452 + $0x98] sm:$0xff] %v2422
    %2471 = vst [vmem:[%s2452 + $0xa0] sm:$0xff] %v2424
    %2472 = vst [vmem:[%s2452 + $0xa8] sm:$0xff] %v2426
    %2473 = vst [vmem:[%s2452 + $0xb0] sm:$0xff] %v2428
    %2474 = vst [vmem:[%s2452 + $0xb8] sm:$0xff] %v2430
    %2475 = vst [vmem:[%s2452 + $0xc0] sm:$0xff] %v2432
    %2476 = vst [vmem:[%s2452 + $0xc8] sm:$0xff] %v2434
    %2477 = vst [vmem:[%s2452 + $0xd0] sm:$0xff] %v2436
    %2478 = vst [vmem:[%s2452 + $0xd8] sm:$0xff] %v2438
    %2479 = vst [vmem:[%s2452 + $0xe0] sm:$0xff] %v2440
    %2480 = vst [vmem:[%s2452 + $0xe8] sm:$0xff] %v2442
    %2481 = vst [vmem:[%s2452 + $0xf0] sm:$0xff] %v2444
    %2482 = vst [vmem:[%s2452 + $0xf8] sm:$0xff] %v2446
    %2483 = vst [vmem:[%s2452 + $0x100] sm:$0xff] %v2448
    %2484 = vst [vmem:[%s2452 + $0x108] sm:$0xff] %v2450
    %v2485 = vld [vmem:[#allocation2] sm:$0xff]
    %v2486 = vld [vmem:[#allocation2 + $0x8] sm:$0xff]
    %v2487 = vld [vmem:[#allocation2 + $0x10] sm:$0xff]
    %v2488 = vld [vmem:[#allocation2 + $0x18] sm:$0xff]
    %v2489 = vld [vmem:[#allocation2 + $0x20] sm:$0xff]
    %v2490 = vld [vmem:[#allocation2 + $0x28] sm:$0xff]
    %v2491 = vld [vmem:[#allocation2 + $0x30] sm:$0xff]
    %v2492 = vld [vmem:[#allocation2 + $0x38] sm:$0xff]
    %v2493 = vld [vmem:[#allocation2 + $0x40] sm:$0xff]
    %v2494 = vld [vmem:[#allocation2 + $0x48] sm:$0xff]
    %v2495 = vld [vmem:[#allocation2 + $0x50] sm:$0xff]
    %v2496 = vld [vmem:[#allocation2 + $0x58] sm:$0xff]
    %v2497 = vld [vmem:[#allocation2 + $0x60] sm:$0xff]
    %v2498 = vld [vmem:[#allocation2 + $0x68] sm:$0xff]
    %v2499 = vld [vmem:[#allocation2 + $0x70] sm:$0xff]
    %v2500 = vld [vmem:[#allocation2 + $0x78] sm:$0xff]
    %v2501 = vld [vmem:[#allocation2 + $0x80] sm:$0xff]
    %v2502 = vld [vmem:[#allocation2 + $0x88] sm:$0xff]
    %v2503 = vld [vmem:[#allocation2 + $0x90] sm:$0xff]
    %v2504 = vld [vmem:[#allocation2 + $0x98] sm:$0xff]
    %v2505 = vld [vmem:[#allocation2 + $0xa0] sm:$0xff]
    %v2506 = vld [vmem:[#allocation2 + $0xa8] sm:$0xff]
    %v2507 = vld [vmem:[#allocation2 + $0xb0] sm:$0xff]
    %v2508 = vld [vmem:[#allocation2 + $0xb8] sm:$0xff]
    %v2509 = vld [vmem:[#allocation2 + $0xc0] sm:$0xff]
    %v2510 = vld [vmem:[#allocation2 + $0xc8] sm:$0xff]
    %v2511 = vld [vmem:[#allocation2 + $0xd0] sm:$0xff]
    %v2512 = vld [vmem:[#allocation2 + $0xd8] sm:$0xff]
    %v2513 = vld [vmem:[#allocation2 + $0xe0] sm:$0xff]
    %v2514 = vld [vmem:[#allocation2 + $0xe8] sm:$0xff]
    %v2515 = vld [vmem:[#allocation2 + $0xf0] sm:$0xff]
    %v2516 = vld [vmem:[#allocation2 + $0xf8] sm:$0xff]
    %v2517 = vld [vmem:[#allocation2 + $0x100] sm:$0xff]
    %v2518 = vld [vmem:[#allocation2 + $0x108] sm:$0xff]
    %v2519 = vld [vmem:[#allocation2 + $0x110] sm:$0xff]
    %v2520 = vld [vmem:[#allocation2 + $0x118] sm:$0xff]
    %v2521 = vld [vmem:[#allocation9] sm:$0xf]
    %v2522 = vld [vmem:[#allocation9 + $0x4] sm:$0xf]
    %v2523 = vld [vmem:[#allocation9 + $0x8] sm:$0xf]
    %v2524 = vld [vmem:[#allocation9 + $0xc] sm:$0xf]
    %v2525 = vld [vmem:[#allocation9 + $0x10] sm:$0xf]
    %v2526 = vld [vmem:[#allocation9 + $0x14] sm:$0xf]
    %v2527 = vld [vmem:[#allocation9 + $0x18] sm:$0xf]
    %v2528 = vld [vmem:[#allocation9 + $0x1c] sm:$0xf]
    %v2529 = vld [vmem:[#allocation9 + $0x20] sm:$0xf]
    %v2530 = vld [vmem:[#allocation9 + $0x24] sm:$0xf]
    %v2531 = vld [vmem:[#allocation9 + $0x28] sm:$0xf]
    %v2532 = vld [vmem:[#allocation9 + $0x2c] sm:$0xf]
    %v2533 = vld [vmem:[#allocation9 + $0x30] sm:$0xf]
    %v2534 = vld [vmem:[#allocation9 + $0x34] sm:$0xf]
    %v2535 = vld [vmem:[#allocation9 + $0x38] sm:$0xf]
    %v2536 = vld [vmem:[#allocation9 + $0x3c] sm:$0xf]
    %v2537 = vld [vmem:[#allocation9 + $0x40] sm:$0xf]
    %v2538 = vld [vmem:[#allocation9 + $0x44] sm:$0xf]
    %v2539 = vld [vmem:[#allocation9 + $0x48] sm:$0xf]
    %v2540 = vld [vmem:[#allocation9 + $0x4c] sm:$0xf]
    %v2541 = vld [vmem:[#allocation9 + $0x50] sm:$0xf]
    %v2542 = vld [vmem:[#allocation9 + $0x54] sm:$0xf]
    %v2543 = vld [vmem:[#allocation9 + $0x58] sm:$0xf]
    %v2544 = vld [vmem:[#allocation9 + $0x5c] sm:$0xf]
    %v2545 = vld [vmem:[#allocation9 + $0x60] sm:$0xf]
    %v2546 = vld [vmem:[#allocation9 + $0x64] sm:$0xf]
    %v2547 = vld [vmem:[#allocation9 + $0x68] sm:$0xf]
    %v2548 = vld [vmem:[#allocation9 + $0x6c] sm:$0xf]
    %v2549 = vld [vmem:[#allocation9 + $0x70] sm:$0xf]
    %v2550 = vld [vmem:[#allocation9 + $0x74] sm:$0xf]
    %v2551 = vld [vmem:[#allocation9 + $0x78] sm:$0xf]
    %v2552 = vld [vmem:[#allocation9 + $0x7c] sm:$0xf]
    %v2553 = vld [vmem:[#allocation9 + $0x80] sm:$0xf]
    %v2554 = vld [vmem:[#allocation9 + $0x84] sm:$0xf]
    %v2555 = vld [vmem:[#allocation9 + $0x88] sm:$0xf]
    %v2556 = vld [vmem:[#allocation9 + $0x8c] sm:$0xf]
    %v2557 = vld [vmem:[#allocation9 + $0x90] sm:$0xf]
    %v2558 = vld [vmem:[#allocation9 + $0x94] sm:$0xf]
    %v2559 = vld [vmem:[#allocation9 + $0x98] sm:$0xf]
    %v2560 = vld [vmem:[#allocation9 + $0x9c] sm:$0xf]
    %v2561 = vld [vmem:[#allocation9 + $0xa0] sm:$0xf]
    %v2562 = vld [vmem:[#allocation9 + $0xa4] sm:$0xf]
    %v2563 = vld [vmem:[#allocation9 + $0xa8] sm:$0xf]
    %v2564 = vld [vmem:[#allocation9 + $0xac] sm:$0xf]
    %v2565 = vld [vmem:[#allocation9 + $0xb0] sm:$0xf]
    %v2566 = vld [vmem:[#allocation9 + $0xb4] sm:$0xf]
    %v2567 = vld [vmem:[#allocation9 + $0xb8] sm:$0xf]
    %v2568 = vld [vmem:[#allocation9 + $0xbc] sm:$0xf]
    %v2617 = vunpack.c.l.b16 %v2521
    %v2618 = vunpack.c.l.b16 %v2522
    %v2619 = vunpack.c.l.b16 %v2523
    %v2620 = vunpack.c.l.b16 %v2524
    %v2621 = vunpack.c.l.b16 %v2525
    %v2622 = vunpack.c.l.b16 %v2526
    %v2623 = vunpack.c.l.b16 %v2527
    %v2624 = vunpack.c.l.b16 %v2528
    %v2625 = vunpack.c.l.b16 %v2529
    %v2626 = vunpack.c.l.b16 %v2530
    %v2627 = vunpack.c.l.b16 %v2531
    %v2628 = vunpack.c.l.b16 %v2532
    %v2629 = vunpack.c.l.b16 %v2533
    %v2630 = vunpack.c.l.b16 %v2534
    %v2631 = vunpack.c.l.b16 %v2535
    %v2632 = vunpack.c.l.b16 %v2536
    %v2633 = vunpack.c.l.b16 %v2537
    %v2634 = vunpack.c.l.b16 %v2538
    %v2635 = vunpack.c.l.b16 %v2539
    %v2636 = vunpack.c.l.b16 %v2540
    %v2637 = vunpack.c.l.b16 %v2541
    %v2638 = vunpack.c.l.b16 %v2542
    %v2639 = vunpack.c.l.b16 %v2543
    %v2640 = vunpack.c.l.b16 %v2544
    %v2641 = vunpack.c.l.b16 %v2545
    %v2642 = vunpack.c.l.b16 %v2546
    %v2643 = vunpack.c.l.b16 %v2547
    %v2644 = vunpack.c.l.b16 %v2548
    %v2645 = vunpack.c.l.b16 %v2549
    %v2646 = vunpack.c.l.b16 %v2550
    %v2647 = vunpack.c.l.b16 %v2551
    %v2648 = vunpack.c.l.b16 %v2552
    %v2649 = vunpack.c.l.b16 %v2553
    %v2650 = vunpack.c.l.b16 %v2554
    %v2651 = vunpack.c.l.b16 %v2555
    %v2652 = vunpack.c.l.b16 %v2556
    %v2653 = vunpack.c.l.b16 %v2557
    %v2654 = vunpack.c.l.b16 %v2558
    %v2655 = vunpack.c.l.b16 %v2559
    %v2656 = vunpack.c.l.b16 %v2560
    %v2657 = vunpack.c.l.b16 %v2561
    %v2658 = vunpack.c.l.b16 %v2562
    %v2659 = vunpack.c.l.b16 %v2563
    %v2660 = vunpack.c.l.b16 %v2564
    %v2661 = vunpack.c.l.b16 %v2565
    %v2662 = vunpack.c.l.b16 %v2566
    %v2663 = vunpack.c.l.b16 %v2567
    %v2664 = vunpack.c.l.b16 %v2568
    %v2665 = vpack.c.b16 %v2618, %v2617
    %v2666 = vpack.c.b16 %v2620, %v2619
    %v2667 = vpack.c.b16 %v2622, %v2621
    %v2668 = vpack.c.b16 %v2624, %v2623
    %v2669 = vpack.c.b16 %v2626, %v2625
    %v2670 = vpack.c.b16 %v2628, %v2627
    %v2671 = vpack.c.b16 %v2630, %v2629
    %v2672 = vpack.c.b16 %v2632, %v2631
    %v2673 = vpack.c.b16 %v2634, %v2633
    %v2674 = vpack.c.b16 %v2636, %v2635
    %v2675 = vpack.c.b16 %v2638, %v2637
    %v2676 = vpack.c.b16 %v2640, %v2639
    %v2677 = vpack.c.b16 %v2642, %v2641
    %v2678 = vpack.c.b16 %v2644, %v2643
    %v2679 = vpack.c.b16 %v2646, %v2645
    %v2680 = vpack.c.b16 %v2648, %v2647
    %v2681 = vpack.c.b16 %v2650, %v2649
    %v2682 = vpack.c.b16 %v2652, %v2651
    %v2683 = vpack.c.b16 %v2654, %v2653
    %v2684 = vpack.c.b16 %v2656, %v2655
    %v2685 = vpack.c.b16 %v2658, %v2657
    %v2686 = vpack.c.b16 %v2660, %v2659
    %v2687 = vpack.c.b16 %v2662, %v2661
    %v2688 = vpack.c.b16 %v2664, %v2663
    %2713 = vmatprep.subr.bf16.mxu0 0
    %2714 = vmatpush1.bf16.msra.mxu0 %v2665
    %2715 = vmatprep.subr.bf16.mxu0 0
    %2716 = vmatpush1.bf16.msra.mxu0 %v2666
    %2717 = vmatprep.subr.bf16.mxu0 0
    %2718 = vmatpush1.bf16.msra.mxu0 %v2667
    %2719 = vmatprep.subr.bf16.mxu0 0
    %2720 = vmatpush1.bf16.msra.mxu0 %v2668
    %2721 = vmatprep.subr.bf16.mxu0 0
    %2722 = vmatpush1.bf16.msra.mxu0 %v2669
    %2723 = vmatprep.subr.bf16.mxu0 0
    %2724 = vmatpush1.bf16.msra.mxu0 %v2670
    %2725 = vmatprep.subr.bf16.mxu0 0
    %2726 = vmatpush1.bf16.msra.mxu0 %v2671
    %2727 = vmatprep.subr.bf16.mxu0 0
    %2728 = vmatpush1.bf16.msra.mxu0 %v2672
    %2729 = vmatprep.subr.bf16.mxu0 0
    %2730 = vmatpush1.bf16.msra.mxu0 %v2673
    %2731 = vmatprep.subr.bf16.mxu0 0
    %2732 = vmatpush1.bf16.msra.mxu0 %v2674
    %2733 = vmatprep.subr.bf16.mxu0 0
    %2734 = vmatpush1.bf16.msra.mxu0 %v2675
    %2735 = vmatprep.subr.bf16.mxu0 0
    %2736 = vmatpush1.bf16.msra.mxu0 %v2676
    %2737 = vmatprep.subr.bf16.mxu0 0
    %2738 = vmatpush1.bf16.msra.mxu0 %v2677
    %2739 = vmatprep.subr.bf16.mxu0 0
    %2740 = vmatpush1.bf16.msra.mxu0 %v2678
    %2741 = vmatprep.subr.bf16.mxu0 0
    %2742 = vmatpush1.bf16.msra.mxu0 %v2679
    %2743 = vmatprep.subr.bf16.mxu0 0
    %2744 = vmatpush1.bf16.msra.mxu0 %v2680
    %2745 = vmatprep.mubr.bf16.mxu0 %v2486
    %2746 = vmatmul.mubr.bf16.gmra.mrb[0].mxu0 %v2485
    %v2747 = vpop.f32.mrb[0].mxu0
    %v2748 = vadd.f32 0.0, %v2747
    %v2749 = vpop.f32.mrb[0].mxu0
    %v2750 = vpop.f32.mrb[0].mxu0
    %v2751 = vadd.f32 0.0, %v2750
    %v2752 = vpop.f32.mrb[0].mxu0
    %2753 = vmatprep.mubr.bf16.mxu0 %v2487
    %2754 = vmatmul.mubr.bf16.gmra.mrb[0].mxu0 %v2486
    %v2755 = vpop.f32.mrb[0].mxu0
    %v2756 = vadd.f32 0.0, %v2755
    %v2757 = vpop.f32.mrb[0].mxu0
    %v2758 = vpop.f32.mrb[0].mxu0
    %v2759 = vadd.f32 0.0, %v2758
    %v2760 = vpop.f32.mrb[0].mxu0
    %2761 = vmatprep.mubr.bf16.mxu0 %v2488
    %2762 = vmatmul.mubr.bf16.gmra.mrb[0].mxu0 %v2487
    %v2763 = vpop.f32.mrb[0].mxu0
    %v2764 = vadd.f32 0.0, %v2763
    %v2765 = vpop.f32.mrb[0].mxu0
    %v2766 = vpop.f32.mrb[0].mxu0
    %v2767 = vadd.f32 0.0, %v2766
    %v2768 = vpop.f32.mrb[0].mxu0
    %2769 = vmatprep.mubr.bf16.mxu0 %v2489
    %2770 = vmatmul.mubr.bf16.gmra.mrb[0].mxu0 %v2488
    %v2771 = vpop.f32.mrb[0].mxu0
    %v2772 = vadd.f32 0.0, %v2771
    %v2773 = vpop.f32.mrb[0].mxu0
    %v2774 = vpop.f32.mrb[0].mxu0
    %v2775 = vadd.f32 0.0, %v2774
    %v2776 = vpop.f32.mrb[0].mxu0
    %2777 = vmatprep.mubr.bf16.mxu0 %v2490
    %2778 = vmatmul.mubr.bf16.gmra.mrb[0].mxu0 %v2489
    %v2779 = vpop.f32.mrb[0].mxu0
    %v2780 = vadd.f32 0.0, %v2779
    %v2781 = vpop.f32.mrb[0].mxu0
    %v2782 = vpop.f32.mrb[0].mxu0
    %v2783 = vadd.f32 0.0, %v2782
    %v2784 = vpop.f32.mrb[0].mxu0
    %2785 = vmatprep.mubr.bf16.mxu0 %v2491
    %2786 = vmatmul.mubr.bf16.gmra.mrb[0].mxu0 %v2490
    %v2787 = vpop.f32.mrb[0].mxu0
    %v2788 = vadd.f32 0.0, %v2787
    %v2789 = vpop.f32.mrb[0].mxu0
    %v2790 = vpop.f32.mrb[0].mxu0
    %v2791 = vadd.f32 0.0, %v2790
    %v2792 = vpop.f32.mrb[0].mxu0
    %2793 = vmatprep.mubr.bf16.mxu0 %v2492
    %2794 = vmatmul.mubr.bf16.gmra.mrb[0].mxu0 %v2491
    %v2795 = vpop.f32.mrb[0].mxu0
    %v2796 = vadd.f32 0.0, %v2795
    %v2797 = vpop.f32.mrb[0].mxu0
    %v2798 = vpop.f32.mrb[0].mxu0
    %v2799 = vadd.f32 0.0, %v2798
    %v2800 = vpop.f32.mrb[0].mxu0
    %2801 = vmatprep.mubr.bf16.mxu0 %v2493
    %2802 = vmatmul.mubr.bf16.gmra.mrb[0].mxu0 %v2492
    %v2803 = vpop.f32.mrb[0].mxu0
    %v2804 = vadd.f32 0.0, %v2803
    %v2805 = vpop.f32.mrb[0].mxu0
    %v2806 = vpop.f32.mrb[0].mxu0
    %v2807 = vadd.f32 0.0, %v2806
    %v2808 = vpop.f32.mrb[0].mxu0
    %2809 = vmatprep.mubr.bf16.mxu0 %v2494
    %2810 = vmatmul.mubr.bf16.gmra.mrb[0].mxu0 %v2493
    %v2811 = vpop.f32.mrb[0].mxu0
    %v2812 = vadd.f32 0.0, %v2811
    %v2813 = vpop.f32.mrb[0].mxu0
    %v2814 = vpop.f32.mrb[0].mxu0
    %v2815 = vadd.f32 0.0, %v2814
    %v2816 = vpop.f32.mrb[0].mxu0
    %2817 = vmatprep.mubr.bf16.mxu0 %v2495
    %2818 = vmatmul.mubr.bf16.gmra.mrb[0].mxu0 %v2494
    %v2819 = vpop.f32.mrb[0].mxu0
    %v2820 = vadd.f32 0.0, %v2819
    %v2821 = vpop.f32.mrb[0].mxu0
    %v2822 = vpop.f32.mrb[0].mxu0
    %v2823 = vadd.f32 0.0, %v2822
    %v2824 = vpop.f32.mrb[0].mxu0
    %2825 = vmatprep.mubr.bf16.mxu0 %v2496
    %2826 = vmatmul.mubr.bf16.gmra.mrb[0].mxu0 %v2495
    %v2827 = vpop.f32.mrb[0].mxu0
    %v2828 = vadd.f32 0.0, %v2827
    %v2829 = vpop.f32.mrb[0].mxu0
    %v2830 = vpop.f32.mrb[0].mxu0
    %v2831 = vadd.f32 0.0, %v2830
    %v2832 = vpop.f32.mrb[0].mxu0
    %2833 = vmatprep.mubr.bf16.mxu0 %v2497
    %2834 = vmatmul.mubr.bf16.gmra.mrb[0].mxu0 %v2496
    %v2835 = vpop.f32.mrb[0].mxu0
    %v2836 = vadd.f32 0.0, %v2835
    %v2837 = vpop.f32.mrb[0].mxu0
    %v2838 = vpop.f32.mrb[0].mxu0
    %v2839 = vadd.f32 0.0, %v2838
    %v2840 = vpop.f32.mrb[0].mxu0
    %2841 = vmatprep.mubr.bf16.mxu0 %v2498
    %2842 = vmatmul.mubr.bf16.gmra.mrb[0].mxu0 %v2497
    %v2843 = vpop.f32.mrb[0].mxu0
    %v2844 = vadd.f32 0.0, %v2843
    %v2845 = vpop.f32.mrb[0].mxu0
    %v2846 = vpop.f32.mrb[0].mxu0
    %v2847 = vadd.f32 0.0, %v2846
    %v2848 = vpop.f32.mrb[0].mxu0
    %2849 = vmatprep.mubr.bf16.mxu0 %v2499
    %2850 = vmatmul.mubr.bf16.gmra.mrb[0].mxu0 %v2498
    %v2851 = vpop.f32.mrb[0].mxu0
    %v2852 = vadd.f32 0.0, %v2851
    %v2853 = vpop.f32.mrb[0].mxu0
    %v2854 = vpop.f32.mrb[0].mxu0
    %v2855 = vadd.f32 0.0, %v2854
    %v2856 = vpop.f32.mrb[0].mxu0
    %2857 = vmatprep.mubr.bf16.mxu0 %v2500
    %2858 = vmatmul.mubr.bf16.gmra.mrb[0].mxu0 %v2499
    %v2859 = vpop.f32.mrb[0].mxu0
    %v2860 = vadd.f32 0.0, %v2859
    %v2861 = vpop.f32.mrb[0].mxu0
    %v2862 = vpop.f32.mrb[0].mxu0
    %v2863 = vadd.f32 0.0, %v2862
    %v2864 = vpop.f32.mrb[0].mxu0
    %2865 = vmatprep.mubr.bf16.mxu0 %v2501
    %2866 = vmatmul.mubr.bf16.gmra.mrb[0].mxu0 %v2500
    %v2867 = vpop.f32.mrb[0].mxu0
    %v2868 = vadd.f32 0.0, %v2867
    %v2869 = vpop.f32.mrb[0].mxu0
    %v2870 = vpop.f32.mrb[0].mxu0
    %v2871 = vadd.f32 0.0, %v2870
    %v2872 = vpop.f32.mrb[0].mxu0
    %2873 = vmatprep.mubr.bf16.mxu0 %v2504
    %2874 = vmatmul.mubr.bf16.gmra.mrb[0].mxu0 %v2503
    %v2875 = vpop.f32.mrb[0].mxu0
    %v2876 = vadd.f32 0.0, %v2875
    %v2877 = vpop.f32.mrb[0].mxu0
    %v2878 = vpop.f32.mrb[0].mxu0
    %v2879 = vadd.f32 0.0, %v2878
    %v2880 = vpop.f32.mrb[0].mxu0
    %2881 = vmatprep.mubr.bf16.mxu0 %v2505
    %2882 = vmatmul.mubr.bf16.gmra.mrb[0].mxu0 %v2504
    %v2883 = vpop.f32.mrb[0].mxu0
    %v2884 = vadd.f32 0.0, %v2883
    %v2885 = vpop.f32.mrb[0].mxu0
    %v2886 = vpop.f32.mrb[0].mxu0
    %v2887 = vadd.f32 0.0, %v2886
    %v2888 = vpop.f32.mrb[0].mxu0
    %2889 = vmatprep.mubr.bf16.mxu0 %v2506
    %2890 = vmatmul.mubr.bf16.gmra.mrb[0].mxu0 %v2505
    %v2891 = vpop.f32.mrb[0].mxu0
    %v2892 = vadd.f32 0.0, %v2891
    %v2893 = vpop.f32.mrb[0].mxu0
    %v2894 = vpop.f32.mrb[0].mxu0
    %v2895 = vadd.f32 0.0, %v2894
    %v2896 = vpop.f32.mrb[0].mxu0
    %2897 = vmatprep.mubr.bf16.mxu0 %v2507
    %2898 = vmatmul.mubr.bf16.gmra.mrb[0].mxu0 %v2506
    %v2899 = vpop.f32.mrb[0].mxu0
    %v2900 = vadd.f32 0.0, %v2899
    %v2901 = vpop.f32.mrb[0].mxu0
    %v2902 = vpop.f32.mrb[0].mxu0
    %v2903 = vadd.f32 0.0, %v2902
    %v2904 = vpop.f32.mrb[0].mxu0
    %2905 = vmatprep.mubr.bf16.mxu0 %v2508
    %2906 = vmatmul.mubr.bf16.gmra.mrb[0].mxu0 %v2507
    %v2907 = vpop.f32.mrb[0].mxu0
    %v2908 = vadd.f32 0.0, %v2907
    %v2909 = vpop.f32.mrb[0].mxu0
    %v2910 = vpop.f32.mrb[0].mxu0
    %v2911 = vadd.f32 0.0, %v2910
    %v2912 = vpop.f32.mrb[0].mxu0
    %2913 = vmatprep.mubr.bf16.mxu0 %v2509
    %2914 = vmatmul.mubr.bf16.gmra.mrb[0].mxu0 %v2508
    %v2915 = vpop.f32.mrb[0].mxu0
    %v2916 = vadd.f32 0.0, %v2915
    %v2917 = vpop.f32.mrb[0].mxu0
    %v2918 = vpop.f32.mrb[0].mxu0
    %v2919 = vadd.f32 0.0, %v2918
    %v2920 = vpop.f32.mrb[0].mxu0
    %2921 = vmatprep.mubr.bf16.mxu0 %v2510
    %2922 = vmatmul.mubr.bf16.gmra.mrb[0].mxu0 %v2509
    %v2923 = vpop.f32.mrb[0].mxu0
    %v2924 = vadd.f32 0.0, %v2923
    %v2925 = vpop.f32.mrb[0].mxu0
    %v2926 = vpop.f32.mrb[0].mxu0
    %v2927 = vadd.f32 0.0, %v2926
    %v2928 = vpop.f32.mrb[0].mxu0
    %2929 = vmatprep.mubr.bf16.mxu0 %v2511
    %2930 = vmatmul.mubr.bf16.gmra.mrb[0].mxu0 %v2510
    %v2931 = vpop.f32.mrb[0].mxu0
    %v2932 = vadd.f32 0.0, %v2931
    %v2933 = vpop.f32.mrb[0].mxu0
    %v2934 = vpop.f32.mrb[0].mxu0
    %v2935 = vadd.f32 0.0, %v2934
    %v2936 = vpop.f32.mrb[0].mxu0
    %2937 = vmatprep.mubr.bf16.mxu0 %v2512
    %2938 = vmatmul.mubr.bf16.gmra.mrb[0].mxu0 %v2511
    %v2939 = vpop.f32.mrb[0].mxu0
    %v2940 = vadd.f32 0.0, %v2939
    %v2941 = vpop.f32.mrb[0].mxu0
    %v2942 = vpop.f32.mrb[0].mxu0
    %v2943 = vadd.f32 0.0, %v2942
    %v2944 = vpop.f32.mrb[0].mxu0
    %2945 = vmatprep.mubr.bf16.mxu0 %v2513
    %2946 = vmatmul.mubr.bf16.gmra.mrb[0].mxu0 %v2512
    %v2947 = vpop.f32.mrb[0].mxu0
    %v2948 = vadd.f32 0.0, %v2947
    %v2949 = vpop.f32.mrb[0].mxu0
    %v2950 = vpop.f32.mrb[0].mxu0
    %v2951 = vadd.f32 0.0, %v2950
    %v2952 = vpop.f32.mrb[0].mxu0
    %2953 = vmatprep.mubr.bf16.mxu0 %v2514
    %2954 = vmatmul.mubr.bf16.gmra.mrb[0].mxu0 %v2513
    %v2955 = vpop.f32.mrb[0].mxu0
    %v2956 = vadd.f32 0.0, %v2955
    %v2957 = vpop.f32.mrb[0].mxu0
    %v2958 = vpop.f32.mrb[0].mxu0
    %v2959 = vadd.f32 0.0, %v2958
    %v2960 = vpop.f32.mrb[0].mxu0
    %2961 = vmatprep.mubr.bf16.mxu0 %v2515
    %2962 = vmatmul.mubr.bf16.gmra.mrb[0].mxu0 %v2514
    %v2963 = vpop.f32.mrb[0].mxu0
    %v2964 = vadd.f32 0.0, %v2963
    %v2965 = vpop.f32.mrb[0].mxu0
    %v2966 = vpop.f32.mrb[0].mxu0
    %v2967 = vadd.f32 0.0, %v2966
    %v2968 = vpop.f32.mrb[0].mxu0
    %2969 = vmatprep.mubr.bf16.mxu0 %v2516
    %2970 = vmatmul.mubr.bf16.gmra.mrb[0].mxu0 %v2515
    %v2971 = vpop.f32.mrb[0].mxu0
    %v2972 = vadd.f32 0.0, %v2971
    %v2973 = vpop.f32.mrb[0].mxu0
    %v2974 = vpop.f32.mrb[0].mxu0
    %v2975 = vadd.f32 0.0, %v2974
    %v2976 = vpop.f32.mrb[0].mxu0
    %2977 = vmatprep.mubr.bf16.mxu0 %v2517
    %2978 = vmatmul.mubr.bf16.gmra.mrb[0].mxu0 %v2516
    %v2979 = vpop.f32.mrb[0].mxu0
    %v2980 = vadd.f32 0.0, %v2979
    %v2981 = vpop.f32.mrb[0].mxu0
    %v2982 = vpop.f32.mrb[0].mxu0
    %v2983 = vadd.f32 0.0, %v2982
    %v2984 = vpop.f32.mrb[0].mxu0
    %2985 = vmatprep.mubr.bf16.mxu0 %v2518
    %2986 = vmatmul.mubr.bf16.gmra.mrb[0].mxu0 %v2517
    %v2987 = vpop.f32.mrb[0].mxu0
    %v2988 = vadd.f32 0.0, %v2987
    %v2989 = vpop.f32.mrb[0].mxu0
    %v2990 = vpop.f32.mrb[0].mxu0
    %v2991 = vadd.f32 0.0, %v2990
    %v2992 = vpop.f32.mrb[0].mxu0
    %2993 = vmatprep.mubr.bf16.mxu0 %v2519
    %2994 = vmatmul.mubr.bf16.gmra.mrb[0].mxu0 %v2518
    %v2995 = vpop.f32.mrb[0].mxu0
    %v2996 = vadd.f32 0.0, %v2995
    %v2997 = vpop.f32.mrb[0].mxu0
    %v2998 = vpop.f32.mrb[0].mxu0
    %v2999 = vadd.f32 0.0, %v2998
    %v3000 = vpop.f32.mrb[0].mxu0
    %3001 = vdwg.mxu0
    %3002 = vmatprep.subr.bf16.mxu0 0
    %3003 = vmatpush1.bf16.msra.mxu0 %v2681
    %3004 = vmatprep.subr.bf16.mxu0 0
    %3005 = vmatpush1.bf16.msra.mxu0 %v2682
    %3006 = vmatprep.subr.bf16.mxu0 0
    %3007 = vmatpush1.bf16.msra.mxu0 %v2683
    %3008 = vmatprep.subr.bf16.mxu0 0
    %3009 = vmatpush1.bf16.msra.mxu0 %v2684
    %3010 = vmatprep.subr.bf16.mxu0 0
    %3011 = vmatpush1.bf16.msra.mxu0 %v2685
    %3012 = vmatprep.subr.bf16.mxu0 0
    %3013 = vmatpush1.bf16.msra.mxu0 %v2686
    %3014 = vmatprep.subr.bf16.mxu0 0
    %3015 = vmatpush1.bf16.msra.mxu0 %v2687
    %3016 = vmatprep.subr.bf16.mxu0 0
    %3017 = vmatpush1.bf16.msra.mxu0 %v2688
    %3018 = vmatprep.subr.bf16.mxu0 0
    %3019 = vmatpush1.bf16.msra.mxu0 0
    %3020 = vmatprep.subr.bf16.mxu0 0
    %3021 = vmatpush1.bf16.msra.mxu0 0
    %3022 = vmatprep.subr.bf16.mxu0 0
    %3023 = vmatpush1.bf16.msra.mxu0 0
    %3024 = vmatprep.subr.bf16.mxu0 0
    %3025 = vmatpush1.bf16.msra.mxu0 0
    %3026 = vmatprep.subr.bf16.mxu0 0
    %3027 = vmatpush1.bf16.msra.mxu0 0
    %3028 = vmatprep.subr.bf16.mxu0 0
    %3029 = vmatpush1.bf16.msra.mxu0 0
    %3030 = vmatprep.subr.bf16.mxu0 0
    %3031 = vmatpush1.bf16.msra.mxu0 0
    %3032 = vmatprep.subr.bf16.mxu0 0
    %3033 = vmatpush1.bf16.msra.mxu0 0
    %3034 = vmatprep.mubr.bf16.mxu0 0
    %3035 = vmatmul.mubr.bf16.gmra.mrb[0].mxu0 %v2487
    %v3036 = vpop.f32.mrb[0].mxu0
    %v3037 = vadd.f32 %v2748, %v3036
    %v3038 = vpop.f32.mrb[0].mxu0
    %v3039 = vpop.f32.mrb[0].mxu0
    %v3040 = vadd.f32 %v2751, %v3039
    %v3041 = vpop.f32.mrb[0].mxu0
    %3042 = vmatprep.mubr.bf16.mxu0 0
    %3043 = vmatmul.mubr.bf16.gmra.mrb[0].mxu0 %v2488
    %v3044 = vpop.f32.mrb[0].mxu0
    %v3045 = vadd.f32 %v2756, %v3044
    %v3046 = vpop.f32.mrb[0].mxu0
    %v3047 = vpop.f32.mrb[0].mxu0
    %v3048 = vadd.f32 %v2759, %v3047
    %v3049 = vpop.f32.mrb[0].mxu0
    %3050 = vmatprep.mubr.bf16.mxu0 0
    %3051 = vmatmul.mubr.bf16.gmra.mrb[0].mxu0 %v2489
    %v3052 = vpop.f32.mrb[0].mxu0
    %v3053 = vadd.f32 %v2764, %v3052
    %v3054 = vpop.f32.mrb[0].mxu0
    %v3055 = vpop.f32.mrb[0].mxu0
    %v3056 = vadd.f32 %v2767, %v3055
    %v3057 = vpop.f32.mrb[0].mxu0
    %3058 = vmatprep.mubr.bf16.mxu0 0
    %3059 = vmatmul.mubr.bf16.gmra.mrb[0].mxu0 %v2490
    %v3060 = vpop.f32.mrb[0].mxu0
    %v3061 = vadd.f32 %v2772, %v3060
    %v3062 = vpop.f32.mrb[0].mxu0
    %v3063 = vpop.f32.mrb[0].mxu0
    %v3064 = vadd.f32 %v2775, %v3063
    %v3065 = vpop.f32.mrb[0].mxu0
    %3066 = vmatprep.mubr.bf16.mxu0 0
    %3067 = vmatmul.mubr.bf16.gmra.mrb[0].mxu0 %v2491
    %v3068 = vpop.f32.mrb[0].mxu0
    %v3069 = vadd.f32 %v2780, %v3068
    %v3070 = vpop.f32.mrb[0].mxu0
    %v3071 = vpop.f32.mrb[0].mxu0
    %v3072 = vadd.f32 %v2783, %v3071
    %v3073 = vpop.f32.mrb[0].mxu0
    %3074 = vmatprep.mubr.bf16.mxu0 0
    %3075 = vmatmul.mubr.bf16.gmra.mrb[0].mxu0 %v2492
    %v3076 = vpop.f32.mrb[0].mxu0
    %v3077 = vadd.f32 %v2788, %v3076
    %v3078 = vpop.f32.mrb[0].mxu0
    %v3079 = vpop.f32.mrb[0].mxu0
    %v3080 = vadd.f32 %v2791, %v3079
    %v3081 = vpop.f32.mrb[0].mxu0
    %3082 = vmatprep.mubr.bf16.mxu0 0
    %3083 = vmatmul.mubr.bf16.gmra.mrb[0].mxu0 %v2493
    %v3084 = vpop.f32.mrb[0].mxu0
    %v3085 = vadd.f32 %v2796, %v3084
    %v3086 = vpop.f32.mrb[0].mxu0
    %v3087 = vpop.f32.mrb[0].mxu0
    %v3088 = vadd.f32 %v2799, %v3087
    %v3089 = vpop.f32.mrb[0].mxu0
    %3090 = vmatprep.mubr.bf16.mxu0 0
    %3091 = vmatmul.mubr.bf16.gmra.mrb[0].mxu0 %v2494
    %v3092 = vpop.f32.mrb[0].mxu0
    %v3093 = vadd.f32 %v2804, %v3092
    %v3094 = vpop.f32.mrb[0].mxu0
    %v3095 = vpop.f32.mrb[0].mxu0
    %v3096 = vadd.f32 %v2807, %v3095
    %v3097 = vpop.f32.mrb[0].mxu0
    %3098 = vmatprep.mubr.bf16.mxu0 0
    %3099 = vmatmul.mubr.bf16.gmra.mrb[0].mxu0 %v2495
    %v3100 = vpop.f32.mrb[0].mxu0
    %v3101 = vadd.f32 %v2812, %v3100
    %v3102 = vpop.f32.mrb[0].mxu0
    %v3103 = vpop.f32.mrb[0].mxu0
    %v3104 = vadd.f32 %v2815, %v3103
    %v3105 = vpop.f32.mrb[0].mxu0
    %3106 = vmatprep.mubr.bf16.mxu0 0
    %3107 = vmatmul.mubr.bf16.gmra.mrb[0].mxu0 %v2496
    %v3108 = vpop.f32.mrb[0].mxu0
    %v3109 = vadd.f32 %v2820, %v3108
    %v3110 = vpop.f32.mrb[0].mxu0
    %v3111 = vpop.f32.mrb[0].mxu0
    %v3112 = vadd.f32 %v2823, %v3111
    %v3113 = vpop.f32.mrb[0].mxu0
    %3114 = vmatprep.mubr.bf16.mxu0 0
    %3115 = vmatmul.mubr.bf16.gmra.mrb[0].mxu0 %v2497
    %v3116 = vpop.f32.mrb[0].mxu0
    %v3117 = vadd.f32 %v2828, %v3116
    %v3118 = vpop.f32.mrb[0].mxu0
    %v3119 = vpop.f32.mrb[0].mxu0
    %v3120 = vadd.f32 %v2831, %v3119
    %v3121 = vpop.f32.mrb[0].mxu0
    %3122 = vmatprep.mubr.bf16.mxu0 0
    %3123 = vmatmul.mubr.bf16.gmra.mrb[0].mxu0 %v2498
    %v3124 = vpop.f32.mrb[0].mxu0
    %v3125 = vadd.f32 %v2836, %v3124
    %v3126 = vpop.f32.mrb[0].mxu0
    %v3127 = vpop.f32.mrb[0].mxu0
    %v3128 = vadd.f32 %v2839, %v3127
    %v3129 = vpop.f32.mrb[0].mxu0
    %3130 = vmatprep.mubr.bf16.mxu0 0
    %3131 = vmatmul.mubr.bf16.gmra.mrb[0].mxu0 %v2499
    %v3132 = vpop.f32.mrb[0].mxu0
    %v3133 = vadd.f32 %v2844, %v3132
    %v3134 = vpop.f32.mrb[0].mxu0
    %v3135 = vpop.f32.mrb[0].mxu0
    %v3136 = vadd.f32 %v2847, %v3135
    %v3137 = vpop.f32.mrb[0].mxu0
    %3138 = vmatprep.mubr.bf16.mxu0 0
    %3139 = vmatmul.mubr.bf16.gmra.mrb[0].mxu0 %v2500
    %v3140 = vpop.f32.mrb[0].mxu0
    %v3141 = vadd.f32 %v2852, %v3140
    %v3142 = vpop.f32.mrb[0].mxu0
    %v3143 = vpop.f32.mrb[0].mxu0
    %v3144 = vadd.f32 %v2855, %v3143
    %v3145 = vpop.f32.mrb[0].mxu0
    %3146 = vmatprep.mubr.bf16.mxu0 0
    %3147 = vmatmul.mubr.bf16.gmra.mrb[0].mxu0 %v2501
    %v3148 = vpop.f32.mrb[0].mxu0
    %v3149 = vadd.f32 %v2860, %v3148
    %v3150 = vpop.f32.mrb[0].mxu0
    %v3151 = vpop.f32.mrb[0].mxu0
    %v3152 = vadd.f32 %v2863, %v3151
    %v3153 = vpop.f32.mrb[0].mxu0
    %3154 = vmatprep.mubr.bf16.mxu0 0
    %3155 = vmatmul.mubr.bf16.gmra.mrb[0].mxu0 %v2502
    %v3156 = vpop.f32.mrb[0].mxu0
    %v3157 = vadd.f32 %v2868, %v3156
    %v3158 = vpop.f32.mrb[0].mxu0
    %v3159 = vpop.f32.mrb[0].mxu0
    %v3160 = vadd.f32 %v2871, %v3159
    %v3161 = vpop.f32.mrb[0].mxu0
    %3162 = vmatprep.mubr.bf16.mxu0 0
    %3163 = vmatmul.mubr.bf16.gmra.mrb[0].mxu0 %v2505
    %v3164 = vpop.f32.mrb[0].mxu0
    %v3165 = vadd.f32 %v2876, %v3164
    %v3166 = vpop.f32.mrb[0].mxu0
    %v3167 = vpop.f32.mrb[0].mxu0
    %v3168 = vadd.f32 %v2879, %v3167
    %v3169 = vpop.f32.mrb[0].mxu0
    %3170 = vmatprep.mubr.bf16.mxu0 0
    %3171 = vmatmul.mubr.bf16.gmra.mrb[0].mxu0 %v2506
    %v3172 = vpop.f32.mrb[0].mxu0
    %v3173 = vadd.f32 %v2884, %v3172
    %v3174 = vpop.f32.mrb[0].mxu0
    %v3175 = vpop.f32.mrb[0].mxu0
    %v3176 = vadd.f32 %v2887, %v3175
    %v3177 = vpop.f32.mrb[0].mxu0
    %3178 = vmatprep.mubr.bf16.mxu0 0
    %3179 = vmatmul.mubr.bf16.gmra.mrb[0].mxu0 %v2507
    %v3180 = vpop.f32.mrb[0].mxu0
    %v3181 = vadd.f32 %v2892, %v3180
    %v3182 = vpop.f32.mrb[0].mxu0
    %v3183 = vpop.f32.mrb[0].mxu0
    %v3184 = vadd.f32 %v2895, %v3183
    %v3185 = vpop.f32.mrb[0].mxu0
    %3186 = vmatprep.mubr.bf16.mxu0 0
    %3187 = vmatmul.mubr.bf16.gmra.mrb[0].mxu0 %v2508
    %v3188 = vpop.f32.mrb[0].mxu0
    %v3189 = vadd.f32 %v2900, %v3188
    %v3190 = vpop.f32.mrb[0].mxu0
    %v3191 = vpop.f32.mrb[0].mxu0
    %v3192 = vadd.f32 %v2903, %v3191
    %v3193 = vpop.f32.mrb[0].mxu0
    %3194 = vmatprep.mubr.bf16.mxu0 0
    %3195 = vmatmul.mubr.bf16.gmra.mrb[0].mxu0 %v2509
    %v3196 = vpop.f32.mrb[0].mxu0
    %v3197 = vadd.f32 %v2908, %v3196
    %v3198 = vpop.f32.mrb[0].mxu0
    %v3199 = vpop.f32.mrb[0].mxu0
    %v3200 = vadd.f32 %v2911, %v3199
    %v3201 = vpop.f32.mrb[0].mxu0
    %3202 = vmatprep.mubr.bf16.mxu0 0
    %3203 = vmatmul.mubr.bf16.gmra.mrb[0].mxu0 %v2510
    %v3204 = vpop.f32.mrb[0].mxu0
    %v3205 = vadd.f32 %v2916, %v3204
    %v3206 = vpop.f32.mrb[0].mxu0
    %v3207 = vpop.f32.mrb[0].mxu0
    %v3208 = vadd.f32 %v2919, %v3207
    %v3209 = vpop.f32.mrb[0].mxu0
    %3210 = vmatprep.mubr.bf16.mxu0 0
    %3211 = vmatmul.mubr.bf16.gmra.mrb[0].mxu0 %v2511
    %v3212 = vpop.f32.mrb[0].mxu0
    %v3213 = vadd.f32 %v2924, %v3212
    %v3214 = vpop.f32.mrb[0].mxu0
    %v3215 = vpop.f32.mrb[0].mxu0
    %v3216 = vadd.f32 %v2927, %v3215
    %v3217 = vpop.f32.mrb[0].mxu0
    %3218 = vmatprep.mubr.bf16.mxu0 0
    %3219 = vmatmul.mubr.bf16.gmra.mrb[0].mxu0 %v2512
    %v3220 = vpop.f32.mrb[0].mxu0
    %v3221 = vadd.f32 %v2932, %v3220
    %v3222 = vpop.f32.mrb[0].mxu0
    %v3223 = vpop.f32.mrb[0].mxu0
    %v3224 = vadd.f32 %v2935, %v3223
    %v3225 = vpop.f32.mrb[0].mxu0
    %3226 = vmatprep.mubr.bf16.mxu0 0
    %3227 = vmatmul.mubr.bf16.gmra.mrb[0].mxu0 %v2513
    %v3228 = vpop.f32.mrb[0].mxu0
    %v3229 = vadd.f32 %v2940, %v3228
    %v3230 = vpop.f32.mrb[0].mxu0
    %v3231 = vpop.f32.mrb[0].mxu0
    %v3232 = vadd.f32 %v2943, %v3231
    %v3233 = vpop.f32.mrb[0].mxu0
    %3234 = vmatprep.mubr.bf16.mxu0 0
    %3235 = vmatmul.mubr.bf16.gmra.mrb[0].mxu0 %v2514
    %v3236 = vpop.f32.mrb[0].mxu0
    %v3237 = vadd.f32 %v2948, %v3236
    %v3238 = vpop.f32.mrb[0].mxu0
    %v3239 = vpop.f32.mrb[0].mxu0
    %v3240 = vadd.f32 %v2951, %v3239
    %v3241 = vpop.f32.mrb[0].mxu0
    %3242 = vmatprep.mubr.bf16.mxu0 0
    %3243 = vmatmul.mubr.bf16.gmra.mrb[0].mxu0 %v2515
    %v3244 = vpop.f32.mrb[0].mxu0
    %v3245 = vadd.f32 %v2956, %v3244
    %v3246 = vpop.f32.mrb[0].mxu0
    %v3247 = vpop.f32.mrb[0].mxu0
    %v3248 = vadd.f32 %v2959, %v3247
    %v3249 = vpop.f32.mrb[0].mxu0
    %3250 = vmatprep.mubr.bf16.mxu0 0
    %3251 = vmatmul.mubr.bf16.gmra.mrb[0].mxu0 %v2516
    %v3252 = vpop.f32.mrb[0].mxu0
    %v3253 = vadd.f32 %v2964, %v3252
    %v3254 = vpop.f32.mrb[0].mxu0
    %v3255 = vpop.f32.mrb[0].mxu0
    %v3256 = vadd.f32 %v2967, %v3255
    %v3257 = vpop.f32.mrb[0].mxu0
    %3258 = vmatprep.mubr.bf16.mxu0 0
    %3259 = vmatmul.mubr.bf16.gmra.mrb[0].mxu0 %v2517
    %v3260 = vpop.f32.mrb[0].mxu0
    %v3261 = vadd.f32 %v2972, %v3260
    %v3262 = vpop.f32.mrb[0].mxu0
    %v3263 = vpop.f32.mrb[0].mxu0
    %v3264 = vadd.f32 %v2975, %v3263
    %v3265 = vpop.f32.mrb[0].mxu0
    %3266 = vmatprep.mubr.bf16.mxu0 0
    %3267 = vmatmul.mubr.bf16.gmra.mrb[0].mxu0 %v2518
    %v3268 = vpop.f32.mrb[0].mxu0
    %v3269 = vadd.f32 %v2980, %v3268
    %v3270 = vpop.f32.mrb[0].mxu0
    %v3271 = vpop.f32.mrb[0].mxu0
    %v3272 = vadd.f32 %v2983, %v3271
    %v3273 = vpop.f32.mrb[0].mxu0
    %3274 = vmatprep.mubr.bf16.mxu0 0
    %3275 = vmatmul.mubr.bf16.gmra.mrb[0].mxu0 %v2519
    %v3276 = vpop.f32.mrb[0].mxu0
    %v3277 = vadd.f32 %v2988, %v3276
    %v3278 = vpop.f32.mrb[0].mxu0
    %v3279 = vpop.f32.mrb[0].mxu0
    %v3280 = vadd.f32 %v2991, %v3279
    %v3281 = vpop.f32.mrb[0].mxu0
    %3282 = vmatprep.mubr.bf16.mxu0 0
    %3283 = vmatmul.mubr.bf16.gmra.mrb[0].mxu0 %v2520
    %v3284 = vpop.f32.mrb[0].mxu0
    %v3285 = vadd.f32 %v2996, %v3284
    %v3286 = vpop.f32.mrb[0].mxu0
    %v3287 = vpop.f32.mrb[0].mxu0
    %v3288 = vadd.f32 %v2999, %v3287
    %v3289 = vpop.f32.mrb[0].mxu0
    %3290 = vdwg.mxu0
    %v3291 = vadd.f32 %v3037, %v3040
    %v3292 = vadd.f32 %v3291, %v3045
    %v3293 = vadd.f32 %v3292, %v3048
    %v3294 = vadd.f32 %v3293, %v3053
    %v3295 = vadd.f32 %v3294, %v3056
    %v3296 = vadd.f32 %v3295, %v3061
    %v3297 = vadd.f32 %v3296, %v3064
    %v3298 = vadd.f32 %v3297, %v3069
    %v3299 = vadd.f32 %v3298, %v3072
    %v3300 = vadd.f32 %v3299, %v3077
    %v3301 = vadd.f32 %v3300, %v3080
    %v3302 = vadd.f32 %v3301, %v3085
    %v3303 = vadd.f32 %v3302, %v3088
    %v3304 = vadd.f32 %v3303, %v3093
    %v3305 = vadd.f32 %v3304, %v3096
    %v3306 = vadd.f32 %v3305, %v3101
    %v3307 = vadd.f32 %v3306, %v3104
    %v3308 = vadd.f32 %v3307, %v3109
    %v3309 = vadd.f32 %v3308, %v3112
    %v3310 = vadd.f32 %v3309, %v3117
    %v3311 = vadd.f32 %v3310, %v3120
    %v3312 = vadd.f32 %v3311, %v3125
    %v3313 = vadd.f32 %v3312, %v3128
    %v3314 = vadd.f32 %v3313, %v3133
    %v3315 = vadd.f32 %v3314, %v3136
    %v3316 = vadd.f32 %v3315, %v3141
    %v3317 = vadd.f32 %v3316, %v3144
    %v3318 = vadd.f32 %v3317, %v3149
    %v3319 = vadd.f32 %v3318, %v3152
    %v3320 = vadd.f32 %v3319, %v3157
    %v3321 = vadd.f32 %v3320, %v3160
    %v3322 = vadd.f32 %v3321, %v3165
    %v3323 = vadd.f32 %v3322, %v3168
    %v3324 = vadd.f32 %v3323, %v3173
    %v3325 = vadd.f32 %v3324, %v3176
    %v3326 = vadd.f32 %v3325, %v3181
    %v3327 = vadd.f32 %v3326, %v3184
    %v3328 = vadd.f32 %v3327, %v3189
    %v3329 = vadd.f32 %v3328, %v3192
    %v3330 = vadd.f32 %v3329, %v3197
    %v3331 = vadd.f32 %v3330, %v3200
    %v3332 = vadd.f32 %v3331, %v3205
    %v3333 = vadd.f32 %v3332, %v3208
    %v3334 = vadd.f32 %v3333, %v3213
    %v3335 = vadd.f32 %v3334, %v3216
    %v3336 = vadd.f32 %v3335, %v3221
    %v3337 = vadd.f32 %v3336, %v3224
    %v3338 = vadd.f32 %v3337, %v3229
    %v3339 = vadd.f32 %v3338, %v3232
    %v3340 = vadd.f32 %v3339, %v3237
    %v3341 = vadd.f32 %v3340, %v3240
    %v3342 = vadd.f32 %v3341, %v3245
    %v3343 = vadd.f32 %v3342, %v3248
    %v3344 = vadd.f32 %v3343, %v3253
    %v3345 = vadd.f32 %v3344, %v3256
    %v3346 = vadd.f32 %v3345, %v3261
    %v3347 = vadd.f32 %v3346, %v3264
    %v3348 = vadd.f32 %v3347, %v3269
    %v3349 = vadd.f32 %v3348, %v3272
    %v3350 = vadd.f32 %v3349, %v3277
    %v3351 = vadd.f32 %v3350, %v3280
    %v3352 = vadd.f32 %v3351, %v3285
    %v3353 = vadd.f32 %v3352, %v3288
    %v3354 = vrot.slane %v3353, 4
    %v3355 = vadd.f32 %v3353, %v3354
    %v3356 = vrot.slane %v3355, 2
    %v3357 = vadd.f32 %v3355, %v3356
    %v3358 = vrot.slane %v3357, 1
    %v3359 = vadd.f32 %v3357, %v3358
    %v3360 = vmul.f32 %v3359, 0.001953125
    %v3361 = vmul.f32 %v3037, %v3037
    %v3362 = vmul.f32 %v3040, %v3040
    %v3363 = vmul.f32 %v3045, %v3045
    %v3364 = vmul.f32 %v3048, %v3048
    %v3365 = vmul.f32 %v3053, %v3053
    %v3366 = vmul.f32 %v3056, %v3056
    %v3367 = vmul.f32 %v3061, %v3061
    %v3368 = vmul.f32 %v3064, %v3064
    %v3369 = vmul.f32 %v3069, %v3069
    %v3370 = vmul.f32 %v3072, %v3072
    %v3371 = vmul.f32 %v3077, %v3077
    %v3372 = vmul.f32 %v3080, %v3080
    %v3373 = vmul.f32 %v3085, %v3085
    %v3374 = vmul.f32 %v3088, %v3088
    %v3375 = vmul.f32 %v3093, %v3093
    %v3376 = vmul.f32 %v3096, %v3096
    %v3377 = vmul.f32 %v3101, %v3101
    %v3378 = vmul.f32 %v3104, %v3104
    %v3379 = vmul.f32 %v3109, %v3109
    %v3380 = vmul.f32 %v3112, %v3112
    %v3381 = vmul.f32 %v3117, %v3117
    %v3382 = vmul.f32 %v3120, %v3120
    %v3383 = vmul.f32 %v3125, %v3125
    %v3384 = vmul.f32 %v3128, %v3128
    %v3385 = vmul.f32 %v3133, %v3133
    %v3386 = vmul.f32 %v3136, %v3136
    %v3387 = vmul.f32 %v3141, %v3141
    %v3388 = vmul.f32 %v3144, %v3144
    %v3389 = vmul.f32 %v3149, %v3149
    %v3390 = vmul.f32 %v3152, %v3152
    %v3391 = vmul.f32 %v3157, %v3157
    %v3392 = vmul.f32 %v3160, %v3160
    %v3393 = vmul.f32 %v3165, %v3165
    %v3394 = vmul.f32 %v3168, %v3168
    %v3395 = vmul.f32 %v3173, %v3173
    %v3396 = vmul.f32 %v3176, %v3176
    %v3397 = vmul.f32 %v3181, %v3181
    %v3398 = vmul.f32 %v3184, %v3184
    %v3399 = vmul.f32 %v3189, %v3189
    %v3400 = vmul.f32 %v3192, %v3192
    %v3401 = vmul.f32 %v3197, %v3197
    %v3402 = vmul.f32 %v3200, %v3200
    %v3403 = vmul.f32 %v3205, %v3205
    %v3404 = vmul.f32 %v3208, %v3208
    %v3405 = vmul.f32 %v3213, %v3213
    %v3406 = vmul.f32 %v3216, %v3216
    %v3407 = vmul.f32 %v3221, %v3221
    %v3408 = vmul.f32 %v3224, %v3224
    %v3409 = vmul.f32 %v3229, %v3229
    %v3410 = vmul.f32 %v3232, %v3232
    %v3411 = vmul.f32 %v3237, %v3237
    %v3412 = vmul.f32 %v3240, %v3240
    %v3413 = vmul.f32 %v3245, %v3245
    %v3414 = vmul.f32 %v3248, %v3248
    %v3415 = vmul.f32 %v3253, %v3253
    %v3416 = vmul.f32 %v3256, %v3256
    %v3417 = vmul.f32 %v3261, %v3261
    %v3418 = vmul.f32 %v3264, %v3264
    %v3419 = vmul.f32 %v3269, %v3269
    %v3420 = vmul.f32 %v3272, %v3272
    %v3421 = vmul.f32 %v3277, %v3277
    %v3422 = vmul.f32 %v3280, %v3280
    %v3423 = vmul.f32 %v3285, %v3285
    %v3424 = vmul.f32 %v3288, %v3288
    %v3425 = vadd.f32 %v3361, %v3362
    %v3426 = vadd.f32 %v3425, %v3363
    %v3427 = vadd.f32 %v3426, %v3364
    %v3428 = vadd.f32 %v3427, %v3365
    %v3429 = vadd.f32 %v3428, %v3366
    %v3430 = vadd.f32 %v3429, %v3367
    %v3431 = vadd.f32 %v3430, %v3368
    %v3432 = vadd.f32 %v3431, %v3369
    %v3433 = vadd.f32 %v3432, %v3370
    %v3434 = vadd.f32 %v3433, %v3371
    %v3435 = vadd.f32 %v3434, %v3372
    %v3436 = vadd.f32 %v3435, %v3373
    %v3437 = vadd.f32 %v3436, %v3374
    %v3438 = vadd.f32 %v3437, %v3375
    %v3439 = vadd.f32 %v3438, %v3376
    %v3440 = vadd.f32 %v3439, %v3377
    %v3441 = vadd.f32 %v3440, %v3378
    %v3442 = vadd.f32 %v3441, %v3379
    %v3443 = vadd.f32 %v3442, %v3380
    %v3444 = vadd.f32 %v3443, %v3381
    %v3445 = vadd.f32 %v3444, %v3382
    %v3446 = vadd.f32 %v3445, %v3383
    %v3447 = vadd.f32 %v3446, %v3384
    %v3448 = vadd.f32 %v3447, %v3385
    %v3449 = vadd.f32 %v3448, %v3386
    %v3450 = vadd.f32 %v3449, %v3387
    %v3451 = vadd.f32 %v3450, %v3388
    %v3452 = vadd.f32 %v3451, %v3389
    %v3453 = vadd.f32 %v3452, %v3390
    %v3454 = vadd.f32 %v3453, %v3391
    %v3455 = vadd.f32 %v3454, %v3392
    %v3456 = vadd.f32 %v3455, %v3393
    %v3457 = vadd.f32 %v3456, %v3394
    %v3458 = vadd.f32 %v3457, %v3395
    %v3459 = vadd.f32 %v3458, %v3396
    %v3460 = vadd.f32 %v3459, %v3397
    %v3461 = vadd.f32 %v3460, %v3398
    %v3462 = vadd.f32 %v3461, %v3399
    %v3463 = vadd.f32 %v3462, %v3400
    %v3464 = vadd.f32 %v3463, %v3401
    %v3465 = vadd.f32 %v3464, %v3402
    %v3466 = vadd.f32 %v3465, %v3403
    %v3467 = vadd.f32 %v3466, %v3404
    %v3468 = vadd.f32 %v3467, %v3405
    %v3469 = vadd.f32 %v3468, %v3406
    %v3470 = vadd.f32 %v3469, %v3407
    %v3471 = vadd.f32 %v3470, %v3408
    %v3472 = vadd.f32 %v3471, %v3409
    %v3473 = vadd.f32 %v3472, %v3410
    %v3474 = vadd.f32 %v3473, %v3411
    %v3475 = vadd.f32 %v3474, %v3412
    %v3476 = vadd.f32 %v3475, %v3413
    %v3477 = vadd.f32 %v3476, %v3414
    %v3478 = vadd.f32 %v3477, %v3415
    %v3479 = vadd.f32 %v3478, %v3416
    %v3480 = vadd.f32 %v3479, %v3417
    %v3481 = vadd.f32 %v3480, %v3418
    %v3482 = vadd.f32 %v3481, %v3419
    %v3483 = vadd.f32 %v3482, %v3420
    %v3484 = vadd.f32 %v3483, %v3421
    %v3485 = vadd.f32 %v3484, %v3422
    %v3486 = vadd.f32 %v3485, %v3423
    %v3487 = vadd.f32 %v3486, %v3424
    %v3488 = vrot.slane %v3487, 4
    %v3489 = vadd.f32 %v3487, %v3488
    %v3490 = vrot.slane %v3489, 2
    %v3491 = vadd.f32 %v3489, %v3490
    %v3492 = vrot.slane %v3491, 1
    %v3493 = vadd.f32 %v3491, %v3492
    %v3494 = vmul.f32 %v3493, 0.001953125
    %v3495 = vmul.f32 %v3360, %v3360
    %v3496 = vsub.f32 %v3494, %v3495
    %v3497 = vmax.f32 %v3496, 0.0
    %v3498 = vld [vmem:[%s5] sm:$0x1]
    %v3499 = vadd.f32 %v3497, 1e-05
    %v3500 = vrsqrt.pop %v3499
    %v3501 = vmul.f32 %v3498, %v3500
    %v3502 = vld [vmem:[%s6] sm:$0x1]
    %v3503 = vmul.f32 %v3360, %v3501
    %v3504 = vsub.f32 %v3502, %v3503
    %v3506 = vlaneseq
    %v3507 = vshrl.u32 %v3506, 7
    %v3508 = vsub.s32 0, %v3507
    %v3509 = vrot.slane %v3501, %v3508
    %v3511 = vmul.f32 %v3037, %v3509
    %v3512 = vmul.f32 %v3040, %v3509
    %v3513 = vmul.f32 %v3045, %v3509
    %v3514 = vmul.f32 %v3048, %v3509
    %v3515 = vmul.f32 %v3053, %v3509
    %v3516 = vmul.f32 %v3056, %v3509
    %v3517 = vmul.f32 %v3061, %v3509
    %v3518 = vmul.f32 %v3064, %v3509
    %v3519 = vmul.f32 %v3069, %v3509
    %v3520 = vmul.f32 %v3072, %v3509
    %v3521 = vmul.f32 %v3077, %v3509
    %v3522 = vmul.f32 %v3080, %v3509
    %v3523 = vmul.f32 %v3085, %v3509
    %v3524 = vmul.f32 %v3088, %v3509
    %v3525 = vmul.f32 %v3093, %v3509
    %v3526 = vmul.f32 %v3096, %v3509
    %v3527 = vmul.f32 %v3101, %v3509
    %v3528 = vmul.f32 %v3104, %v3509
    %v3529 = vmul.f32 %v3109, %v3509
    %v3530 = vmul.f32 %v3112, %v3509
    %v3531 = vmul.f32 %v3117, %v3509
    %v3532 = vmul.f32 %v3120, %v3509
    %v3533 = vmul.f32 %v3125, %v3509
    %v3534 = vmul.f32 %v3128, %v3509
    %v3535 = vmul.f32 %v3133, %v3509
    %v3536 = vmul.f32 %v3136, %v3509
    %v3537 = vmul.f32 %v3141, %v3509
    %v3538 = vmul.f32 %v3144, %v3509
    %v3539 = vmul.f32 %v3149, %v3509
    %v3540 = vmul.f32 %v3152, %v3509
    %v3541 = vmul.f32 %v3157, %v3509
    %v3542 = vmul.f32 %v3160, %v3509
    %v3543 = vmul.f32 %v3165, %v3509
    %v3544 = vmul.f32 %v3168, %v3509
    %v3545 = vmul.f32 %v3173, %v3509
    %v3546 = vmul.f32 %v3176, %v3509
    %v3547 = vmul.f32 %v3181, %v3509
    %v3548 = vmul.f32 %v3184, %v3509
    %v3549 = vmul.f32 %v3189, %v3509
    %v3550 = vmul.f32 %v3192, %v3509
    %v3551 = vmul.f32 %v3197, %v3509
    %v3552 = vmul.f32 %v3200, %v3509
    %v3553 = vmul.f32 %v3205, %v3509
    %v3554 = vmul.f32 %v3208, %v3509
    %v3555 = vmul.f32 %v3213, %v3509
    %v3556 = vmul.f32 %v3216, %v3509
    %v3557 = vmul.f32 %v3221, %v3509
    %v3558 = vmul.f32 %v3224, %v3509
    %v3559 = vmul.f32 %v3229, %v3509
    %v3560 = vmul.f32 %v3232, %v3509
    %v3561 = vmul.f32 %v3237, %v3509
    %v3562 = vmul.f32 %v3240, %v3509
    %v3563 = vmul.f32 %v3245, %v3509
    %v3564 = vmul.f32 %v3248, %v3509
    %v3565 = vmul.f32 %v3253, %v3509
    %v3566 = vmul.f32 %v3256, %v3509
    %v3567 = vmul.f32 %v3261, %v3509
    %v3568 = vmul.f32 %v3264, %v3509
    %v3569 = vmul.f32 %v3269, %v3509
    %v3570 = vmul.f32 %v3272, %v3509
    %v3571 = vmul.f32 %v3277, %v3509
    %v3572 = vmul.f32 %v3280, %v3509
    %v3573 = vmul.f32 %v3285, %v3509
    %v3574 = vmul.f32 %v3288, %v3509
    %v3576 = vlaneseq
    %v3577 = vshrl.u32 %v3576, 7
    %v3578 = vsub.s32 0, %v3577
    %v3579 = vrot.slane %v3504, %v3578
    %v3581 = vadd.f32 %v3511, %v3579
    %v3582 = vadd.f32 %v3512, %v3579
    %v3583 = vadd.f32 %v3513, %v3579
    %v3584 = vadd.f32 %v3514, %v3579
    %v3585 = vadd.f32 %v3515, %v3579
    %v3586 = vadd.f32 %v3516, %v3579
    %v3587 = vadd.f32 %v3517, %v3579
    %v3588 = vadd.f32 %v3518, %v3579
    %v3589 = vadd.f32 %v3519, %v3579
    %v3590 = vadd.f32 %v3520, %v3579
    %v3591 = vadd.f32 %v3521, %v3579
    %v3592 = vadd.f32 %v3522, %v3579
    %v3593 = vadd.f32 %v3523, %v3579
    %v3594 = vadd.f32 %v3524, %v3579
    %v3595 = vadd.f32 %v3525, %v3579
    %v3596 = vadd.f32 %v3526, %v3579
    %v3597 = vadd.f32 %v3527, %v3579
    %v3598 = vadd.f32 %v3528, %v3579
    %v3599 = vadd.f32 %v3529, %v3579
    %v3600 = vadd.f32 %v3530, %v3579
    %v3601 = vadd.f32 %v3531, %v3579
    %v3602 = vadd.f32 %v3532, %v3579
    %v3603 = vadd.f32 %v3533, %v3579
    %v3604 = vadd.f32 %v3534, %v3579
    %v3605 = vadd.f32 %v3535, %v3579
    %v3606 = vadd.f32 %v3536, %v3579
    %v3607 = vadd.f32 %v3537, %v3579
    %v3608 = vadd.f32 %v3538, %v3579
    %v3609 = vadd.f32 %v3539, %v3579
    %v3610 = vadd.f32 %v3540, %v3579
    %v3611 = vadd.f32 %v3541, %v3579
    %v3612 = vadd.f32 %v3542, %v3579
    %v3613 = vadd.f32 %v3543, %v3579
    %v3614 = vadd.f32 %v3544, %v3579
    %v3615 = vadd.f32 %v3545, %v3579
    %v3616 = vadd.f32 %v3546, %v3579
    %v3617 = vadd.f32 %v3547, %v3579
    %v3618 = vadd.f32 %v3548, %v3579
    %v3619 = vadd.f32 %v3549, %v3579
    %v3620 = vadd.f32 %v3550, %v3579
    %v3621 = vadd.f32 %v3551, %v3579
    %v3622 = vadd.f32 %v3552, %v3579
    %v3623 = vadd.f32 %v3553, %v3579
    %v3624 = vadd.f32 %v3554, %v3579
    %v3625 = vadd.f32 %v3555, %v3579
    %v3626 = vadd.f32 %v3556, %v3579
    %v3627 = vadd.f32 %v3557, %v3579
    %v3628 = vadd.f32 %v3558, %v3579
    %v3629 = vadd.f32 %v3559, %v3579
    %v3630 = vadd.f32 %v3560, %v3579
    %v3631 = vadd.f32 %v3561, %v3579
    %v3632 = vadd.f32 %v3562, %v3579
    %v3633 = vadd.f32 %v3563, %v3579
    %v3634 = vadd.f32 %v3564, %v3579
    %v3635 = vadd.f32 %v3565, %v3579
    %v3636 = vadd.f32 %v3566, %v3579
    %v3637 = vadd.f32 %v3567, %v3579
    %v3638 = vadd.f32 %v3568, %v3579
    %v3639 = vadd.f32 %v3569, %v3579
    %v3640 = vadd.f32 %v3570, %v3579
    %v3641 = vadd.f32 %v3571, %v3579
    %v3642 = vadd.f32 %v3572, %v3579
    %v3643 = vadd.f32 %v3573, %v3579
    %v3644 = vadd.f32 %v3574, %v3579
    %v3645 = vmax.f32 %v3581, 0.0
    %v3646 = vmax.f32 %v3582, 0.0
    %v3647 = vmax.f32 %v3583, 0.0
    %v3648 = vmax.f32 %v3584, 0.0
    %v3649 = vmax.f32 %v3585, 0.0
    %v3650 = vmax.f32 %v3586, 0.0
    %v3651 = vmax.f32 %v3587, 0.0
    %v3652 = vmax.f32 %v3588, 0.0
    %v3653 = vmax.f32 %v3589, 0.0
    %v3654 = vmax.f32 %v3590, 0.0
    %v3655 = vmax.f32 %v3591, 0.0
    %v3656 = vmax.f32 %v3592, 0.0
    %v3657 = vmax.f32 %v3593, 0.0
    %v3658 = vmax.f32 %v3594, 0.0
    %v3659 = vmax.f32 %v3595, 0.0
    %v3660 = vmax.f32 %v3596, 0.0
    %v3661 = vmax.f32 %v3597, 0.0
    %v3662 = vmax.f32 %v3598, 0.0
    %v3663 = vmax.f32 %v3599, 0.0
    %v3664 = vmax.f32 %v3600, 0.0
    %v3665 = vmax.f32 %v3601, 0.0
    %v3666 = vmax.f32 %v3602, 0.0
    %v3667 = vmax.f32 %v3603, 0.0
    %v3668 = vmax.f32 %v3604, 0.0
    %v3669 = vmax.f32 %v3605, 0.0
    %v3670 = vmax.f32 %v3606, 0.0
    %v3671 = vmax.f32 %v3607, 0.0
    %v3672 = vmax.f32 %v3608, 0.0
    %v3673 = vmax.f32 %v3609, 0.0
    %v3674 = vmax.f32 %v3610, 0.0
    %v3675 = vmax.f32 %v3611, 0.0
    %v3676 = vmax.f32 %v3612, 0.0
    %v3677 = vmax.f32 %v3613, 0.0
    %v3678 = vmax.f32 %v3614, 0.0
    %v3679 = vmax.f32 %v3615, 0.0
    %v3680 = vmax.f32 %v3616, 0.0
    %v3681 = vmax.f32 %v3617, 0.0
    %v3682 = vmax.f32 %v3618, 0.0
    %v3683 = vmax.f32 %v3619, 0.0
    %v3684 = vmax.f32 %v3620, 0.0
    %v3685 = vmax.f32 %v3621, 0.0
    %v3686 = vmax.f32 %v3622, 0.0
    %v3687 = vmax.f32 %v3623, 0.0
    %v3688 = vmax.f32 %v3624, 0.0
    %v3689 = vmax.f32 %v3625, 0.0
    %v3690 = vmax.f32 %v3626, 0.0
    %v3691 = vmax.f32 %v3627, 0.0
    %v3692 = vmax.f32 %v3628, 0.0
    %v3693 = vmax.f32 %v3629, 0.0
    %v3694 = vmax.f32 %v3630, 0.0
    %v3695 = vmax.f32 %v3631, 0.0
    %v3696 = vmax.f32 %v3632, 0.0
    %v3697 = vmax.f32 %v3633, 0.0
    %v3698 = vmax.f32 %v3634, 0.0
    %v3699 = vmax.f32 %v3635, 0.0
    %v3700 = vmax.f32 %v3636, 0.0
    %v3701 = vmax.f32 %v3637, 0.0
    %v3702 = vmax.f32 %v3638, 0.0
    %v3703 = vmax.f32 %v3639, 0.0
    %v3704 = vmax.f32 %v3640, 0.0
    %v3705 = vmax.f32 %v3641, 0.0
    %v3706 = vmax.f32 %v3642, 0.0
    %v3707 = vmax.f32 %v3643, 0.0
    %v3708 = vmax.f32 %v3644, 0.0
    %v3709 = vpack.c.bf16 %v3646, %v3645
    %v3710 = vpack.c.bf16 %v3648, %v3647
    %v3711 = vpack.c.bf16 %v3650, %v3649
    %v3712 = vpack.c.bf16 %v3652, %v3651
    %v3713 = vpack.c.bf16 %v3654, %v3653
    %v3714 = vpack.c.bf16 %v3656, %v3655
    %v3715 = vpack.c.bf16 %v3658, %v3657
    %v3716 = vpack.c.bf16 %v3660, %v3659
    %v3717 = vpack.c.bf16 %v3662, %v3661
    %v3718 = vpack.c.bf16 %v3664, %v3663
    %v3719 = vpack.c.bf16 %v3666, %v3665
    %v3720 = vpack.c.bf16 %v3668, %v3667
    %v3721 = vpack.c.bf16 %v3670, %v3669
    %v3722 = vpack.c.bf16 %v3672, %v3671
    %v3723 = vpack.c.bf16 %v3674, %v3673
    %v3724 = vpack.c.bf16 %v3676, %v3675
    %v3725 = vpack.c.bf16 %v3678, %v3677
    %v3726 = vpack.c.bf16 %v3680, %v3679
    %v3727 = vpack.c.bf16 %v3682, %v3681
    %v3728 = vpack.c.bf16 %v3684, %v3683
    %v3729 = vpack.c.bf16 %v3686, %v3685
    %v3730 = vpack.c.bf16 %v3688, %v3687
    %v3731 = vpack.c.bf16 %v3690, %v3689
    %v3732 = vpack.c.bf16 %v3692, %v3691
    %v3733 = vpack.c.bf16 %v3694, %v3693
    %v3734 = vpack.c.bf16 %v3696, %v3695
    %v3735 = vpack.c.bf16 %v3698, %v3697
    %v3736 = vpack.c.bf16 %v3700, %v3699
    %v3737 = vpack.c.bf16 %v3702, %v3701
    %v3738 = vpack.c.bf16 %v3704, %v3703
    %v3739 = vpack.c.bf16 %v3706, %v3705
    %v3740 = vpack.c.bf16 %v3708, %v3707
    %v3742 = vshrl.u32 %v3709, 16
    %v3744 = vrot.slane %v3742, 7
    %v3745 = vshll.u32 %v3709, 16
    %v3747 = vor.u32 %v3744, %v3745
    %v3749 = vshrl.u32 %v3710, 16
    %v3751 = vrot.slane %v3749, 7
    %v3752 = vshll.u32 %v3710, 16
    %v3754 = vor.u32 %v3751, %v3752
    %v3756 = vshrl.u32 %v3711, 16
    %v3758 = vrot.slane %v3756, 7
    %v3759 = vshll.u32 %v3711, 16
    %v3761 = vor.u32 %v3758, %v3759
    %v3763 = vshrl.u32 %v3712, 16
    %v3765 = vrot.slane %v3763, 7
    %v3766 = vshll.u32 %v3712, 16
    %v3768 = vor.u32 %v3765, %v3766
    %v3770 = vshrl.u32 %v3713, 16
    %v3772 = vrot.slane %v3770, 7
    %v3773 = vshll.u32 %v3713, 16
    %v3775 = vor.u32 %v3772, %v3773
    %v3777 = vshrl.u32 %v3714, 16
    %v3779 = vrot.slane %v3777, 7
    %v3780 = vshll.u32 %v3714, 16
    %v3782 = vor.u32 %v3779, %v3780
    %v3784 = vshrl.u32 %v3715, 16
    %v3786 = vrot.slane %v3784, 7
    %v3787 = vshll.u32 %v3715, 16
    %v3789 = vor.u32 %v3786, %v3787
    %v3791 = vshrl.u32 %v3716, 16
    %v3793 = vrot.slane %v3791, 7
    %v3794 = vshll.u32 %v3716, 16
    %v3796 = vor.u32 %v3793, %v3794
    %v3798 = vshrl.u32 %v3717, 16
    %v3800 = vrot.slane %v3798, 7
    %v3801 = vshll.u32 %v3717, 16
    %v3803 = vor.u32 %v3800, %v3801
    %v3805 = vshrl.u32 %v3718, 16
    %v3807 = vrot.slane %v3805, 7
    %v3808 = vshll.u32 %v3718, 16
    %v3810 = vor.u32 %v3807, %v3808
    %v3812 = vshrl.u32 %v3719, 16
    %v3814 = vrot.slane %v3812, 7
    %v3815 = vshll.u32 %v3719, 16
    %v3817 = vor.u32 %v3814, %v3815
    %v3819 = vshrl.u32 %v3720, 16
    %v3821 = vrot.slane %v3819, 7
    %v3822 = vshll.u32 %v3720, 16
    %v3824 = vor.u32 %v3821, %v3822
    %v3826 = vshrl.u32 %v3721, 16
    %v3828 = vrot.slane %v3826, 7
    %v3829 = vshll.u32 %v3721, 16
    %v3831 = vor.u32 %v3828, %v3829
    %v3833 = vshrl.u32 %v3722, 16
    %v3835 = vrot.slane %v3833, 7
    %v3836 = vshll.u32 %v3722, 16
    %v3838 = vor.u32 %v3835, %v3836
    %v3840 = vshrl.u32 %v3723, 16
    %v3842 = vrot.slane %v3840, 7
    %v3843 = vshll.u32 %v3723, 16
    %v3845 = vor.u32 %v3842, %v3843
    %v3847 = vshrl.u32 %v3724, 16
    %v3849 = vrot.slane %v3847, 7
    %v3850 = vshll.u32 %v3724, 16
    %v3852 = vor.u32 %v3849, %v3850
    %v3854 = vshrl.u32 %v3725, 16
    %v3856 = vrot.slane %v3854, 7
    %v3857 = vshll.u32 %v3725, 16
    %v3859 = vor.u32 %v3856, %v3857
    %v3861 = vshrl.u32 %v3726, 16
    %v3863 = vrot.slane %v3861, 7
    %v3864 = vshll.u32 %v3726, 16
    %v3866 = vor.u32 %v3863, %v3864
    %v3868 = vshrl.u32 %v3727, 16
    %v3870 = vrot.slane %v3868, 7
    %v3871 = vshll.u32 %v3727, 16
    %v3873 = vor.u32 %v3870, %v3871
    %v3875 = vshrl.u32 %v3728, 16
    %v3877 = vrot.slane %v3875, 7
    %v3878 = vshll.u32 %v3728, 16
    %v3880 = vor.u32 %v3877, %v3878
    %v3882 = vshrl.u32 %v3729, 16
    %v3884 = vrot.slane %v3882, 7
    %v3885 = vshll.u32 %v3729, 16
    %v3887 = vor.u32 %v3884, %v3885
    %v3889 = vshrl.u32 %v3730, 16
    %v3891 = vrot.slane %v3889, 7
    %v3892 = vshll.u32 %v3730, 16
    %v3894 = vor.u32 %v3891, %v3892
    %v3896 = vshrl.u32 %v3731, 16
    %v3898 = vrot.slane %v3896, 7
    %v3899 = vshll.u32 %v3731, 16
    %v3901 = vor.u32 %v3898, %v3899
    %v3903 = vshrl.u32 %v3732, 16
    %v3905 = vrot.slane %v3903, 7
    %v3906 = vshll.u32 %v3732, 16
    %v3908 = vor.u32 %v3905, %v3906
    %v3910 = vshrl.u32 %v3733, 16
    %v3912 = vrot.slane %v3910, 7
    %v3913 = vshll.u32 %v3733, 16
    %v3915 = vor.u32 %v3912, %v3913
    %v3917 = vshrl.u32 %v3734, 16
    %v3919 = vrot.slane %v3917, 7
    %v3920 = vshll.u32 %v3734, 16
    %v3922 = vor.u32 %v3919, %v3920
    %v3924 = vshrl.u32 %v3735, 16
    %v3926 = vrot.slane %v3924, 7
    %v3927 = vshll.u32 %v3735, 16
    %v3929 = vor.u32 %v3926, %v3927
    %v3931 = vshrl.u32 %v3736, 16
    %v3933 = vrot.slane %v3931, 7
    %v3934 = vshll.u32 %v3736, 16
    %v3936 = vor.u32 %v3933, %v3934
    %v3938 = vshrl.u32 %v3737, 16
    %v3940 = vrot.slane %v3938, 7
    %v3941 = vshll.u32 %v3737, 16
    %v3943 = vor.u32 %v3940, %v3941
    %v3945 = vshrl.u32 %v3738, 16
    %v3947 = vrot.slane %v3945, 7
    %v3948 = vshll.u32 %v3738, 16
    %v3950 = vor.u32 %v3947, %v3948
    %v3952 = vshrl.u32 %v3739, 16
    %v3954 = vrot.slane %v3952, 7
    %v3955 = vshll.u32 %v3739, 16
    %v3957 = vor.u32 %v3954, %v3955
    %v3959 = vshrl.u32 %v3740, 16
    %v3961 = vrot.slane %v3959, 7
    %v3962 = vshll.u32 %v3740, 16
    %v3964 = vor.u32 %v3961, %v3962
    %v3997 = vsel %vm1868, 0, %v3747
    %v3998 = vsel %vm1868, 0, %v3754
    %v3999 = vsel %vm1868, 0, %v3761
    %v4000 = vsel %vm1868, 0, %v3768
    %v4001 = vsel %vm1868, 0, %v3775
    %v4002 = vsel %vm1868, 0, %v3782
    %v4003 = vsel %vm1868, 0, %v3789
    %v4004 = vsel %vm1868, 0, %v3796
    %v4005 = vsel %vm1868, 0, %v3803
    %v4006 = vsel %vm1868, 0, %v3810
    %v4007 = vsel %vm1868, 0, %v3817
    %v4008 = vsel %vm1868, 0, %v3824
    %v4009 = vsel %vm1868, 0, %v3831
    %v4010 = vsel %vm1868, 0, %v3838
    %v4011 = vsel %vm1868, 0, %v3845
    %v4012 = vsel %vm1868, 0, %v3852
    %v4013 = vsel %vm1868, 0, %v3859
    %v4014 = vsel %vm1868, 0, %v3866
    %v4015 = vsel %vm1868, 0, %v3873
    %v4016 = vsel %vm1868, 0, %v3880
    %v4017 = vsel %vm1868, 0, %v3887
    %v4018 = vsel %vm1868, 0, %v3894
    %v4019 = vsel %vm1868, 0, %v3901
    %v4020 = vsel %vm1868, 0, %v3908
    %v4021 = vsel %vm1868, 0, %v3915
    %v4022 = vsel %vm1868, 0, %v3922
    %v4023 = vsel %vm1868, 0, %v3929
    %v4024 = vsel %vm1868, 0, %v3936
    %v4025 = vsel %vm1868, 0, %v3943
    %v4026 = vsel %vm1868, 0, %v3950
    %v4027 = vsel %vm1868, 0, %v3957
    %v4028 = vsel %vm1868, 0, %v3964
    %v4029 = vrot.slane %v3745, 1
    %v4030 = vor.u32 %v3742, %v4029
    %v4031 = vrot.slane %v3752, 1
    %v4032 = vor.u32 %v3749, %v4031
    %v4033 = vrot.slane %v3759, 1
    %v4034 = vor.u32 %v3756, %v4033
    %v4035 = vrot.slane %v3766, 1
    %v4036 = vor.u32 %v3763, %v4035
    %v4037 = vrot.slane %v3773, 1
    %v4038 = vor.u32 %v3770, %v4037
    %v4039 = vrot.slane %v3780, 1
    %v4040 = vor.u32 %v3777, %v4039
    %v4041 = vrot.slane %v3787, 1
    %v4042 = vor.u32 %v3784, %v4041
    %v4043 = vrot.slane %v3794, 1
    %v4044 = vor.u32 %v3791, %v4043
    %v4045 = vrot.slane %v3801, 1
    %v4046 = vor.u32 %v3798, %v4045
    %v4047 = vrot.slane %v3808, 1
    %v4048 = vor.u32 %v3805, %v4047
    %v4049 = vrot.slane %v3815, 1
    %v4050 = vor.u32 %v3812, %v4049
    %v4051 = vrot.slane %v3822, 1
    %v4052 = vor.u32 %v3819, %v4051
    %v4053 = vrot.slane %v3829, 1
    %v4054 = vor.u32 %v3826, %v4053
    %v4055 = vrot.slane %v3836, 1
    %v4056 = vor.u32 %v3833, %v4055
    %v4057 = vrot.slane %v3843, 1
    %v4058 = vor.u32 %v3840, %v4057
    %v4059 = vrot.slane %v3850, 1
    %v4060 = vor.u32 %v3847, %v4059
    %v4061 = vrot.slane %v3857, 1
    %v4062 = vor.u32 %v3854, %v4061
    %v4063 = vrot.slane %v3864, 1
    %v4064 = vor.u32 %v3861, %v4063
    %v4065 = vrot.slane %v3871, 1
    %v4066 = vor.u32 %v3868, %v4065
    %v4067 = vrot.slane %v3878, 1
    %v4068 = vor.u32 %v3875, %v4067
    %v4069 = vrot.slane %v3885, 1
    %v4070 = vor.u32 %v3882, %v4069
    %v4071 = vrot.slane %v3892, 1
    %v4072 = vor.u32 %v3889, %v4071
    %v4073 = vrot.slane %v3899, 1
    %v4074 = vor.u32 %v3896, %v4073
    %v4075 = vrot.slane %v3906, 1
    %v4076 = vor.u32 %v3903, %v4075
    %v4077 = vrot.slane %v3913, 1
    %v4078 = vor.u32 %v3910, %v4077
    %v4079 = vrot.slane %v3920, 1
    %v4080 = vor.u32 %v3917, %v4079
    %v4081 = vrot.slane %v3927, 1
    %v4082 = vor.u32 %v3924, %v4081
    %v4083 = vrot.slane %v3934, 1
    %v4084 = vor.u32 %v3931, %v4083
    %v4085 = vrot.slane %v3941, 1
    %v4086 = vor.u32 %v3938, %v4085
    %v4087 = vrot.slane %v3948, 1
    %v4088 = vor.u32 %v3945, %v4087
    %v4089 = vrot.slane %v3955, 1
    %v4090 = vor.u32 %v3952, %v4089
    %v4091 = vrot.slane %v3962, 1
    %v4092 = vor.u32 %v3959, %v4091
    %v4125 = vsel %vm1999, %v4030, 0
    %v4126 = vsel %vm1999, %v4032, 0
    %v4127 = vsel %vm1999, %v4034, 0
    %v4128 = vsel %vm1999, %v4036, 0
    %v4129 = vsel %vm1999, %v4038, 0
    %v4130 = vsel %vm1999, %v4040, 0
    %v4131 = vsel %vm1999, %v4042, 0
    %v4132 = vsel %vm1999, %v4044, 0
    %v4133 = vsel %vm1999, %v4046, 0
    %v4134 = vsel %vm1999, %v4048, 0
    %v4135 = vsel %vm1999, %v4050, 0
    %v4136 = vsel %vm1999, %v4052, 0
    %v4137 = vsel %vm1999, %v4054, 0
    %v4138 = vsel %vm1999, %v4056, 0
    %v4139 = vsel %vm1999, %v4058, 0
    %v4140 = vsel %vm1999, %v4060, 0
    %v4141 = vsel %vm1999, %v4062, 0
    %v4142 = vsel %vm1999, %v4064, 0
    %v4143 = vsel %vm1999, %v4066, 0
    %v4144 = vsel %vm1999, %v4068, 0
    %v4145 = vsel %vm1999, %v4070, 0
    %v4146 = vsel %vm1999, %v4072, 0
    %v4147 = vsel %vm1999, %v4074, 0
    %v4148 = vsel %vm1999, %v4076, 0
    %v4149 = vsel %vm1999, %v4078, 0
    %v4150 = vsel %vm1999, %v4080, 0
    %v4151 = vsel %vm1999, %v4082, 0
    %v4152 = vsel %vm1999, %v4084, 0
    %v4153 = vsel %vm1999, %v4086, 0
    %v4154 = vsel %vm1999, %v4088, 0
    %v4155 = vsel %vm1999, %v4090, 0
    %v4156 = vsel %vm1999, %v4092, 0
    %4189 = vrot.lane.b32.xlu0 %v3709, 32
    %v4190 = vpop.permute.xlu0 %4189
    %4191 = vrot.lane.b32.xlu0 %v3710, 32
    %v4192 = vpop.permute.xlu0 %4191
    %4193 = vrot.lane.b32.xlu0 %v3711, 32
    %v4194 = vpop.permute.xlu0 %4193
    %4195 = vrot.lane.b32.xlu0 %v3712, 32
    %v4196 = vpop.permute.xlu0 %4195
    %4197 = vrot.lane.b32.xlu0 %v3713, 32
    %v4198 = vpop.permute.xlu0 %4197
    %4199 = vrot.lane.b32.xlu0 %v3714, 32
    %v4200 = vpop.permute.xlu0 %4199
    %4201 = vrot.lane.b32.xlu0 %v3715, 32
    %v4202 = vpop.permute.xlu0 %4201
    %4203 = vrot.lane.b32.xlu0 %v3716, 32
    %v4204 = vpop.permute.xlu0 %4203
    %4205 = vrot.lane.b32.xlu0 %v3717, 32
    %v4206 = vpop.permute.xlu0 %4205
    %4207 = vrot.lane.b32.xlu0 %v3718, 32
    %v4208 = vpop.permute.xlu0 %4207
    %4209 = vrot.lane.b32.xlu0 %v3719, 32
    %v4210 = vpop.permute.xlu0 %4209
    %4211 = vrot.lane.b32.xlu0 %v3720, 32
    %v4212 = vpop.permute.xlu0 %4211
    %4213 = vrot.lane.b32.xlu0 %v3721, 32
    %v4214 = vpop.permute.xlu0 %4213
    %4215 = vrot.lane.b32.xlu0 %v3722, 32
    %v4216 = vpop.permute.xlu0 %4215
    %4217 = vrot.lane.b32.xlu0 %v3723, 32
    %v4218 = vpop.permute.xlu0 %4217
    %4219 = vrot.lane.b32.xlu0 %v3724, 32
    %v4220 = vpop.permute.xlu0 %4219
    %4221 = vrot.lane.b32.xlu0 %v3725, 32
    %v4222 = vpop.permute.xlu0 %4221
    %4223 = vrot.lane.b32.xlu0 %v3726, 32
    %v4224 = vpop.permute.xlu0 %4223
    %4225 = vrot.lane.b32.xlu0 %v3727, 32
    %v4226 = vpop.permute.xlu0 %4225
    %4227 = vrot.lane.b32.xlu0 %v3728, 32
    %v4228 = vpop.permute.xlu0 %4227
    %4229 = vrot.lane.b32.xlu0 %v3729, 32
    %v4230 = vpop.permute.xlu0 %4229
    %4231 = vrot.lane.b32.xlu0 %v3730, 32
    %v4232 = vpop.permute.xlu0 %4231
    %4233 = vrot.lane.b32.xlu0 %v3731, 32
    %v4234 = vpop.permute.xlu0 %4233
    %4235 = vrot.lane.b32.xlu0 %v3732, 32
    %v4236 = vpop.permute.xlu0 %4235
    %4237 = vrot.lane.b32.xlu0 %v3733, 32
    %v4238 = vpop.permute.xlu0 %4237
    %4239 = vrot.lane.b32.xlu0 %v3734, 32
    %v4240 = vpop.permute.xlu0 %4239
    %4241 = vrot.lane.b32.xlu0 %v3735, 32
    %v4242 = vpop.permute.xlu0 %4241
    %4243 = vrot.lane.b32.xlu0 %v3736, 32
    %v4244 = vpop.permute.xlu0 %4243
    %4245 = vrot.lane.b32.xlu0 %v3737, 32
    %v4246 = vpop.permute.xlu0 %4245
    %4247 = vrot.lane.b32.xlu0 %v3738, 32
    %v4248 = vpop.permute.xlu0 %4247
    %4249 = vrot.lane.b32.xlu0 %v3739, 32
    %v4250 = vpop.permute.xlu0 %4249
    %4251 = vrot.lane.b32.xlu0 %v3740, 32
    %v4252 = vpop.permute.xlu0 %4251
    %4285 = vrot.lane.b32.xlu0 %v4125, 64
    %v4286 = vpop.permute.xlu0 %4285
    %4287 = vrot.lane.b32.xlu0 %v4126, 64
    %v4288 = vpop.permute.xlu0 %4287
    %4289 = vrot.lane.b32.xlu0 %v4127, 64
    %v4290 = vpop.permute.xlu0 %4289
    %4291 = vrot.lane.b32.xlu0 %v4128, 64
    %v4292 = vpop.permute.xlu0 %4291
    %4293 = vrot.lane.b32.xlu0 %v4129, 64
    %v4294 = vpop.permute.xlu0 %4293
    %4295 = vrot.lane.b32.xlu0 %v4130, 64
    %v4296 = vpop.permute.xlu0 %4295
    %4297 = vrot.lane.b32.xlu0 %v4131, 64
    %v4298 = vpop.permute.xlu0 %4297
    %4299 = vrot.lane.b32.xlu0 %v4132, 64
    %v4300 = vpop.permute.xlu0 %4299
    %4301 = vrot.lane.b32.xlu0 %v4133, 64
    %v4302 = vpop.permute.xlu0 %4301
    %4303 = vrot.lane.b32.xlu0 %v4134, 64
    %v4304 = vpop.permute.xlu0 %4303
    %4305 = vrot.lane.b32.xlu0 %v4135, 64
    %v4306 = vpop.permute.xlu0 %4305
    %4307 = vrot.lane.b32.xlu0 %v4136, 64
    %v4308 = vpop.permute.xlu0 %4307
    %4309 = vrot.lane.b32.xlu0 %v4137, 64
    %v4310 = vpop.permute.xlu0 %4309
    %4311 = vrot.lane.b32.xlu0 %v4138, 64
    %v4312 = vpop.permute.xlu0 %4311
    %4313 = vrot.lane.b32.xlu0 %v4139, 64
    %v4314 = vpop.permute.xlu0 %4313
    %4315 = vrot.lane.b32.xlu0 %v4140, 64
    %v4316 = vpop.permute.xlu0 %4315
    %4317 = vrot.lane.b32.xlu0 %v4141, 64
    %v4318 = vpop.permute.xlu0 %4317
    %4319 = vrot.lane.b32.xlu0 %v4142, 64
    %v4320 = vpop.permute.xlu0 %4319
    %4321 = vrot.lane.b32.xlu0 %v4143, 64
    %v4322 = vpop.permute.xlu0 %4321
    %4323 = vrot.lane.b32.xlu0 %v4144, 64
    %v4324 = vpop.permute.xlu0 %4323
    %4325 = vrot.lane.b32.xlu0 %v4145, 64
    %v4326 = vpop.permute.xlu0 %4325
    %4327 = vrot.lane.b32.xlu0 %v4146, 64
    %v4328 = vpop.permute.xlu0 %4327
    %4329 = vrot.lane.b32.xlu0 %v4147, 64
    %v4330 = vpop.permute.xlu0 %4329
    %4331 = vrot.lane.b32.xlu0 %v4148, 64
    %v4332 = vpop.permute.xlu0 %4331
    %4333 = vrot.lane.b32.xlu0 %v4149, 64
    %v4334 = vpop.permute.xlu0 %4333
    %4335 = vrot.lane.b32.xlu0 %v4150, 64
    %v4336 = vpop.permute.xlu0 %4335
    %4337 = vrot.lane.b32.xlu0 %v4151, 64
    %v4338 = vpop.permute.xlu0 %4337
    %4339 = vrot.lane.b32.xlu0 %v4152, 64
    %v4340 = vpop.permute.xlu0 %4339
    %4341 = vrot.lane.b32.xlu0 %v4153, 64
    %v4342 = vpop.permute.xlu0 %4341
    %4343 = vrot.lane.b32.xlu0 %v4154, 64
    %v4344 = vpop.permute.xlu0 %4343
    %4345 = vrot.lane.b32.xlu0 %v4155, 64
    %v4346 = vpop.permute.xlu0 %4345
    %4347 = vrot.lane.b32.xlu0 %v4156, 64
    %v4348 = vpop.permute.xlu0 %4347
    %v4351 = vsel %vm2321, %v3997, %v4190
    %v4354 = vsel %vm2321, %v3998, %v4192
    %v4357 = vsel %vm2321, %v3999, %v4194
    %v4360 = vsel %vm2321, %v4000, %v4196
    %v4363 = vsel %vm2321, %v4001, %v4198
    %v4366 = vsel %vm2321, %v4002, %v4200
    %v4369 = vsel %vm2321, %v4003, %v4202
    %v4372 = vsel %vm2321, %v4004, %v4204
    %v4375 = vsel %vm2321, %v4005, %v4206
    %v4378 = vsel %vm2321, %v4006, %v4208
    %v4381 = vsel %vm2321, %v4007, %v4210
    %v4384 = vsel %vm2321, %v4008, %v4212
    %v4387 = vsel %vm2321, %v4009, %v4214
    %v4390 = vsel %vm2321, %v4010, %v4216
    %v4393 = vsel %vm2321, %v4011, %v4218
    %v4396 = vsel %vm2321, %v4012, %v4220
    %v4399 = vsel %vm2321, %v4013, %v4222
    %v4402 = vsel %vm2321, %v4014, %v4224
    %v4405 = vsel %vm2321, %v4015, %v4226
    %v4408 = vsel %vm2321, %v4016, %v4228
    %v4411 = vsel %vm2321, %v4017, %v4230
    %v4414 = vsel %vm2321, %v4018, %v4232
    %v4417 = vsel %vm2321, %v4019, %v4234
    %v4420 = vsel %vm2321, %v4020, %v4236
    %v4423 = vsel %vm2321, %v4021, %v4238
    %v4426 = vsel %vm2321, %v4022, %v4240
    %v4429 = vsel %vm2321, %v4023, %v4242
    %v4432 = vsel %vm2321, %v4024, %v4244
    %v4435 = vsel %vm2321, %v4025, %v4246
    %v4438 = vsel %vm2321, %v4026, %v4248
    %v4441 = vsel %vm2321, %v4027, %v4250
    %v4444 = vsel %vm2321, %v4028, %v4252
    %vm4445 = vcmask 523264
    %v4447 = vsel %vm4445, %v4351, %v4286
    %v4449 = vsel %vm4445, %v4354, %v4288
    %v4451 = vsel %vm4445, %v4357, %v4290
    %v4453 = vsel %vm4445, %v4360, %v4292
    %v4455 = vsel %vm4445, %v4363, %v4294
    %v4457 = vsel %vm4445, %v4366, %v4296
    %v4459 = vsel %vm4445, %v4369, %v4298
    %v4461 = vsel %vm4445, %v4372, %v4300
    %v4463 = vsel %vm4445, %v4375, %v4302
    %v4465 = vsel %vm4445, %v4378, %v4304
    %v4467 = vsel %vm4445, %v4381, %v4306
    %v4469 = vsel %vm4445, %v4384, %v4308
    %v4471 = vsel %vm4445, %v4387, %v4310
    %v4473 = vsel %vm4445, %v4390, %v4312
    %v4475 = vsel %vm4445, %v4393, %v4314
    %v4477 = vsel %vm4445, %v4396, %v4316
    %v4479 = vsel %vm4445, %v4399, %v4318
    %v4481 = vsel %vm4445, %v4402, %v4320
    %v4483 = vsel %vm4445, %v4405, %v4322
    %v4485 = vsel %vm4445, %v4408, %v4324
    %v4487 = vsel %vm4445, %v4411, %v4326
    %v4489 = vsel %vm4445, %v4414, %v4328
    %v4491 = vsel %vm4445, %v4417, %v4330
    %v4493 = vsel %vm4445, %v4420, %v4332
    %v4495 = vsel %vm4445, %v4423, %v4334
    %v4497 = vsel %vm4445, %v4426, %v4336
    %v4499 = vsel %vm4445, %v4429, %v4338
    %v4501 = vsel %vm4445, %v4432, %v4340
    %v4503 = vsel %vm4445, %v4435, %v4342
    %v4505 = vsel %vm4445, %v4438, %v4344
    %v4507 = vsel %vm4445, %v4441, %v4346
    %v4509 = vsel %vm4445, %v4444, %v4348
    %vm4510 = vcmask 785408
    %v4511 = vsel %vm4510, %v4447, 0
    %v4513 = vsel %vm4510, %v4449, 0
    %v4515 = vsel %vm4510, %v4451, 0
    %v4517 = vsel %vm4510, %v4453, 0
    %v4519 = vsel %vm4510, %v4455, 0
    %v4521 = vsel %vm4510, %v4457, 0
    %v4523 = vsel %vm4510, %v4459, 0
    %v4525 = vsel %vm4510, %v4461, 0
    %v4527 = vsel %vm4510, %v4463, 0
    %v4529 = vsel %vm4510, %v4465, 0
    %v4531 = vsel %vm4510, %v4467, 0
    %v4533 = vsel %vm4510, %v4469, 0
    %v4535 = vsel %vm4510, %v4471, 0
    %v4537 = vsel %vm4510, %v4473, 0
    %v4539 = vsel %vm4510, %v4475, 0
    %v4541 = vsel %vm4510, %v4477, 0
    %v4543 = vsel %vm4510, %v4479, 0
    %v4545 = vsel %vm4510, %v4481, 0
    %v4547 = vsel %vm4510, %v4483, 0
    %v4549 = vsel %vm4510, %v4485, 0
    %v4551 = vsel %vm4510, %v4487, 0
    %v4553 = vsel %vm4510, %v4489, 0
    %v4555 = vsel %vm4510, %v4491, 0
    %v4557 = vsel %vm4510, %v4493, 0
    %v4559 = vsel %vm4510, %v4495, 0
    %v4561 = vsel %vm4510, %v4497, 0
    %v4563 = vsel %vm4510, %v4499, 0
    %v4565 = vsel %vm4510, %v4501, 0
    %v4567 = vsel %vm4510, %v4503, 0
    %v4569 = vsel %vm4510, %v4505, 0
    %v4571 = vsel %vm4510, %v4507, 0
    %v4573 = vsel %vm4510, %v4509, 0
    %s4575 = scalar_lea.vmem [#allocation3], 8
    %4576 = vst [vmem:[%s4575] sm:$0xff] %v4511
    %4577 = vst [vmem:[%s4575 + $0x8] sm:$0xff] %v4513
    %4578 = vst [vmem:[%s4575 + $0x10] sm:$0xff] %v4515
    %4579 = vst [vmem:[%s4575 + $0x18] sm:$0xff] %v4517
    %4580 = vst [vmem:[%s4575 + $0x20] sm:$0xff] %v4519
    %4581 = vst [vmem:[%s4575 + $0x28] sm:$0xff] %v4521
    %4582 = vst [vmem:[%s4575 + $0x30] sm:$0xff] %v4523
    %4583 = vst [vmem:[%s4575 + $0x38] sm:$0xff] %v4525
    %4584 = vst [vmem:[%s4575 + $0x40] sm:$0xff] %v4527
    %4585 = vst [vmem:[%s4575 + $0x48] sm:$0xff] %v4529
    %4586 = vst [vmem:[%s4575 + $0x50] sm:$0xff] %v4531
    %4587 = vst [vmem:[%s4575 + $0x58] sm:$0xff] %v4533
    %4588 = vst [vmem:[%s4575 + $0x60] sm:$0xff] %v4535
    %4589 = vst [vmem:[%s4575 + $0x68] sm:$0xff] %v4537
    %4590 = vst [vmem:[%s4575 + $0x70] sm:$0xff] %v4539
    %4591 = vst [vmem:[%s4575 + $0x78] sm:$0xff] %v4541
    %4592 = vst [vmem:[%s4575 + $0x90] sm:$0xff] %v4543
    %4593 = vst [vmem:[%s4575 + $0x98] sm:$0xff] %v4545
    %4594 = vst [vmem:[%s4575 + $0xa0] sm:$0xff] %v4547
    %4595 = vst [vmem:[%s4575 + $0xa8] sm:$0xff] %v4549
    %4596 = vst [vmem:[%s4575 + $0xb0] sm:$0xff] %v4551
    %4597 = vst [vmem:[%s4575 + $0xb8] sm:$0xff] %v4553
    %4598 = vst [vmem:[%s4575 + $0xc0] sm:$0xff] %v4555
    %4599 = vst [vmem:[%s4575 + $0xc8] sm:$0xff] %v4557
    %4600 = vst [vmem:[%s4575 + $0xd0] sm:$0xff] %v4559
    %4601 = vst [vmem:[%s4575 + $0xd8] sm:$0xff] %v4561
    %4602 = vst [vmem:[%s4575 + $0xe0] sm:$0xff] %v4563
    %4603 = vst [vmem:[%s4575 + $0xe8] sm:$0xff] %v4565
    %4604 = vst [vmem:[%s4575 + $0xf0] sm:$0xff] %v4567
    %4605 = vst [vmem:[%s4575 + $0xf8] sm:$0xff] %v4569
    %4606 = vst [vmem:[%s4575 + $0x100] sm:$0xff] %v4571
    %4607 = vst [vmem:[%s4575 + $0x108] sm:$0xff] %v4573
    %v4608 = vld [vmem:[#allocation3] sm:$0xff]
    %v4609 = vld [vmem:[#allocation3 + $0x8] sm:$0xff]
    %v4610 = vld [vmem:[#allocation3 + $0x10] sm:$0xff]
    %v4611 = vld [vmem:[#allocation3 + $0x18] sm:$0xff]
    %v4612 = vld [vmem:[#allocation3 + $0x20] sm:$0xff]
    %v4613 = vld [vmem:[#allocation3 + $0x28] sm:$0xff]
    %v4614 = vld [vmem:[#allocation3 + $0x30] sm:$0xff]
    %v4615 = vld [vmem:[#allocation3 + $0x38] sm:$0xff]
    %v4616 = vld [vmem:[#allocation3 + $0x40] sm:$0xff]
    %v4617 = vld [vmem:[#allocation3 + $0x48] sm:$0xff]
    %v4618 = vld [vmem:[#allocation3 + $0x50] sm:$0xff]
    %v4619 = vld [vmem:[#allocation3 + $0x58] sm:$0xff]
    %v4620 = vld [vmem:[#allocation3 + $0x60] sm:$0xff]
    %v4621 = vld [vmem:[#allocation3 + $0x68] sm:$0xff]
    %v4622 = vld [vmem:[#allocation3 + $0x70] sm:$0xff]
    %v4623 = vld [vmem:[#allocation3 + $0x78] sm:$0xff]
    %v4624 = vld [vmem:[#allocation3 + $0x80] sm:$0xff]
    %v4625 = vld [vmem:[#allocation3 + $0x88] sm:$0xff]
    %v4626 = vld [vmem:[#allocation3 + $0x90] sm:$0xff]
    %v4627 = vld [vmem:[#allocation3 + $0x98] sm:$0xff]
    %v4628 = vld [vmem:[#allocation3 + $0xa0] sm:$0xff]
    %v4629 = vld [vmem:[#allocation3 + $0xa8] sm:$0xff]
    %v4630 = vld [vmem:[#allocation3 + $0xb0] sm:$0xff]
    %v4631 = vld [vmem:[#allocation3 + $0xb8] sm:$0xff]
    %v4632 = vld [vmem:[#allocation3 + $0xc0] sm:$0xff]
    %v4633 = vld [vmem:[#allocation3 + $0xc8] sm:$0xff]
    %v4634 = vld [vmem:[#allocation3 + $0xd0] sm:$0xff]
    %v4635 = vld [vmem:[#allocation3 + $0xd8] sm:$0xff]
    %v4636 = vld [vmem:[#allocation3 + $0xe0] sm:$0xff]
    %v4637 = vld [vmem:[#allocation3 + $0xe8] sm:$0xff]
    %v4638 = vld [vmem:[#allocation3 + $0xf0] sm:$0xff]
    %v4639 = vld [vmem:[#allocation3 + $0xf8] sm:$0xff]
    %v4640 = vld [vmem:[#allocation3 + $0x100] sm:$0xff]
    %v4641 = vld [vmem:[#allocation3 + $0x108] sm:$0xff]
    %v4642 = vld [vmem:[#allocation3 + $0x110] sm:$0xff]
    %v4643 = vld [vmem:[#allocation3 + $0x118] sm:$0xff]
    %v4644 = vld [vmem:[#allocation10] sm:$0xf]
    %v4645 = vld [vmem:[#allocation10 + $0x4] sm:$0xf]
    %v4646 = vld [vmem:[#allocation10 + $0x8] sm:$0xf]
    %v4647 = vld [vmem:[#allocation10 + $0xc] sm:$0xf]
    %v4648 = vld [vmem:[#allocation10 + $0x10] sm:$0xf]
    %v4649 = vld [vmem:[#allocation10 + $0x14] sm:$0xf]
    %v4650 = vld [vmem:[#allocation10 + $0x18] sm:$0xf]
    %v4651 = vld [vmem:[#allocation10 + $0x1c] sm:$0xf]
    %v4652 = vld [vmem:[#allocation10 + $0x20] sm:$0xf]
    %v4653 = vld [vmem:[#allocation10 + $0x24] sm:$0xf]
    %v4654 = vld [vmem:[#allocation10 + $0x28] sm:$0xf]
    %v4655 = vld [vmem:[#allocation10 + $0x2c] sm:$0xf]
    %v4656 = vld [vmem:[#allocation10 + $0x30] sm:$0xf]
    %v4657 = vld [vmem:[#allocation10 + $0x34] sm:$0xf]
    %v4658 = vld [vmem:[#allocation10 + $0x38] sm:$0xf]
    %v4659 = vld [vmem:[#allocation10 + $0x3c] sm:$0xf]
    %v4660 = vld [vmem:[#allocation10 + $0x40] sm:$0xf]
    %v4661 = vld [vmem:[#allocation10 + $0x44] sm:$0xf]
    %v4662 = vld [vmem:[#allocation10 + $0x48] sm:$0xf]
    %v4663 = vld [vmem:[#allocation10 + $0x4c] sm:$0xf]
    %v4664 = vld [vmem:[#allocation10 + $0x50] sm:$0xf]
    %v4665 = vld [vmem:[#allocation10 + $0x54] sm:$0xf]
    %v4666 = vld [vmem:[#allocation10 + $0x58] sm:$0xf]
    %v4667 = vld [vmem:[#allocation10 + $0x5c] sm:$0xf]
    %v4668 = vld [vmem:[#allocation10 + $0x60] sm:$0xf]
    %v4669 = vld [vmem:[#allocation10 + $0x64] sm:$0xf]
    %v4670 = vld [vmem:[#allocation10 + $0x68] sm:$0xf]
    %v4671 = vld [vmem:[#allocation10 + $0x6c] sm:$0xf]
    %v4672 = vld [vmem:[#allocation10 + $0x70] sm:$0xf]
    %v4673 = vld [vmem:[#allocation10 + $0x74] sm:$0xf]
    %v4674 = vld [vmem:[#allocation10 + $0x78] sm:$0xf]
    %v4675 = vld [vmem:[#allocation10 + $0x7c] sm:$0xf]
    %v4676 = vld [vmem:[#allocation10 + $0x80] sm:$0xf]
    %v4677 = vld [vmem:[#allocation10 + $0x84] sm:$0xf]
    %v4678 = vld [vmem:[#allocation10 + $0x88] sm:$0xf]
    %v4679 = vld [vmem:[#allocation10 + $0x8c] sm:$0xf]
    %v4680 = vld [vmem:[#allocation10 + $0x90] sm:$0xf]
    %v4681 = vld [vmem:[#allocation10 + $0x94] sm:$0xf]
    %v4682 = vld [vmem:[#allocation10 + $0x98] sm:$0xf]
    %v4683 = vld [vmem:[#allocation10 + $0x9c] sm:$0xf]
    %v4684 = vld [vmem:[#allocation10 + $0xa0] sm:$0xf]
    %v4685 = vld [vmem:[#allocation10 + $0xa4] sm:$0xf]
    %v4686 = vld [vmem:[#allocation10 + $0xa8] sm:$0xf]
    %v4687 = vld [vmem:[#allocation10 + $0xac] sm:$0xf]
    %v4688 = vld [vmem:[#allocation10 + $0xb0] sm:$0xf]
    %v4689 = vld [vmem:[#allocation10 + $0xb4] sm:$0xf]
    %v4690 = vld [vmem:[#allocation10 + $0xb8] sm:$0xf]
    %v4691 = vld [vmem:[#allocation10 + $0xbc] sm:$0xf]
    %v4740 = vunpack.c.l.b16 %v4644
    %v4741 = vunpack.c.l.b16 %v4645
    %v4742 = vunpack.c.l.b16 %v4646
    %v4743 = vunpack.c.l.b16 %v4647
    %v4744 = vunpack.c.l.b16 %v4648
    %v4745 = vunpack.c.l.b16 %v4649
    %v4746 = vunpack.c.l.b16 %v4650
    %v4747 = vunpack.c.l.b16 %v4651
    %v4748 = vunpack.c.l.b16 %v4652
    %v4749 = vunpack.c.l.b16 %v4653
    %v4750 = vunpack.c.l.b16 %v4654
    %v4751 = vunpack.c.l.b16 %v4655
    %v4752 = vunpack.c.l.b16 %v4656
    %v4753 = vunpack.c.l.b16 %v4657
    %v4754 = vunpack.c.l.b16 %v4658
    %v4755 = vunpack.c.l.b16 %v4659
    %v4756 = vunpack.c.l.b16 %v4660
    %v4757 = vunpack.c.l.b16 %v4661
    %v4758 = vunpack.c.l.b16 %v4662
    %v4759 = vunpack.c.l.b16 %v4663
    %v4760 = vunpack.c.l.b16 %v4664
    %v4761 = vunpack.c.l.b16 %v4665
    %v4762 = vunpack.c.l.b16 %v4666
    %v4763 = vunpack.c.l.b16 %v4667
    %v4764 = vunpack.c.l.b16 %v4668
    %v4765 = vunpack.c.l.b16 %v4669
    %v4766 = vunpack.c.l.b16 %v4670
    %v4767 = vunpack.c.l.b16 %v4671
    %v4768 = vunpack.c.l.b16 %v4672
    %v4769 = vunpack.c.l.b16 %v4673
    %v4770 = vunpack.c.l.b16 %v4674
    %v4771 = vunpack.c.l.b16 %v4675
    %v4772 = vunpack.c.l.b16 %v4676
    %v4773 = vunpack.c.l.b16 %v4677
    %v4774 = vunpack.c.l.b16 %v4678
    %v4775 = vunpack.c.l.b16 %v4679
    %v4776 = vunpack.c.l.b16 %v4680
    %v4777 = vunpack.c.l.b16 %v4681
    %v4778 = vunpack.c.l.b16 %v4682
    %v4779 = vunpack.c.l.b16 %v4683
    %v4780 = vunpack.c.l.b16 %v4684
    %v4781 = vunpack.c.l.b16 %v4685
    %v4782 = vunpack.c.l.b16 %v4686
    %v4783 = vunpack.c.l.b16 %v4687
    %v4784 = vunpack.c.l.b16 %v4688
    %v4785 = vunpack.c.l.b16 %v4689
    %v4786 = vunpack.c.l.b16 %v4690
    %v4787 = vunpack.c.l.b16 %v4691
    %v4788 = vpack.c.b16 %v4741, %v4740
    %v4789 = vpack.c.b16 %v4743, %v4742
    %v4790 = vpack.c.b16 %v4745, %v4744
    %v4791 = vpack.c.b16 %v4747, %v4746
    %v4792 = vpack.c.b16 %v4749, %v4748
    %v4793 = vpack.c.b16 %v4751, %v4750
    %v4794 = vpack.c.b16 %v4753, %v4752
    %v4795 = vpack.c.b16 %v4755, %v4754
    %v4796 = vpack.c.b16 %v4757, %v4756
    %v4797 = vpack.c.b16 %v4759, %v4758
    %v4798 = vpack.c.b16 %v4761, %v4760
    %v4799 = vpack.c.b16 %v4763, %v4762
    %v4800 = vpack.c.b16 %v4765, %v4764
    %v4801 = vpack.c.b16 %v4767, %v4766
    %v4802 = vpack.c.b16 %v4769, %v4768
    %v4803 = vpack.c.b16 %v4771, %v4770
    %v4804 = vpack.c.b16 %v4773, %v4772
    %v4805 = vpack.c.b16 %v4775, %v4774
    %v4806 = vpack.c.b16 %v4777, %v4776
    %v4807 = vpack.c.b16 %v4779, %v4778
    %v4808 = vpack.c.b16 %v4781, %v4780
    %v4809 = vpack.c.b16 %v4783, %v4782
    %v4810 = vpack.c.b16 %v4785, %v4784
    %v4811 = vpack.c.b16 %v4787, %v4786
    %4836 = vmatprep.subr.bf16.mxu0 0
    %4837 = vmatpush1.bf16.msra.mxu0 %v4788
    %4838 = vmatprep.subr.bf16.mxu0 0
    %4839 = vmatpush1.bf16.msra.mxu0 %v4789
    %4840 = vmatprep.subr.bf16.mxu0 0
    %4841 = vmatpush1.bf16.msra.mxu0 %v4790
    %4842 = vmatprep.subr.bf16.mxu0 0
    %4843 = vmatpush1.bf16.msra.mxu0 %v4791
    %4844 = vmatprep.subr.bf16.mxu0 0
    %4845 = vmatpush1.bf16.msra.mxu0 %v4792
    %4846 = vmatprep.subr.bf16.mxu0 0
    %4847 = vmatpush1.bf16.msra.mxu0 %v4793
    %4848 = vmatprep.subr.bf16.mxu0 0
    %4849 = vmatpush1.bf16.msra.mxu0 %v4794
    %4850 = vmatprep.subr.bf16.mxu0 0
    %4851 = vmatpush1.bf16.msra.mxu0 %v4795
    %4852 = vmatprep.subr.bf16.mxu0 0
    %4853 = vmatpush1.bf16.msra.mxu0 %v4796
    %4854 = vmatprep.subr.bf16.mxu0 0
    %4855 = vmatpush1.bf16.msra.mxu0 %v4797
    %4856 = vmatprep.subr.bf16.mxu0 0
    %4857 = vmatpush1.bf16.msra.mxu0 %v4798
    %4858 = vmatprep.subr.bf16.mxu0 0
    %4859 = vmatpush1.bf16.msra.mxu0 %v4799
    %4860 = vmatprep.subr.bf16.mxu0 0
    %4861 = vmatpush1.bf16.msra.mxu0 %v4800
    %4862 = vmatprep.subr.bf16.mxu0 0
    %4863 = vmatpush1.bf16.msra.mxu0 %v4801
    %4864 = vmatprep.subr.bf16.mxu0 0
    %4865 = vmatpush1.bf16.msra.mxu0 %v4802
    %4866 = vmatprep.subr.bf16.mxu0 0
    %4867 = vmatpush1.bf16.msra.mxu0 %v4803
    %4868 = vmatprep.mubr.bf16.mxu0 %v4609
    %4869 = vmatmul.mubr.bf16.gmra.mrb[0].mxu0 %v4608
    %v4870 = vpop.f32.mrb[0].mxu0
    %v4871 = vadd.f32 0.0, %v4870
    %v4872 = vpop.f32.mrb[0].mxu0
    %v4873 = vpop.f32.mrb[0].mxu0
    %v4874 = vadd.f32 0.0, %v4873
    %v4875 = vpop.f32.mrb[0].mxu0
    %4876 = vmatprep.mubr.bf16.mxu0 %v4610
    %4877 = vmatmul.mubr.bf16.gmra.mrb[0].mxu0 %v4609
    %v4878 = vpop.f32.mrb[0].mxu0
    %v4879 = vadd.f32 0.0, %v4878
    %v4880 = vpop.f32.mrb[0].mxu0
    %v4881 = vpop.f32.mrb[0].mxu0
    %v4882 = vadd.f32 0.0, %v4881
    %v4883 = vpop.f32.mrb[0].mxu0
    %4884 = vmatprep.mubr.bf16.mxu0 %v4611
    %4885 = vmatmul.mubr.bf16.gmra.mrb[0].mxu0 %v4610
    %v4886 = vpop.f32.mrb[0].mxu0
    %v4887 = vadd.f32 0.0, %v4886
    %v4888 = vpop.f32.mrb[0].mxu0
    %v4889 = vpop.f32.mrb[0].mxu0
    %v4890 = vadd.f32 0.0, %v4889
    %v4891 = vpop.f32.mrb[0].mxu0
    %4892 = vmatprep.mubr.bf16.mxu0 %v4612
    %4893 = vmatmul.mubr.bf16.gmra.mrb[0].mxu0 %v4611
    %v4894 = vpop.f32.mrb[0].mxu0
    %v4895 = vadd.f32 0.0, %v4894
    %v4896 = vpop.f32.mrb[0].mxu0
    %v4897 = vpop.f32.mrb[0].mxu0
    %v4898 = vadd.f32 0.0, %v4897
    %v4899 = vpop.f32.mrb[0].mxu0
    %4900 = vmatprep.mubr.bf16.mxu0 %v4613
    %4901 = vmatmul.mubr.bf16.gmra.mrb[0].mxu0 %v4612
    %v4902 = vpop.f32.mrb[0].mxu0
    %v4903 = vadd.f32 0.0, %v4902
    %v4904 = vpop.f32.mrb[0].mxu0
    %v4905 = vpop.f32.mrb[0].mxu0
    %v4906 = vadd.f32 0.0, %v4905
    %v4907 = vpop.f32.mrb[0].mxu0
    %4908 = vmatprep.mubr.bf16.mxu0 %v4614
    %4909 = vmatmul.mubr.bf16.gmra.mrb[0].mxu0 %v4613
    %v4910 = vpop.f32.mrb[0].mxu0
    %v4911 = vadd.f32 0.0, %v4910
    %v4912 = vpop.f32.mrb[0].mxu0
    %v4913 = vpop.f32.mrb[0].mxu0
    %v4914 = vadd.f32 0.0, %v4913
    %v4915 = vpop.f32.mrb[0].mxu0
    %4916 = vmatprep.mubr.bf16.mxu0 %v4615
    %4917 = vmatmul.mubr.bf16.gmra.mrb[0].mxu0 %v4614
    %v4918 = vpop.f32.mrb[0].mxu0
    %v4919 = vadd.f32 0.0, %v4918
    %v4920 = vpop.f32.mrb[0].mxu0
    %v4921 = vpop.f32.mrb[0].mxu0
    %v4922 = vadd.f32 0.0, %v4921
    %v4923 = vpop.f32.mrb[0].mxu0
    %4924 = vmatprep.mubr.bf16.mxu0 %v4616
    %4925 = vmatmul.mubr.bf16.gmra.mrb[0].mxu0 %v4615
    %v4926 = vpop.f32.mrb[0].mxu0
    %v4927 = vadd.f32 0.0, %v4926
    %v4928 = vpop.f32.mrb[0].mxu0
    %v4929 = vpop.f32.mrb[0].mxu0
    %v4930 = vadd.f32 0.0, %v4929
    %v4931 = vpop.f32.mrb[0].mxu0
    %4932 = vmatprep.mubr.bf16.mxu0 %v4617
    %4933 = vmatmul.mubr.bf16.gmra.mrb[0].mxu0 %v4616
    %v4934 = vpop.f32.mrb[0].mxu0
    %v4935 = vadd.f32 0.0, %v4934
    %v4936 = vpop.f32.mrb[0].mxu0
    %v4937 = vpop.f32.mrb[0].mxu0
    %v4938 = vadd.f32 0.0, %v4937
    %v4939 = vpop.f32.mrb[0].mxu0
    %4940 = vmatprep.mubr.bf16.mxu0 %v4618
    %4941 = vmatmul.mubr.bf16.gmra.mrb[0].mxu0 %v4617
    %v4942 = vpop.f32.mrb[0].mxu0
    %v4943 = vadd.f32 0.0, %v4942
    %v4944 = vpop.f32.mrb[0].mxu0
    %v4945 = vpop.f32.mrb[0].mxu0
    %v4946 = vadd.f32 0.0, %v4945
    %v4947 = vpop.f32.mrb[0].mxu0
    %4948 = vmatprep.mubr.bf16.mxu0 %v4619
    %4949 = vmatmul.mubr.bf16.gmra.mrb[0].mxu0 %v4618
    %v4950 = vpop.f32.mrb[0].mxu0
    %v4951 = vadd.f32 0.0, %v4950
    %v4952 = vpop.f32.mrb[0].mxu0
    %v4953 = vpop.f32.mrb[0].mxu0
    %v4954 = vadd.f32 0.0, %v4953
    %v4955 = vpop.f32.mrb[0].mxu0
    %4956 = vmatprep.mubr.bf16.mxu0 %v4620
    %4957 = vmatmul.mubr.bf16.gmra.mrb[0].mxu0 %v4619
    %v4958 = vpop.f32.mrb[0].mxu0
    %v4959 = vadd.f32 0.0, %v4958
    %v4960 = vpop.f32.mrb[0].mxu0
    %v4961 = vpop.f32.mrb[0].mxu0
    %v4962 = vadd.f32 0.0, %v4961
    %v4963 = vpop.f32.mrb[0].mxu0
    %4964 = vmatprep.mubr.bf16.mxu0 %v4621
    %4965 = vmatmul.mubr.bf16.gmra.mrb[0].mxu0 %v4620
    %v4966 = vpop.f32.mrb[0].mxu0
    %v4967 = vadd.f32 0.0, %v4966
    %v4968 = vpop.f32.mrb[0].mxu0
    %v4969 = vpop.f32.mrb[0].mxu0
    %v4970 = vadd.f32 0.0, %v4969
    %v4971 = vpop.f32.mrb[0].mxu0
    %4972 = vmatprep.mubr.bf16.mxu0 %v4622
    %4973 = vmatmul.mubr.bf16.gmra.mrb[0].mxu0 %v4621
    %v4974 = vpop.f32.mrb[0].mxu0
    %v4975 = vadd.f32 0.0, %v4974
    %v4976 = vpop.f32.mrb[0].mxu0
    %v4977 = vpop.f32.mrb[0].mxu0
    %v4978 = vadd.f32 0.0, %v4977
    %v4979 = vpop.f32.mrb[0].mxu0
    %4980 = vmatprep.mubr.bf16.mxu0 %v4623
    %4981 = vmatmul.mubr.bf16.gmra.mrb[0].mxu0 %v4622
    %v4982 = vpop.f32.mrb[0].mxu0
    %v4983 = vadd.f32 0.0, %v4982
    %v4984 = vpop.f32.mrb[0].mxu0
    %v4985 = vpop.f32.mrb[0].mxu0
    %v4986 = vadd.f32 0.0, %v4985
    %v4987 = vpop.f32.mrb[0].mxu0
    %4988 = vmatprep.mubr.bf16.mxu0 %v4624
    %4989 = vmatmul.mubr.bf16.gmra.mrb[0].mxu0 %v4623
    %v4990 = vpop.f32.mrb[0].mxu0
    %v4991 = vadd.f32 0.0, %v4990
    %v4992 = vpop.f32.mrb[0].mxu0
    %v4993 = vpop.f32.mrb[0].mxu0
    %v4994 = vadd.f32 0.0, %v4993
    %v4995 = vpop.f32.mrb[0].mxu0
    %4996 = vmatprep.mubr.bf16.mxu0 %v4627
    %4997 = vmatmul.mubr.bf16.gmra.mrb[0].mxu0 %v4626
    %v4998 = vpop.f32.mrb[0].mxu0
    %v4999 = vadd.f32 0.0, %v4998
    %v5000 = vpop.f32.mrb[0].mxu0
    %v5001 = vpop.f32.mrb[0].mxu0
    %v5002 = vadd.f32 0.0, %v5001
    %v5003 = vpop.f32.mrb[0].mxu0
    %5004 = vmatprep.mubr.bf16.mxu0 %v4628
    %5005 = vmatmul.mubr.bf16.gmra.mrb[0].mxu0 %v4627
    %v5006 = vpop.f32.mrb[0].mxu0
    %v5007 = vadd.f32 0.0, %v5006
    %v5008 = vpop.f32.mrb[0].mxu0
    %v5009 = vpop.f32.mrb[0].mxu0
    %v5010 = vadd.f32 0.0, %v5009
    %v5011 = vpop.f32.mrb[0].mxu0
    %5012 = vmatprep.mubr.bf16.mxu0 %v4629
    %5013 = vmatmul.mubr.bf16.gmra.mrb[0].mxu0 %v4628
    %v5014 = vpop.f32.mrb[0].mxu0
    %v5015 = vadd.f32 0.0, %v5014
    %v5016 = vpop.f32.mrb[0].mxu0
    %v5017 = vpop.f32.mrb[0].mxu0
    %v5018 = vadd.f32 0.0, %v5017
    %v5019 = vpop.f32.mrb[0].mxu0
    %5020 = vmatprep.mubr.bf16.mxu0 %v4630
    %5021 = vmatmul.mubr.bf16.gmra.mrb[0].mxu0 %v4629
    %v5022 = vpop.f32.mrb[0].mxu0
    %v5023 = vadd.f32 0.0, %v5022
    %v5024 = vpop.f32.mrb[0].mxu0
    %v5025 = vpop.f32.mrb[0].mxu0
    %v5026 = vadd.f32 0.0, %v5025
    %v5027 = vpop.f32.mrb[0].mxu0
    %5028 = vmatprep.mubr.bf16.mxu0 %v4631
    %5029 = vmatmul.mubr.bf16.gmra.mrb[0].mxu0 %v4630
    %v5030 = vpop.f32.mrb[0].mxu0
    %v5031 = vadd.f32 0.0, %v5030
    %v5032 = vpop.f32.mrb[0].mxu0
    %v5033 = vpop.f32.mrb[0].mxu0
    %v5034 = vadd.f32 0.0, %v5033
    %v5035 = vpop.f32.mrb[0].mxu0
    %5036 = vmatprep.mubr.bf16.mxu0 %v4632
    %5037 = vmatmul.mubr.bf16.gmra.mrb[0].mxu0 %v4631
    %v5038 = vpop.f32.mrb[0].mxu0
    %v5039 = vadd.f32 0.0, %v5038
    %v5040 = vpop.f32.mrb[0].mxu0
    %v5041 = vpop.f32.mrb[0].mxu0
    %v5042 = vadd.f32 0.0, %v5041
    %v5043 = vpop.f32.mrb[0].mxu0
    %5044 = vmatprep.mubr.bf16.mxu0 %v4633
    %5045 = vmatmul.mubr.bf16.gmra.mrb[0].mxu0 %v4632
    %v5046 = vpop.f32.mrb[0].mxu0
    %v5047 = vadd.f32 0.0, %v5046
    %v5048 = vpop.f32.mrb[0].mxu0
    %v5049 = vpop.f32.mrb[0].mxu0
    %v5050 = vadd.f32 0.0, %v5049
    %v5051 = vpop.f32.mrb[0].mxu0
    %5052 = vmatprep.mubr.bf16.mxu0 %v4634
    %5053 = vmatmul.mubr.bf16.gmra.mrb[0].mxu0 %v4633
    %v5054 = vpop.f32.mrb[0].mxu0
    %v5055 = vadd.f32 0.0, %v5054
    %v5056 = vpop.f32.mrb[0].mxu0
    %v5057 = vpop.f32.mrb[0].mxu0
    %v5058 = vadd.f32 0.0, %v5057
    %v5059 = vpop.f32.mrb[0].mxu0
    %5060 = vmatprep.mubr.bf16.mxu0 %v4635
    %5061 = vmatmul.mubr.bf16.gmra.mrb[0].mxu0 %v4634
    %v5062 = vpop.f32.mrb[0].mxu0
    %v5063 = vadd.f32 0.0, %v5062
    %v5064 = vpop.f32.mrb[0].mxu0
    %v5065 = vpop.f32.mrb[0].mxu0
    %v5066 = vadd.f32 0.0, %v5065
    %v5067 = vpop.f32.mrb[0].mxu0
    %5068 = vmatprep.mubr.bf16.mxu0 %v4636
    %5069 = vmatmul.mubr.bf16.gmra.mrb[0].mxu0 %v4635
    %v5070 = vpop.f32.mrb[0].mxu0
    %v5071 = vadd.f32 0.0, %v5070
    %v5072 = vpop.f32.mrb[0].mxu0
    %v5073 = vpop.f32.mrb[0].mxu0
    %v5074 = vadd.f32 0.0, %v5073
    %v5075 = vpop.f32.mrb[0].mxu0
    %5076 = vmatprep.mubr.bf16.mxu0 %v4637
    %5077 = vmatmul.mubr.bf16.gmra.mrb[0].mxu0 %v4636
    %v5078 = vpop.f32.mrb[0].mxu0
    %v5079 = vadd.f32 0.0, %v5078
    %v5080 = vpop.f32.mrb[0].mxu0
    %v5081 = vpop.f32.mrb[0].mxu0
    %v5082 = vadd.f32 0.0, %v5081
    %v5083 = vpop.f32.mrb[0].mxu0
    %5084 = vmatprep.mubr.bf16.mxu0 %v4638
    %5085 = vmatmul.mubr.bf16.gmra.mrb[0].mxu0 %v4637
    %v5086 = vpop.f32.mrb[0].mxu0
    %v5087 = vadd.f32 0.0, %v5086
    %v5088 = vpop.f32.mrb[0].mxu0
    %v5089 = vpop.f32.mrb[0].mxu0
    %v5090 = vadd.f32 0.0, %v5089
    %v5091 = vpop.f32.mrb[0].mxu0
    %5092 = vmatprep.mubr.bf16.mxu0 %v4639
    %5093 = vmatmul.mubr.bf16.gmra.mrb[0].mxu0 %v4638
    %v5094 = vpop.f32.mrb[0].mxu0
    %v5095 = vadd.f32 0.0, %v5094
    %v5096 = vpop.f32.mrb[0].mxu0
    %v5097 = vpop.f32.mrb[0].mxu0
    %v5098 = vadd.f32 0.0, %v5097
    %v5099 = vpop.f32.mrb[0].mxu0
    %5100 = vmatprep.mubr.bf16.mxu0 %v4640
    %5101 = vmatmul.mubr.bf16.gmra.mrb[0].mxu0 %v4639
    %v5102 = vpop.f32.mrb[0].mxu0
    %v5103 = vadd.f32 0.0, %v5102
    %v5104 = vpop.f32.mrb[0].mxu0
    %v5105 = vpop.f32.mrb[0].mxu0
    %v5106 = vadd.f32 0.0, %v5105
    %v5107 = vpop.f32.mrb[0].mxu0
    %5108 = vmatprep.mubr.bf16.mxu0 %v4641
    %5109 = vmatmul.mubr.bf16.gmra.mrb[0].mxu0 %v4640
    %v5110 = vpop.f32.mrb[0].mxu0
    %v5111 = vadd.f32 0.0, %v5110
    %v5112 = vpop.f32.mrb[0].mxu0
    %v5113 = vpop.f32.mrb[0].mxu0
    %v5114 = vadd.f32 0.0, %v5113
    %v5115 = vpop.f32.mrb[0].mxu0
    %5116 = vmatprep.mubr.bf16.mxu0 %v4642
    %5117 = vmatmul.mubr.bf16.gmra.mrb[0].mxu0 %v4641
    %v5118 = vpop.f32.mrb[0].mxu0
    %v5119 = vadd.f32 0.0, %v5118
    %v5120 = vpop.f32.mrb[0].mxu0
    %v5121 = vpop.f32.mrb[0].mxu0
    %v5122 = vadd.f32 0.0, %v5121
    %v5123 = vpop.f32.mrb[0].mxu0
    %5124 = vdwg.mxu0
    %5125 = vmatprep.subr.bf16.mxu0 0
    %5126 = vmatpush1.bf16.msra.mxu0 %v4804
    %5127 = vmatprep.subr.bf16.mxu0 0
    %5128 = vmatpush1.bf16.msra.mxu0 %v4805
    %5129 = vmatprep.subr.bf16.mxu0 0
    %5130 = vmatpush1.bf16.msra.mxu0 %v4806
    %5131 = vmatprep.subr.bf16.mxu0 0
    %5132 = vmatpush1.bf16.msra.mxu0 %v4807
    %5133 = vmatprep.subr.bf16.mxu0 0
    %5134 = vmatpush1.bf16.msra.mxu0 %v4808
    %5135 = vmatprep.subr.bf16.mxu0 0
    %5136 = vmatpush1.bf16.msra.mxu0 %v4809
    %5137 = vmatprep.subr.bf16.mxu0 0
    %5138 = vmatpush1.bf16.msra.mxu0 %v4810
    %5139 = vmatprep.subr.bf16.mxu0 0
    %5140 = vmatpush1.bf16.msra.mxu0 %v4811
    %5141 = vmatprep.subr.bf16.mxu0 0
    %5142 = vmatpush1.bf16.msra.mxu0 0
    %5143 = vmatprep.subr.bf16.mxu0 0
    %5144 = vmatpush1.bf16.msra.mxu0 0
    %5145 = vmatprep.subr.bf16.mxu0 0
    %5146 = vmatpush1.bf16.msra.mxu0 0
    %5147 = vmatprep.subr.bf16.mxu0 0
    %5148 = vmatpush1.bf16.msra.mxu0 0
    %5149 = vmatprep.subr.bf16.mxu0 0
    %5150 = vmatpush1.bf16.msra.mxu0 0
    %5151 = vmatprep.subr.bf16.mxu0 0
    %5152 = vmatpush1.bf16.msra.mxu0 0
    %5153 = vmatprep.subr.bf16.mxu0 0
    %5154 = vmatpush1.bf16.msra.mxu0 0
    %5155 = vmatprep.subr.bf16.mxu0 0
    %5156 = vmatpush1.bf16.msra.mxu0 0
    %5157 = vmatprep.mubr.bf16.mxu0 0
    %5158 = vmatmul.mubr.bf16.gmra.mrb[0].mxu0 %v4610
    %v5159 = vpop.f32.mrb[0].mxu0
    %v5160 = vadd.f32 %v4871, %v5159
    %v5161 = vpop.f32.mrb[0].mxu0
    %v5162 = vpop.f32.mrb[0].mxu0
    %v5163 = vadd.f32 %v4874, %v5162
    %v5164 = vpop.f32.mrb[0].mxu0
    %5165 = vmatprep.mubr.bf16.mxu0 0
    %5166 = vmatmul.mubr.bf16.gmra.mrb[0].mxu0 %v4611
    %v5167 = vpop.f32.mrb[0].mxu0
    %v5168 = vadd.f32 %v4879, %v5167
    %v5169 = vpop.f32.mrb[0].mxu0
    %v5170 = vpop.f32.mrb[0].mxu0
    %v5171 = vadd.f32 %v4882, %v5170
    %v5172 = vpop.f32.mrb[0].mxu0
    %5173 = vmatprep.mubr.bf16.mxu0 0
    %5174 = vmatmul.mubr.bf16.gmra.mrb[0].mxu0 %v4612
    %v5175 = vpop.f32.mrb[0].mxu0
    %v5176 = vadd.f32 %v4887, %v5175
    %v5177 = vpop.f32.mrb[0].mxu0
    %v5178 = vpop.f32.mrb[0].mxu0
    %v5179 = vadd.f32 %v4890, %v5178
    %v5180 = vpop.f32.mrb[0].mxu0
    %5181 = vmatprep.mubr.bf16.mxu0 0
    %5182 = vmatmul.mubr.bf16.gmra.mrb[0].mxu0 %v4613
    %v5183 = vpop.f32.mrb[0].mxu0
    %v5184 = vadd.f32 %v4895, %v5183
    %v5185 = vpop.f32.mrb[0].mxu0
    %v5186 = vpop.f32.mrb[0].mxu0
    %v5187 = vadd.f32 %v4898, %v5186
    %v5188 = vpop.f32.mrb[0].mxu0
    %5189 = vmatprep.mubr.bf16.mxu0 0
    %5190 = vmatmul.mubr.bf16.gmra.mrb[0].mxu0 %v4614
    %v5191 = vpop.f32.mrb[0].mxu0
    %v5192 = vadd.f32 %v4903, %v5191
    %v5193 = vpop.f32.mrb[0].mxu0
    %v5194 = vpop.f32.mrb[0].mxu0
    %v5195 = vadd.f32 %v4906, %v5194
    %v5196 = vpop.f32.mrb[0].mxu0
    %5197 = vmatprep.mubr.bf16.mxu0 0
    %5198 = vmatmul.mubr.bf16.gmra.mrb[0].mxu0 %v4615
    %v5199 = vpop.f32.mrb[0].mxu0
    %v5200 = vadd.f32 %v4911, %v5199
    %v5201 = vpop.f32.mrb[0].mxu0
    %v5202 = vpop.f32.mrb[0].mxu0
    %v5203 = vadd.f32 %v4914, %v5202
    %v5204 = vpop.f32.mrb[0].mxu0
    %5205 = vmatprep.mubr.bf16.mxu0 0
    %5206 = vmatmul.mubr.bf16.gmra.mrb[0].mxu0 %v4616
    %v5207 = vpop.f32.mrb[0].mxu0
    %v5208 = vadd.f32 %v4919, %v5207
    %v5209 = vpop.f32.mrb[0].mxu0
    %v5210 = vpop.f32.mrb[0].mxu0
    %v5211 = vadd.f32 %v4922, %v5210
    %v5212 = vpop.f32.mrb[0].mxu0
    %5213 = vmatprep.mubr.bf16.mxu0 0
    %5214 = vmatmul.mubr.bf16.gmra.mrb[0].mxu0 %v4617
    %v5215 = vpop.f32.mrb[0].mxu0
    %v5216 = vadd.f32 %v4927, %v5215
    %v5217 = vpop.f32.mrb[0].mxu0
    %v5218 = vpop.f32.mrb[0].mxu0
    %v5219 = vadd.f32 %v4930, %v5218
    %v5220 = vpop.f32.mrb[0].mxu0
    %5221 = vmatprep.mubr.bf16.mxu0 0
    %5222 = vmatmul.mubr.bf16.gmra.mrb[0].mxu0 %v4618
    %v5223 = vpop.f32.mrb[0].mxu0
    %v5224 = vadd.f32 %v4935, %v5223
    %v5225 = vpop.f32.mrb[0].mxu0
    %v5226 = vpop.f32.mrb[0].mxu0
    %v5227 = vadd.f32 %v4938, %v5226
    %v5228 = vpop.f32.mrb[0].mxu0
    %5229 = vmatprep.mubr.bf16.mxu0 0
    %5230 = vmatmul.mubr.bf16.gmra.mrb[0].mxu0 %v4619
    %v5231 = vpop.f32.mrb[0].mxu0
    %v5232 = vadd.f32 %v4943, %v5231
    %v5233 = vpop.f32.mrb[0].mxu0
    %v5234 = vpop.f32.mrb[0].mxu0
    %v5235 = vadd.f32 %v4946, %v5234
    %v5236 = vpop.f32.mrb[0].mxu0
    %5237 = vmatprep.mubr.bf16.mxu0 0
    %5238 = vmatmul.mubr.bf16.gmra.mrb[0].mxu0 %v4620
    %v5239 = vpop.f32.mrb[0].mxu0
    %v5240 = vadd.f32 %v4951, %v5239
    %v5241 = vpop.f32.mrb[0].mxu0
    %v5242 = vpop.f32.mrb[0].mxu0
    %v5243 = vadd.f32 %v4954, %v5242
    %v5244 = vpop.f32.mrb[0].mxu0
    %5245 = vmatprep.mubr.bf16.mxu0 0
    %5246 = vmatmul.mubr.bf16.gmra.mrb[0].mxu0 %v4621
    %v5247 = vpop.f32.mrb[0].mxu0
    %v5248 = vadd.f32 %v4959, %v5247
    %v5249 = vpop.f32.mrb[0].mxu0
    %v5250 = vpop.f32.mrb[0].mxu0
    %v5251 = vadd.f32 %v4962, %v5250
    %v5252 = vpop.f32.mrb[0].mxu0
    %5253 = vmatprep.mubr.bf16.mxu0 0
    %5254 = vmatmul.mubr.bf16.gmra.mrb[0].mxu0 %v4622
    %v5255 = vpop.f32.mrb[0].mxu0
    %v5256 = vadd.f32 %v4967, %v5255
    %v5257 = vpop.f32.mrb[0].mxu0
    %v5258 = vpop.f32.mrb[0].mxu0
    %v5259 = vadd.f32 %v4970, %v5258
    %v5260 = vpop.f32.mrb[0].mxu0
    %5261 = vmatprep.mubr.bf16.mxu0 0
    %5262 = vmatmul.mubr.bf16.gmra.mrb[0].mxu0 %v4623
    %v5263 = vpop.f32.mrb[0].mxu0
    %v5264 = vadd.f32 %v4975, %v5263
    %v5265 = vpop.f32.mrb[0].mxu0
    %v5266 = vpop.f32.mrb[0].mxu0
    %v5267 = vadd.f32 %v4978, %v5266
    %v5268 = vpop.f32.mrb[0].mxu0
    %5269 = vmatprep.mubr.bf16.mxu0 0
    %5270 = vmatmul.mubr.bf16.gmra.mrb[0].mxu0 %v4624
    %v5271 = vpop.f32.mrb[0].mxu0
    %v5272 = vadd.f32 %v4983, %v5271
    %v5273 = vpop.f32.mrb[0].mxu0
    %v5274 = vpop.f32.mrb[0].mxu0
    %v5275 = vadd.f32 %v4986, %v5274
    %v5276 = vpop.f32.mrb[0].mxu0
    %5277 = vmatprep.mubr.bf16.mxu0 0
    %5278 = vmatmul.mubr.bf16.gmra.mrb[0].mxu0 %v4625
    %v5279 = vpop.f32.mrb[0].mxu0
    %v5280 = vadd.f32 %v4991, %v5279
    %v5281 = vpop.f32.mrb[0].mxu0
    %v5282 = vpop.f32.mrb[0].mxu0
    %v5283 = vadd.f32 %v4994, %v5282
    %v5284 = vpop.f32.mrb[0].mxu0
    %5285 = vmatprep.mubr.bf16.mxu0 0
    %5286 = vmatmul.mubr.bf16.gmra.mrb[0].mxu0 %v4628
    %v5287 = vpop.f32.mrb[0].mxu0
    %v5288 = vadd.f32 %v4999, %v5287
    %v5289 = vpop.f32.mrb[0].mxu0
    %v5290 = vpop.f32.mrb[0].mxu0
    %v5291 = vadd.f32 %v5002, %v5290
    %v5292 = vpop.f32.mrb[0].mxu0
    %5293 = vmatprep.mubr.bf16.mxu0 0
    %5294 = vmatmul.mubr.bf16.gmra.mrb[0].mxu0 %v4629
    %v5295 = vpop.f32.mrb[0].mxu0
    %v5296 = vadd.f32 %v5007, %v5295
    %v5297 = vpop.f32.mrb[0].mxu0
    %v5298 = vpop.f32.mrb[0].mxu0
    %v5299 = vadd.f32 %v5010, %v5298
    %v5300 = vpop.f32.mrb[0].mxu0
    %5301 = vmatprep.mubr.bf16.mxu0 0
    %5302 = vmatmul.mubr.bf16.gmra.mrb[0].mxu0 %v4630
    %v5303 = vpop.f32.mrb[0].mxu0
    %v5304 = vadd.f32 %v5015, %v5303
    %v5305 = vpop.f32.mrb[0].mxu0
    %v5306 = vpop.f32.mrb[0].mxu0
    %v5307 = vadd.f32 %v5018, %v5306
    %v5308 = vpop.f32.mrb[0].mxu0
    %5309 = vmatprep.mubr.bf16.mxu0 0
    %5310 = vmatmul.mubr.bf16.gmra.mrb[0].mxu0 %v4631
    %v5311 = vpop.f32.mrb[0].mxu0
    %v5312 = vadd.f32 %v5023, %v5311
    %v5313 = vpop.f32.mrb[0].mxu0
    %v5314 = vpop.f32.mrb[0].mxu0
    %v5315 = vadd.f32 %v5026, %v5314
    %v5316 = vpop.f32.mrb[0].mxu0
    %5317 = vmatprep.mubr.bf16.mxu0 0
    %5318 = vmatmul.mubr.bf16.gmra.mrb[0].mxu0 %v4632
    %v5319 = vpop.f32.mrb[0].mxu0
    %v5320 = vadd.f32 %v5031, %v5319
    %v5321 = vpop.f32.mrb[0].mxu0
    %v5322 = vpop.f32.mrb[0].mxu0
    %v5323 = vadd.f32 %v5034, %v5322
    %v5324 = vpop.f32.mrb[0].mxu0
    %5325 = vmatprep.mubr.bf16.mxu0 0
    %5326 = vmatmul.mubr.bf16.gmra.mrb[0].mxu0 %v4633
    %v5327 = vpop.f32.mrb[0].mxu0
    %v5328 = vadd.f32 %v5039, %v5327
    %v5329 = vpop.f32.mrb[0].mxu0
    %v5330 = vpop.f32.mrb[0].mxu0
    %v5331 = vadd.f32 %v5042, %v5330
    %v5332 = vpop.f32.mrb[0].mxu0
    %5333 = vmatprep.mubr.bf16.mxu0 0
    %5334 = vmatmul.mubr.bf16.gmra.mrb[0].mxu0 %v4634
    %v5335 = vpop.f32.mrb[0].mxu0
    %v5336 = vadd.f32 %v5047, %v5335
    %v5337 = vpop.f32.mrb[0].mxu0
    %v5338 = vpop.f32.mrb[0].mxu0
    %v5339 = vadd.f32 %v5050, %v5338
    %v5340 = vpop.f32.mrb[0].mxu0
    %5341 = vmatprep.mubr.bf16.mxu0 0
    %5342 = vmatmul.mubr.bf16.gmra.mrb[0].mxu0 %v4635
    %v5343 = vpop.f32.mrb[0].mxu0
    %v5344 = vadd.f32 %v5055, %v5343
    %v5345 = vpop.f32.mrb[0].mxu0
    %v5346 = vpop.f32.mrb[0].mxu0
    %v5347 = vadd.f32 %v5058, %v5346
    %v5348 = vpop.f32.mrb[0].mxu0
    %5349 = vmatprep.mubr.bf16.mxu0 0
    %5350 = vmatmul.mubr.bf16.gmra.mrb[0].mxu0 %v4636
    %v5351 = vpop.f32.mrb[0].mxu0
    %v5352 = vadd.f32 %v5063, %v5351
    %v5353 = vpop.f32.mrb[0].mxu0
    %v5354 = vpop.f32.mrb[0].mxu0
    %v5355 = vadd.f32 %v5066, %v5354
    %v5356 = vpop.f32.mrb[0].mxu0
    %5357 = vmatprep.mubr.bf16.mxu0 0
    %5358 = vmatmul.mubr.bf16.gmra.mrb[0].mxu0 %v4637
    %v5359 = vpop.f32.mrb[0].mxu0
    %v5360 = vadd.f32 %v5071, %v5359
    %v5361 = vpop.f32.mrb[0].mxu0
    %v5362 = vpop.f32.mrb[0].mxu0
    %v5363 = vadd.f32 %v5074, %v5362
    %v5364 = vpop.f32.mrb[0].mxu0
    %5365 = vmatprep.mubr.bf16.mxu0 0
    %5366 = vmatmul.mubr.bf16.gmra.mrb[0].mxu0 %v4638
    %v5367 = vpop.f32.mrb[0].mxu0
    %v5368 = vadd.f32 %v5079, %v5367
    %v5369 = vpop.f32.mrb[0].mxu0
    %v5370 = vpop.f32.mrb[0].mxu0
    %v5371 = vadd.f32 %v5082, %v5370
    %v5372 = vpop.f32.mrb[0].mxu0
    %5373 = vmatprep.mubr.bf16.mxu0 0
    %5374 = vmatmul.mubr.bf16.gmra.mrb[0].mxu0 %v4639
    %v5375 = vpop.f32.mrb[0].mxu0
    %v5376 = vadd.f32 %v5087, %v5375
    %v5377 = vpop.f32.mrb[0].mxu0
    %v5378 = vpop.f32.mrb[0].mxu0
    %v5379 = vadd.f32 %v5090, %v5378
    %v5380 = vpop.f32.mrb[0].mxu0
    %5381 = vmatprep.mubr.bf16.mxu0 0
    %5382 = vmatmul.mubr.bf16.gmra.mrb[0].mxu0 %v4640
    %v5383 = vpop.f32.mrb[0].mxu0
    %v5384 = vadd.f32 %v5095, %v5383
    %v5385 = vpop.f32.mrb[0].mxu0
    %v5386 = vpop.f32.mrb[0].mxu0
    %v5387 = vadd.f32 %v5098, %v5386
    %v5388 = vpop.f32.mrb[0].mxu0
    %5389 = vmatprep.mubr.bf16.mxu0 0
    %5390 = vmatmul.mubr.bf16.gmra.mrb[0].mxu0 %v4641
    %v5391 = vpop.f32.mrb[0].mxu0
    %v5392 = vadd.f32 %v5103, %v5391
    %v5393 = vpop.f32.mrb[0].mxu0
    %v5394 = vpop.f32.mrb[0].mxu0
    %v5395 = vadd.f32 %v5106, %v5394
    %v5396 = vpop.f32.mrb[0].mxu0
    %5397 = vmatprep.mubr.bf16.mxu0 0
    %5398 = vmatmul.mubr.bf16.gmra.mrb[0].mxu0 %v4642
    %v5399 = vpop.f32.mrb[0].mxu0
    %v5400 = vadd.f32 %v5111, %v5399
    %v5401 = vpop.f32.mrb[0].mxu0
    %v5402 = vpop.f32.mrb[0].mxu0
    %v5403 = vadd.f32 %v5114, %v5402
    %v5404 = vpop.f32.mrb[0].mxu0
    %5405 = vmatprep.mubr.bf16.mxu0 0
    %5406 = vmatmul.mubr.bf16.gmra.mrb[0].mxu0 %v4643
    %v5407 = vpop.f32.mrb[0].mxu0
    %v5408 = vadd.f32 %v5119, %v5407
    %v5409 = vpop.f32.mrb[0].mxu0
    %v5410 = vpop.f32.mrb[0].mxu0
    %v5411 = vadd.f32 %v5122, %v5410
    %v5412 = vpop.f32.mrb[0].mxu0
    %5413 = vdwg.mxu0
    %v5414 = vadd.f32 %v5160, %v5163
    %v5415 = vadd.f32 %v5414, %v5168
    %v5416 = vadd.f32 %v5415, %v5171
    %v5417 = vadd.f32 %v5416, %v5176
    %v5418 = vadd.f32 %v5417, %v5179
    %v5419 = vadd.f32 %v5418, %v5184
    %v5420 = vadd.f32 %v5419, %v5187
    %v5421 = vadd.f32 %v5420, %v5192
    %v5422 = vadd.f32 %v5421, %v5195
    %v5423 = vadd.f32 %v5422, %v5200
    %v5424 = vadd.f32 %v5423, %v5203
    %v5425 = vadd.f32 %v5424, %v5208
    %v5426 = vadd.f32 %v5425, %v5211
    %v5427 = vadd.f32 %v5426, %v5216
    %v5428 = vadd.f32 %v5427, %v5219
    %v5429 = vadd.f32 %v5428, %v5224
    %v5430 = vadd.f32 %v5429, %v5227
    %v5431 = vadd.f32 %v5430, %v5232
    %v5432 = vadd.f32 %v5431, %v5235
    %v5433 = vadd.f32 %v5432, %v5240
    %v5434 = vadd.f32 %v5433, %v5243
    %v5435 = vadd.f32 %v5434, %v5248
    %v5436 = vadd.f32 %v5435, %v5251
    %v5437 = vadd.f32 %v5436, %v5256
    %v5438 = vadd.f32 %v5437, %v5259
    %v5439 = vadd.f32 %v5438, %v5264
    %v5440 = vadd.f32 %v5439, %v5267
    %v5441 = vadd.f32 %v5440, %v5272
    %v5442 = vadd.f32 %v5441, %v5275
    %v5443 = vadd.f32 %v5442, %v5280
    %v5444 = vadd.f32 %v5443, %v5283
    %v5445 = vadd.f32 %v5444, %v5288
    %v5446 = vadd.f32 %v5445, %v5291
    %v5447 = vadd.f32 %v5446, %v5296
    %v5448 = vadd.f32 %v5447, %v5299
    %v5449 = vadd.f32 %v5448, %v5304
    %v5450 = vadd.f32 %v5449, %v5307
    %v5451 = vadd.f32 %v5450, %v5312
    %v5452 = vadd.f32 %v5451, %v5315
    %v5453 = vadd.f32 %v5452, %v5320
    %v5454 = vadd.f32 %v5453, %v5323
    %v5455 = vadd.f32 %v5454, %v5328
    %v5456 = vadd.f32 %v5455, %v5331
    %v5457 = vadd.f32 %v5456, %v5336
    %v5458 = vadd.f32 %v5457, %v5339
    %v5459 = vadd.f32 %v5458, %v5344
    %v5460 = vadd.f32 %v5459, %v5347
    %v5461 = vadd.f32 %v5460, %v5352
    %v5462 = vadd.f32 %v5461, %v5355
    %v5463 = vadd.f32 %v5462, %v5360
    %v5464 = vadd.f32 %v5463, %v5363
    %v5465 = vadd.f32 %v5464, %v5368
    %v5466 = vadd.f32 %v5465, %v5371
    %v5467 = vadd.f32 %v5466, %v5376
    %v5468 = vadd.f32 %v5467, %v5379
    %v5469 = vadd.f32 %v5468, %v5384
    %v5470 = vadd.f32 %v5469, %v5387
    %v5471 = vadd.f32 %v5470, %v5392
    %v5472 = vadd.f32 %v5471, %v5395
    %v5473 = vadd.f32 %v5472, %v5400
    %v5474 = vadd.f32 %v5473, %v5403
    %v5475 = vadd.f32 %v5474, %v5408
    %v5476 = vadd.f32 %v5475, %v5411
    %v5477 = vrot.slane %v5476, 4
    %v5478 = vadd.f32 %v5476, %v5477
    %v5479 = vrot.slane %v5478, 2
    %v5480 = vadd.f32 %v5478, %v5479
    %v5481 = vrot.slane %v5480, 1
    %v5482 = vadd.f32 %v5480, %v5481
    %v5483 = vmul.f32 %v5482, 0.001953125
    %v5484 = vmul.f32 %v5160, %v5160
    %v5485 = vmul.f32 %v5163, %v5163
    %v5486 = vmul.f32 %v5168, %v5168
    %v5487 = vmul.f32 %v5171, %v5171
    %v5488 = vmul.f32 %v5176, %v5176
    %v5489 = vmul.f32 %v5179, %v5179
    %v5490 = vmul.f32 %v5184, %v5184
    %v5491 = vmul.f32 %v5187, %v5187
    %v5492 = vmul.f32 %v5192, %v5192
    %v5493 = vmul.f32 %v5195, %v5195
    %v5494 = vmul.f32 %v5200, %v5200
    %v5495 = vmul.f32 %v5203, %v5203
    %v5496 = vmul.f32 %v5208, %v5208
    %v5497 = vmul.f32 %v5211, %v5211
    %v5498 = vmul.f32 %v5216, %v5216
    %v5499 = vmul.f32 %v5219, %v5219
    %v5500 = vmul.f32 %v5224, %v5224
    %v5501 = vmul.f32 %v5227, %v5227
    %v5502 = vmul.f32 %v5232, %v5232
    %v5503 = vmul.f32 %v5235, %v5235
    %v5504 = vmul.f32 %v5240, %v5240
    %v5505 = vmul.f32 %v5243, %v5243
    %v5506 = vmul.f32 %v5248, %v5248
    %v5507 = vmul.f32 %v5251, %v5251
    %v5508 = vmul.f32 %v5256, %v5256
    %v5509 = vmul.f32 %v5259, %v5259
    %v5510 = vmul.f32 %v5264, %v5264
    %v5511 = vmul.f32 %v5267, %v5267
    %v5512 = vmul.f32 %v5272, %v5272
    %v5513 = vmul.f32 %v5275, %v5275
    %v5514 = vmul.f32 %v5280, %v5280
    %v5515 = vmul.f32 %v5283, %v5283
    %v5516 = vmul.f32 %v5288, %v5288
    %v5517 = vmul.f32 %v5291, %v5291
    %v5518 = vmul.f32 %v5296, %v5296
    %v5519 = vmul.f32 %v5299, %v5299
    %v5520 = vmul.f32 %v5304, %v5304
    %v5521 = vmul.f32 %v5307, %v5307
    %v5522 = vmul.f32 %v5312, %v5312
    %v5523 = vmul.f32 %v5315, %v5315
    %v5524 = vmul.f32 %v5320, %v5320
    %v5525 = vmul.f32 %v5323, %v5323
    %v5526 = vmul.f32 %v5328, %v5328
    %v5527 = vmul.f32 %v5331, %v5331
    %v5528 = vmul.f32 %v5336, %v5336
    %v5529 = vmul.f32 %v5339, %v5339
    %v5530 = vmul.f32 %v5344, %v5344
    %v5531 = vmul.f32 %v5347, %v5347
    %v5532 = vmul.f32 %v5352, %v5352
    %v5533 = vmul.f32 %v5355, %v5355
    %v5534 = vmul.f32 %v5360, %v5360
    %v5535 = vmul.f32 %v5363, %v5363
    %v5536 = vmul.f32 %v5368, %v5368
    %v5537 = vmul.f32 %v5371, %v5371
    %v5538 = vmul.f32 %v5376, %v5376
    %v5539 = vmul.f32 %v5379, %v5379
    %v5540 = vmul.f32 %v5384, %v5384
    %v5541 = vmul.f32 %v5387, %v5387
    %v5542 = vmul.f32 %v5392, %v5392
    %v5543 = vmul.f32 %v5395, %v5395
    %v5544 = vmul.f32 %v5400, %v5400
    %v5545 = vmul.f32 %v5403, %v5403
    %v5546 = vmul.f32 %v5408, %v5408
    %v5547 = vmul.f32 %v5411, %v5411
    %v5548 = vadd.f32 %v5484, %v5485
    %v5549 = vadd.f32 %v5548, %v5486
    %v5550 = vadd.f32 %v5549, %v5487
    %v5551 = vadd.f32 %v5550, %v5488
    %v5552 = vadd.f32 %v5551, %v5489
    %v5553 = vadd.f32 %v5552, %v5490
    %v5554 = vadd.f32 %v5553, %v5491
    %v5555 = vadd.f32 %v5554, %v5492
    %v5556 = vadd.f32 %v5555, %v5493
    %v5557 = vadd.f32 %v5556, %v5494
    %v5558 = vadd.f32 %v5557, %v5495
    %v5559 = vadd.f32 %v5558, %v5496
    %v5560 = vadd.f32 %v5559, %v5497
    %v5561 = vadd.f32 %v5560, %v5498
    %v5562 = vadd.f32 %v5561, %v5499
    %v5563 = vadd.f32 %v5562, %v5500
    %v5564 = vadd.f32 %v5563, %v5501
    %v5565 = vadd.f32 %v5564, %v5502
    %v5566 = vadd.f32 %v5565, %v5503
    %v5567 = vadd.f32 %v5566, %v5504
    %v5568 = vadd.f32 %v5567, %v5505
    %v5569 = vadd.f32 %v5568, %v5506
    %v5570 = vadd.f32 %v5569, %v5507
    %v5571 = vadd.f32 %v5570, %v5508
    %v5572 = vadd.f32 %v5571, %v5509
    %v5573 = vadd.f32 %v5572, %v5510
    %v5574 = vadd.f32 %v5573, %v5511
    %v5575 = vadd.f32 %v5574, %v5512
    %v5576 = vadd.f32 %v5575, %v5513
    %v5577 = vadd.f32 %v5576, %v5514
    %v5578 = vadd.f32 %v5577, %v5515
    %v5579 = vadd.f32 %v5578, %v5516
    %v5580 = vadd.f32 %v5579, %v5517
    %v5581 = vadd.f32 %v5580, %v5518
    %v5582 = vadd.f32 %v5581, %v5519
    %v5583 = vadd.f32 %v5582, %v5520
    %v5584 = vadd.f32 %v5583, %v5521
    %v5585 = vadd.f32 %v5584, %v5522
    %v5586 = vadd.f32 %v5585, %v5523
    %v5587 = vadd.f32 %v5586, %v5524
    %v5588 = vadd.f32 %v5587, %v5525
    %v5589 = vadd.f32 %v5588, %v5526
    %v5590 = vadd.f32 %v5589, %v5527
    %v5591 = vadd.f32 %v5590, %v5528
    %v5592 = vadd.f32 %v5591, %v5529
    %v5593 = vadd.f32 %v5592, %v5530
    %v5594 = vadd.f32 %v5593, %v5531
    %v5595 = vadd.f32 %v5594, %v5532
    %v5596 = vadd.f32 %v5595, %v5533
    %v5597 = vadd.f32 %v5596, %v5534
    %v5598 = vadd.f32 %v5597, %v5535
    %v5599 = vadd.f32 %v5598, %v5536
    %v5600 = vadd.f32 %v5599, %v5537
    %v5601 = vadd.f32 %v5600, %v5538
    %v5602 = vadd.f32 %v5601, %v5539
    %v5603 = vadd.f32 %v5602, %v5540
    %v5604 = vadd.f32 %v5603, %v5541
    %v5605 = vadd.f32 %v5604, %v5542
    %v5606 = vadd.f32 %v5605, %v5543
    %v5607 = vadd.f32 %v5606, %v5544
    %v5608 = vadd.f32 %v5607, %v5545
    %v5609 = vadd.f32 %v5608, %v5546
    %v5610 = vadd.f32 %v5609, %v5547
    %v5611 = vrot.slane %v5610, 4
    %v5612 = vadd.f32 %v5610, %v5611
    %v5613 = vrot.slane %v5612, 2
    %v5614 = vadd.f32 %v5612, %v5613
    %v5615 = vrot.slane %v5614, 1
    %v5616 = vadd.f32 %v5614, %v5615
    %v5617 = vmul.f32 %v5616, 0.001953125
    %v5618 = vmul.f32 %v5483, %v5483
    %v5619 = vsub.f32 %v5617, %v5618
    %v5620 = vmax.f32 %v5619, 0.0
    %v5621 = vld [vmem:[%s8] sm:$0x1]
    %v5622 = vadd.f32 %v5620, 1e-05
    %v5623 = vrsqrt.pop %v5622
    %v5624 = vmul.f32 %v5621, %v5623
    %v5625 = vld [vmem:[%s9] sm:$0x1]
    %v5626 = vmul.f32 %v5483, %v5624
    %v5627 = vsub.f32 %v5625, %v5626
    %v5629 = vlaneseq
    %v5630 = vshrl.u32 %v5629, 7
    %v5631 = vsub.s32 0, %v5630
    %v5632 = vrot.slane %v5624, %v5631
    %v5634 = vmul.f32 %v5160, %v5632
    %v5635 = vmul.f32 %v5163, %v5632
    %v5636 = vmul.f32 %v5168, %v5632
    %v5637 = vmul.f32 %v5171, %v5632
    %v5638 = vmul.f32 %v5176, %v5632
    %v5639 = vmul.f32 %v5179, %v5632
    %v5640 = vmul.f32 %v5184, %v5632
    %v5641 = vmul.f32 %v5187, %v5632
    %v5642 = vmul.f32 %v5192, %v5632
    %v5643 = vmul.f32 %v5195, %v5632
    %v5644 = vmul.f32 %v5200, %v5632
    %v5645 = vmul.f32 %v5203, %v5632
    %v5646 = vmul.f32 %v5208, %v5632
    %v5647 = vmul.f32 %v5211, %v5632
    %v5648 = vmul.f32 %v5216, %v5632
    %v5649 = vmul.f32 %v5219, %v5632
    %v5650 = vmul.f32 %v5224, %v5632
    %v5651 = vmul.f32 %v5227, %v5632
    %v5652 = vmul.f32 %v5232, %v5632
    %v5653 = vmul.f32 %v5235, %v5632
    %v5654 = vmul.f32 %v5240, %v5632
    %v5655 = vmul.f32 %v5243, %v5632
    %v5656 = vmul.f32 %v5248, %v5632
    %v5657 = vmul.f32 %v5251, %v5632
    %v5658 = vmul.f32 %v5256, %v5632
    %v5659 = vmul.f32 %v5259, %v5632
    %v5660 = vmul.f32 %v5264, %v5632
    %v5661 = vmul.f32 %v5267, %v5632
    %v5662 = vmul.f32 %v5272, %v5632
    %v5663 = vmul.f32 %v5275, %v5632
    %v5664 = vmul.f32 %v5280, %v5632
    %v5665 = vmul.f32 %v5283, %v5632
    %v5666 = vmul.f32 %v5288, %v5632
    %v5667 = vmul.f32 %v5291, %v5632
    %v5668 = vmul.f32 %v5296, %v5632
    %v5669 = vmul.f32 %v5299, %v5632
    %v5670 = vmul.f32 %v5304, %v5632
    %v5671 = vmul.f32 %v5307, %v5632
    %v5672 = vmul.f32 %v5312, %v5632
    %v5673 = vmul.f32 %v5315, %v5632
    %v5674 = vmul.f32 %v5320, %v5632
    %v5675 = vmul.f32 %v5323, %v5632
    %v5676 = vmul.f32 %v5328, %v5632
    %v5677 = vmul.f32 %v5331, %v5632
    %v5678 = vmul.f32 %v5336, %v5632
    %v5679 = vmul.f32 %v5339, %v5632
    %v5680 = vmul.f32 %v5344, %v5632
    %v5681 = vmul.f32 %v5347, %v5632
    %v5682 = vmul.f32 %v5352, %v5632
    %v5683 = vmul.f32 %v5355, %v5632
    %v5684 = vmul.f32 %v5360, %v5632
    %v5685 = vmul.f32 %v5363, %v5632
    %v5686 = vmul.f32 %v5368, %v5632
    %v5687 = vmul.f32 %v5371, %v5632
    %v5688 = vmul.f32 %v5376, %v5632
    %v5689 = vmul.f32 %v5379, %v5632
    %v5690 = vmul.f32 %v5384, %v5632
    %v5691 = vmul.f32 %v5387, %v5632
    %v5692 = vmul.f32 %v5392, %v5632
    %v5693 = vmul.f32 %v5395, %v5632
    %v5694 = vmul.f32 %v5400, %v5632
    %v5695 = vmul.f32 %v5403, %v5632
    %v5696 = vmul.f32 %v5408, %v5632
    %v5697 = vmul.f32 %v5411, %v5632
    %v5699 = vlaneseq
    %v5700 = vshrl.u32 %v5699, 7
    %v5701 = vsub.s32 0, %v5700
    %v5702 = vrot.slane %v5627, %v5701
    %v5704 = vadd.f32 %v5634, %v5702
    %v5705 = vadd.f32 %v5635, %v5702
    %v5706 = vadd.f32 %v5636, %v5702
    %v5707 = vadd.f32 %v5637, %v5702
    %v5708 = vadd.f32 %v5638, %v5702
    %v5709 = vadd.f32 %v5639, %v5702
    %v5710 = vadd.f32 %v5640, %v5702
    %v5711 = vadd.f32 %v5641, %v5702
    %v5712 = vadd.f32 %v5642, %v5702
    %v5713 = vadd.f32 %v5643, %v5702
    %v5714 = vadd.f32 %v5644, %v5702
    %v5715 = vadd.f32 %v5645, %v5702
    %v5716 = vadd.f32 %v5646, %v5702
    %v5717 = vadd.f32 %v5647, %v5702
    %v5718 = vadd.f32 %v5648, %v5702
    %v5719 = vadd.f32 %v5649, %v5702
    %v5720 = vadd.f32 %v5650, %v5702
    %v5721 = vadd.f32 %v5651, %v5702
    %v5722 = vadd.f32 %v5652, %v5702
    %v5723 = vadd.f32 %v5653, %v5702
    %v5724 = vadd.f32 %v5654, %v5702
    %v5725 = vadd.f32 %v5655, %v5702
    %v5726 = vadd.f32 %v5656, %v5702
    %v5727 = vadd.f32 %v5657, %v5702
    %v5728 = vadd.f32 %v5658, %v5702
    %v5729 = vadd.f32 %v5659, %v5702
    %v5730 = vadd.f32 %v5660, %v5702
    %v5731 = vadd.f32 %v5661, %v5702
    %v5732 = vadd.f32 %v5662, %v5702
    %v5733 = vadd.f32 %v5663, %v5702
    %v5734 = vadd.f32 %v5664, %v5702
    %v5735 = vadd.f32 %v5665, %v5702
    %v5736 = vadd.f32 %v5666, %v5702
    %v5737 = vadd.f32 %v5667, %v5702
    %v5738 = vadd.f32 %v5668, %v5702
    %v5739 = vadd.f32 %v5669, %v5702
    %v5740 = vadd.f32 %v5670, %v5702
    %v5741 = vadd.f32 %v5671, %v5702
    %v5742 = vadd.f32 %v5672, %v5702
    %v5743 = vadd.f32 %v5673, %v5702
    %v5744 = vadd.f32 %v5674, %v5702
    %v5745 = vadd.f32 %v5675, %v5702
    %v5746 = vadd.f32 %v5676, %v5702
    %v5747 = vadd.f32 %v5677, %v5702
    %v5748 = vadd.f32 %v5678, %v5702
    %v5749 = vadd.f32 %v5679, %v5702
    %v5750 = vadd.f32 %v5680, %v5702
    %v5751 = vadd.f32 %v5681, %v5702
    %v5752 = vadd.f32 %v5682, %v5702
    %v5753 = vadd.f32 %v5683, %v5702
    %v5754 = vadd.f32 %v5684, %v5702
    %v5755 = vadd.f32 %v5685, %v5702
    %v5756 = vadd.f32 %v5686, %v5702
    %v5757 = vadd.f32 %v5687, %v5702
    %v5758 = vadd.f32 %v5688, %v5702
    %v5759 = vadd.f32 %v5689, %v5702
    %v5760 = vadd.f32 %v5690, %v5702
    %v5761 = vadd.f32 %v5691, %v5702
    %v5762 = vadd.f32 %v5692, %v5702
    %v5763 = vadd.f32 %v5693, %v5702
    %v5764 = vadd.f32 %v5694, %v5702
    %v5765 = vadd.f32 %v5695, %v5702
    %v5766 = vadd.f32 %v5696, %v5702
    %v5767 = vadd.f32 %v5697, %v5702
    %v5768 = vmax.f32 %v5704, 0.0
    %v5769 = vmax.f32 %v5705, 0.0
    %v5770 = vmax.f32 %v5706, 0.0
    %v5771 = vmax.f32 %v5707, 0.0
    %v5772 = vmax.f32 %v5708, 0.0
    %v5773 = vmax.f32 %v5709, 0.0
    %v5774 = vmax.f32 %v5710, 0.0
    %v5775 = vmax.f32 %v5711, 0.0
    %v5776 = vmax.f32 %v5712, 0.0
    %v5777 = vmax.f32 %v5713, 0.0
    %v5778 = vmax.f32 %v5714, 0.0
    %v5779 = vmax.f32 %v5715, 0.0
    %v5780 = vmax.f32 %v5716, 0.0
    %v5781 = vmax.f32 %v5717, 0.0
    %v5782 = vmax.f32 %v5718, 0.0
    %v5783 = vmax.f32 %v5719, 0.0
    %v5784 = vmax.f32 %v5720, 0.0
    %v5785 = vmax.f32 %v5721, 0.0
    %v5786 = vmax.f32 %v5722, 0.0
    %v5787 = vmax.f32 %v5723, 0.0
    %v5788 = vmax.f32 %v5724, 0.0
    %v5789 = vmax.f32 %v5725, 0.0
    %v5790 = vmax.f32 %v5726, 0.0
    %v5791 = vmax.f32 %v5727, 0.0
    %v5792 = vmax.f32 %v5728, 0.0
    %v5793 = vmax.f32 %v5729, 0.0
    %v5794 = vmax.f32 %v5730, 0.0
    %v5795 = vmax.f32 %v5731, 0.0
    %v5796 = vmax.f32 %v5732, 0.0
    %v5797 = vmax.f32 %v5733, 0.0
    %v5798 = vmax.f32 %v5734, 0.0
    %v5799 = vmax.f32 %v5735, 0.0
    %v5800 = vmax.f32 %v5736, 0.0
    %v5801 = vmax.f32 %v5737, 0.0
    %v5802 = vmax.f32 %v5738, 0.0
    %v5803 = vmax.f32 %v5739, 0.0
    %v5804 = vmax.f32 %v5740, 0.0
    %v5805 = vmax.f32 %v5741, 0.0
    %v5806 = vmax.f32 %v5742, 0.0
    %v5807 = vmax.f32 %v5743, 0.0
    %v5808 = vmax.f32 %v5744, 0.0
    %v5809 = vmax.f32 %v5745, 0.0
    %v5810 = vmax.f32 %v5746, 0.0
    %v5811 = vmax.f32 %v5747, 0.0
    %v5812 = vmax.f32 %v5748, 0.0
    %v5813 = vmax.f32 %v5749, 0.0
    %v5814 = vmax.f32 %v5750, 0.0
    %v5815 = vmax.f32 %v5751, 0.0
    %v5816 = vmax.f32 %v5752, 0.0
    %v5817 = vmax.f32 %v5753, 0.0
    %v5818 = vmax.f32 %v5754, 0.0
    %v5819 = vmax.f32 %v5755, 0.0
    %v5820 = vmax.f32 %v5756, 0.0
    %v5821 = vmax.f32 %v5757, 0.0
    %v5822 = vmax.f32 %v5758, 0.0
    %v5823 = vmax.f32 %v5759, 0.0
    %v5824 = vmax.f32 %v5760, 0.0
    %v5825 = vmax.f32 %v5761, 0.0
    %v5826 = vmax.f32 %v5762, 0.0
    %v5827 = vmax.f32 %v5763, 0.0
    %v5828 = vmax.f32 %v5764, 0.0
    %v5829 = vmax.f32 %v5765, 0.0
    %v5830 = vmax.f32 %v5766, 0.0
    %v5831 = vmax.f32 %v5767, 0.0
    %v5832 = vpack.c.bf16 %v5769, %v5768
    %v5833 = vpack.c.bf16 %v5771, %v5770
    %v5834 = vpack.c.bf16 %v5773, %v5772
    %v5835 = vpack.c.bf16 %v5775, %v5774
    %v5836 = vpack.c.bf16 %v5777, %v5776
    %v5837 = vpack.c.bf16 %v5779, %v5778
    %v5838 = vpack.c.bf16 %v5781, %v5780
    %v5839 = vpack.c.bf16 %v5783, %v5782
    %v5840 = vpack.c.bf16 %v5785, %v5784
    %v5841 = vpack.c.bf16 %v5787, %v5786
    %v5842 = vpack.c.bf16 %v5789, %v5788
    %v5843 = vpack.c.bf16 %v5791, %v5790
    %v5844 = vpack.c.bf16 %v5793, %v5792
    %v5845 = vpack.c.bf16 %v5795, %v5794
    %v5846 = vpack.c.bf16 %v5797, %v5796
    %v5847 = vpack.c.bf16 %v5799, %v5798
    %v5848 = vpack.c.bf16 %v5801, %v5800
    %v5849 = vpack.c.bf16 %v5803, %v5802
    %v5850 = vpack.c.bf16 %v5805, %v5804
    %v5851 = vpack.c.bf16 %v5807, %v5806
    %v5852 = vpack.c.bf16 %v5809, %v5808
    %v5853 = vpack.c.bf16 %v5811, %v5810
    %v5854 = vpack.c.bf16 %v5813, %v5812
    %v5855 = vpack.c.bf16 %v5815, %v5814
    %v5856 = vpack.c.bf16 %v5817, %v5816
    %v5857 = vpack.c.bf16 %v5819, %v5818
    %v5858 = vpack.c.bf16 %v5821, %v5820
    %v5859 = vpack.c.bf16 %v5823, %v5822
    %v5860 = vpack.c.bf16 %v5825, %v5824
    %v5861 = vpack.c.bf16 %v5827, %v5826
    %v5862 = vpack.c.bf16 %v5829, %v5828
    %v5863 = vpack.c.bf16 %v5831, %v5830
    %v5896 = vunpack.c.l.b16 %v5832
    %v5897 = vunpack.c.h.b16 %v5832
    %v5898 = vunpack.c.l.b16 %v5833
    %v5899 = vunpack.c.h.b16 %v5833
    %v5900 = vunpack.c.l.b16 %v5834
    %v5901 = vunpack.c.h.b16 %v5834
    %v5902 = vunpack.c.l.b16 %v5835
    %v5903 = vunpack.c.h.b16 %v5835
    %v5904 = vunpack.c.l.b16 %v5836
    %v5905 = vunpack.c.h.b16 %v5836
    %v5906 = vunpack.c.l.b16 %v5837
    %v5907 = vunpack.c.h.b16 %v5837
    %v5908 = vunpack.c.l.b16 %v5838
    %v5909 = vunpack.c.h.b16 %v5838
    %v5910 = vunpack.c.l.b16 %v5839
    %v5911 = vunpack.c.h.b16 %v5839
    %v5912 = vunpack.c.l.b16 %v5840
    %v5913 = vunpack.c.h.b16 %v5840
    %v5914 = vunpack.c.l.b16 %v5841
    %v5915 = vunpack.c.h.b16 %v5841
    %v5916 = vunpack.c.l.b16 %v5842
    %v5917 = vunpack.c.h.b16 %v5842
    %v5918 = vunpack.c.l.b16 %v5843
    %v5919 = vunpack.c.h.b16 %v5843
    %v5920 = vunpack.c.l.b16 %v5844
    %v5921 = vunpack.c.h.b16 %v5844
    %v5922 = vunpack.c.l.b16 %v5845
    %v5923 = vunpack.c.h.b16 %v5845
    %v5924 = vunpack.c.l.b16 %v5846
    %v5925 = vunpack.c.h.b16 %v5846
    %v5926 = vunpack.c.l.b16 %v5847
    %v5927 = vunpack.c.h.b16 %v5847
    %v5928 = vunpack.c.l.b16 %v5848
    %v5929 = vunpack.c.h.b16 %v5848
    %v5930 = vunpack.c.l.b16 %v5849
    %v5931 = vunpack.c.h.b16 %v5849
    %v5932 = vunpack.c.l.b16 %v5850
    %v5933 = vunpack.c.h.b16 %v5850
    %v5934 = vunpack.c.l.b16 %v5851
    %v5935 = vunpack.c.h.b16 %v5851
    %v5936 = vunpack.c.l.b16 %v5852
    %v5937 = vunpack.c.h.b16 %v5852
    %v5938 = vunpack.c.l.b16 %v5853
    %v5939 = vunpack.c.h.b16 %v5853
    %v5940 = vunpack.c.l.b16 %v5854
    %v5941 = vunpack.c.h.b16 %v5854
    %v5942 = vunpack.c.l.b16 %v5855
    %v5943 = vunpack.c.h.b16 %v5855
    %v5944 = vunpack.c.l.b16 %v5856
    %v5945 = vunpack.c.h.b16 %v5856
    %v5946 = vunpack.c.l.b16 %v5857
    %v5947 = vunpack.c.h.b16 %v5857
    %v5948 = vunpack.c.l.b16 %v5858
    %v5949 = vunpack.c.h.b16 %v5858
    %v5950 = vunpack.c.l.b16 %v5859
    %v5951 = vunpack.c.h.b16 %v5859
    %v5952 = vunpack.c.l.b16 %v5860
    %v5953 = vunpack.c.h.b16 %v5860
    %v5954 = vunpack.c.l.b16 %v5861
    %v5955 = vunpack.c.h.b16 %v5861
    %v5956 = vunpack.c.l.b16 %v5862
    %v5957 = vunpack.c.h.b16 %v5862
    %v5958 = vunpack.c.l.b16 %v5863
    %v5959 = vunpack.c.h.b16 %v5863
    %v5960 = vpack.c.b16 %v5896, %v5896
    %v5961 = vpack.c.b16 %v5897, %v5897
    %v5962 = vpack.c.b16 %v5898, %v5898
    %v5963 = vpack.c.b16 %v5899, %v5899
    %v5964 = vpack.c.b16 %v5900, %v5900
    %v5965 = vpack.c.b16 %v5901, %v5901
    %v5966 = vpack.c.b16 %v5902, %v5902
    %v5967 = vpack.c.b16 %v5903, %v5903
    %v5968 = vpack.c.b16 %v5904, %v5904
    %v5969 = vpack.c.b16 %v5905, %v5905
    %v5970 = vpack.c.b16 %v5906, %v5906
    %v5971 = vpack.c.b16 %v5907, %v5907
    %v5972 = vpack.c.b16 %v5908, %v5908
    %v5973 = vpack.c.b16 %v5909, %v5909
    %v5974 = vpack.c.b16 %v5910, %v5910
    %v5975 = vpack.c.b16 %v5911, %v5911
    %v5976 = vpack.c.b16 %v5912, %v5912
    %v5977 = vpack.c.b16 %v5913, %v5913
    %v5978 = vpack.c.b16 %v5914, %v5914
    %v5979 = vpack.c.b16 %v5915, %v5915
    %v5980 = vpack.c.b16 %v5916, %v5916
    %v5981 = vpack.c.b16 %v5917, %v5917
    %v5982 = vpack.c.b16 %v5918, %v5918
    %v5983 = vpack.c.b16 %v5919, %v5919
    %v5984 = vpack.c.b16 %v5920, %v5920
    %v5985 = vpack.c.b16 %v5921, %v5921
    %v5986 = vpack.c.b16 %v5922, %v5922
    %v5987 = vpack.c.b16 %v5923, %v5923
    %v5988 = vpack.c.b16 %v5924, %v5924
    %v5989 = vpack.c.b16 %v5925, %v5925
    %v5990 = vpack.c.b16 %v5926, %v5926
    %v5991 = vpack.c.b16 %v5927, %v5927
    %v5992 = vpack.c.b16 %v5928, %v5928
    %v5993 = vpack.c.b16 %v5929, %v5929
    %v5994 = vpack.c.b16 %v5930, %v5930
    %v5995 = vpack.c.b16 %v5931, %v5931
    %v5996 = vpack.c.b16 %v5932, %v5932
    %v5997 = vpack.c.b16 %v5933, %v5933
    %v5998 = vpack.c.b16 %v5934, %v5934
    %v5999 = vpack.c.b16 %v5935, %v5935
    %v6000 = vpack.c.b16 %v5936, %v5936
    %v6001 = vpack.c.b16 %v5937, %v5937
    %v6002 = vpack.c.b16 %v5938, %v5938
    %v6003 = vpack.c.b16 %v5939, %v5939
    %v6004 = vpack.c.b16 %v5940, %v5940
    %v6005 = vpack.c.b16 %v5941, %v5941
    %v6006 = vpack.c.b16 %v5942, %v5942
    %v6007 = vpack.c.b16 %v5943, %v5943
    %v6008 = vpack.c.b16 %v5944, %v5944
    %v6009 = vpack.c.b16 %v5945, %v5945
    %v6010 = vpack.c.b16 %v5946, %v5946
    %v6011 = vpack.c.b16 %v5947, %v5947
    %v6012 = vpack.c.b16 %v5948, %v5948
    %v6013 = vpack.c.b16 %v5949, %v5949
    %v6014 = vpack.c.b16 %v5950, %v5950
    %v6015 = vpack.c.b16 %v5951, %v5951
    %v6016 = vpack.c.b16 %v5952, %v5952
    %v6017 = vpack.c.b16 %v5953, %v5953
    %v6018 = vpack.c.b16 %v5954, %v5954
    %v6019 = vpack.c.b16 %v5955, %v5955
    %v6020 = vpack.c.b16 %v5956, %v5956
    %v6021 = vpack.c.b16 %v5957, %v5957
    %v6022 = vpack.c.b16 %v5958, %v5958
    %v6023 = vpack.c.b16 %v5959, %v5959
    %6088 = vst [vmem:[#allocation12] sm:$0xf] %v5960
    %6089 = vst [vmem:[#allocation12 + $0x4] sm:$0xf] %v5961
    %6090 = vst [vmem:[#allocation12 + $0x8] sm:$0xf] %v5962
    %6091 = vst [vmem:[#allocation12 + $0xc] sm:$0xf] %v5963
    %6092 = vst [vmem:[#allocation12 + $0x10] sm:$0xf] %v5964
    %6093 = vst [vmem:[#allocation12 + $0x14] sm:$0xf] %v5965
    %6094 = vst [vmem:[#allocation12 + $0x18] sm:$0xf] %v5966
    %6095 = vst [vmem:[#allocation12 + $0x1c] sm:$0xf] %v5967
    %6096 = vst [vmem:[#allocation12 + $0x20] sm:$0xf] %v5968
    %6097 = vst [vmem:[#allocation12 + $0x24] sm:$0xf] %v5969
    %6098 = vst [vmem:[#allocation12 + $0x28] sm:$0xf] %v5970
    %6099 = vst [vmem:[#allocation12 + $0x2c] sm:$0xf] %v5971
    %6100 = vst [vmem:[#allocation12 + $0x30] sm:$0xf] %v5972
    %6101 = vst [vmem:[#allocation12 + $0x34] sm:$0xf] %v5973
    %6102 = vst [vmem:[#allocation12 + $0x38] sm:$0xf] %v5974
    %6103 = vst [vmem:[#allocation12 + $0x3c] sm:$0xf] %v5975
    %6104 = vst [vmem:[#allocation12 + $0x40] sm:$0xf] %v5976
    %6105 = vst [vmem:[#allocation12 + $0x44] sm:$0xf] %v5977
    %6106 = vst [vmem:[#allocation12 + $0x48] sm:$0xf] %v5978
    %6107 = vst [vmem:[#allocation12 + $0x4c] sm:$0xf] %v5979
    %6108 = vst [vmem:[#allocation12 + $0x50] sm:$0xf] %v5980
    %6109 = vst [vmem:[#allocation12 + $0x54] sm:$0xf] %v5981
    %6110 = vst [vmem:[#allocation12 + $0x58] sm:$0xf] %v5982
    %6111 = vst [vmem:[#allocation12 + $0x5c] sm:$0xf] %v5983
    %6112 = vst [vmem:[#allocation12 + $0x60] sm:$0xf] %v5984
    %6113 = vst [vmem:[#allocation12 + $0x64] sm:$0xf] %v5985
    %6114 = vst [vmem:[#allocation12 + $0x68] sm:$0xf] %v5986
    %6115 = vst [vmem:[#allocation12 + $0x6c] sm:$0xf] %v5987
    %6116 = vst [vmem:[#allocation12 + $0x70] sm:$0xf] %v5988
    %6117 = vst [vmem:[#allocation12 + $0x74] sm:$0xf] %v5989
    %6118 = vst [vmem:[#allocation12 + $0x78] sm:$0xf] %v5990
    %6119 = vst [vmem:[#allocation12 + $0x7c] sm:$0xf] %v5991
    %6120 = vst [vmem:[#allocation12 + $0x80] sm:$0xf] %v5992
    %6121 = vst [vmem:[#allocation12 + $0x84] sm:$0xf] %v5993
    %6122 = vst [vmem:[#allocation12 + $0x88] sm:$0xf] %v5994
    %6123 = vst [vmem:[#allocation12 + $0x8c] sm:$0xf] %v5995
    %6124 = vst [vmem:[#allocation12 + $0x90] sm:$0xf] %v5996
    %6125 = vst [vmem:[#allocation12 + $0x94] sm:$0xf] %v5997
    %6126 = vst [vmem:[#allocation12 + $0x98] sm:$0xf] %v5998
    %6127 = vst [vmem:[#allocation12 + $0x9c] sm:$0xf] %v5999
    %6128 = vst [vmem:[#allocation12 + $0xa0] sm:$0xf] %v6000
    %6129 = vst [vmem:[#allocation12 + $0xa4] sm:$0xf] %v6001
    %6130 = vst [vmem:[#allocation12 + $0xa8] sm:$0xf] %v6002
    %6131 = vst [vmem:[#allocation12 + $0xac] sm:$0xf] %v6003
    %6132 = vst [vmem:[#allocation12 + $0xb0] sm:$0xf] %v6004
    %6133 = vst [vmem:[#allocation12 + $0xb4] sm:$0xf] %v6005
    %6134 = vst [vmem:[#allocation12 + $0xb8] sm:$0xf] %v6006
    %6135 = vst [vmem:[#allocation12 + $0xbc] sm:$0xf] %v6007
    %6136 = vst [vmem:[#allocation12 + $0xc0] sm:$0xf] %v6008
    %6137 = vst [vmem:[#allocation12 + $0xc4] sm:$0xf] %v6009
    %6138 = vst [vmem:[#allocation12 + $0xc8] sm:$0xf] %v6010
    %6139 = vst [vmem:[#allocation12 + $0xcc] sm:$0xf] %v6011
    %6140 = vst [vmem:[#allocation12 + $0xd0] sm:$0xf] %v6012
    %6141 = vst [vmem:[#allocation12 + $0xd4] sm:$0xf] %v6013
    %6142 = vst [vmem:[#allocation12 + $0xd8] sm:$0xf] %v6014
    %6143 = vst [vmem:[#allocation12 + $0xdc] sm:$0xf] %v6015
    %6144 = vst [vmem:[#allocation12 + $0xe0] sm:$0xf] %v6016
    %6145 = vst [vmem:[#allocation12 + $0xe4] sm:$0xf] %v6017
    %6146 = vst [vmem:[#allocation12 + $0xe8] sm:$0xf] %v6018
    %6147 = vst [vmem:[#allocation12 + $0xec] sm:$0xf] %v6019
    %6148 = vst [vmem:[#allocation12 + $0xf0] sm:$0xf] %v6020
    %6149 = vst [vmem:[#allocation12 + $0xf4] sm:$0xf] %v6021
    %6150 = vst [vmem:[#allocation12 + $0xf8] sm:$0xf] %v6022
    %6151 = vst [vmem:[#allocation12 + $0xfc] sm:$0xf] %v6023
    // Predicated region
    $region58: #{tpu_custom_call.1} parent=1 // pred_check
      _
    $region59: #{tpu_custom_call.1} parent=1 // pred_check_branch
      %6153 = sbr.rel (0) target = $region61
    $region60: #{tpu_custom_call.1} parent=1 // pred_region
      %s6155 = ssub.s32 4096, 4096
      %6156 = vsyncadd [#allocation6], %s6155
      %s6157 = sshll.u32 [#allocation12], 4
      %s6158 = int_to_ptr.vmem [resolvable:$true] %s6157
      %6163 = dma.vmem_to_hbm [thread:$0]  %s6158, 4096, %s10, [#allocation6], 64, 64, 4
    $region61: #{tpu_custom_call.1} parent=1 // pred_fallthru
      _
    // Predicated region
    $region62: #{tpu_custom_call.1} parent=1 // pred_check
      _
    $region63: #{tpu_custom_call.1} parent=1 // pred_check_branch
      %6165 = sbr.rel (0) target = $region65
    $region64: #{tpu_custom_call.1} parent=1 // pred_region
      %6166 = dma.done [#allocation6], 4096
    $region65: #{tpu_custom_call.1} parent=1 // pred_fallthru
      _
    %6167 = vsyncpa [#allocation5], 1
    %6168 = vsyncpa [#allocation8], 1
    %6169 = vsyncpa [#allocation11], 1
    %6170 = vsyncpa [#allocation6], 1

</llo_original>
